<compile_context>
chip_gen: v5e
topology: v5e:2x2
jax: 0.10.0
libtpu: 0.0.40
codegen_flags: <defaults>
</compile_context>

<pallas_src>
import functools

import jax
import jax.numpy as jnp
from jax.experimental import pallas as pl
from jax.experimental.pallas import tpu as pltpu

EPS = 1e-5
CP = 128                        # channel padding -> one full lane tile (lane-dense vst)
VMEM_LIMIT = 48 * 1024 * 1024   # above scoped defaults, below v7x physical 64 MiB


# ---------------------------------------------------------------------------
# Pallas kernels
# ---------------------------------------------------------------------------
def _conv_stats_kernel(ph_ref, w_ref, y_ref, sum_ref, ssq_ref, *,
                       s, th, rt, wo, q, cp):
    """One (batch, row-tile) grid step: 3x3 pad-1 conv (stride s) as 9 shifted
    bf16 MXU matmuls with f32 accumulation, plus global per-channel sum / sumsq
    for the training-mode BatchNorm that follows.

    ph_ref : (s*s, R*Q, Cin) f32   phase-decomposed padded input image (pitch Q)
    w_ref  : (9, Cin, CP)    bf16  per-tap weight matrices
    y_ref  : (th*Q, CP)      f32   raw conv output tile (row pitch Q, first Wo
                                   columns of each row are valid)
    sum_ref, ssq_ref : (1, CP) f32 BN stats accumulated across the whole grid
    """
    b = pl.program_id(0)
    i = pl.program_id(1)

    @pl.when(jnp.logical_and(b == 0, i == 0))
    def _():
        sum_ref[...] = jnp.zeros_like(sum_ref)
        ssq_ref[...] = jnp.zeros_like(ssq_ref)

    rows = th * q
    row0 = 0 if rt == 1 else i * th            # static when there is 1 row tile
    acc = jnp.zeros((rows, cp), jnp.float32)
    for dy in range(3):
        for dx in range(3):
            p_idx = (dy % s) * s + (dx % s)            # stride-phase of this tap
            base = (row0 + dy // s) * q + (dx // s)    # flat offset of tap window
            slab = ph_ref[p_idx, pl.ds(base, rows), :].astype(jnp.bfloat16)
            acc = acc + jnp.dot(slab, w_ref[dy * 3 + dx],
                                preferred_element_type=jnp.float32)
    y_ref[...] = acc

    # Stats over valid columns only (row pitch Q, Wo valid columns per row).
    valid = (jax.lax.broadcasted_iota(jnp.int32, (rows, cp), 0) % q) < wo
    masked = jnp.where(valid, acc, 0.0)
    sum_ref[...] += jnp.sum(masked, axis=0, keepdims=True)
    ssq_ref[...] += jnp.sum(masked * masked, axis=0, keepdims=True)


def _bn_relu_kernel(y_ref, sum_ref, ssq_ref, g_ref, b_ref, o_ref, *, count):
    inv_n = 1.0 / count
    mean = sum_ref[...] * inv_n
    var = jnp.maximum(ssq_ref[...] * inv_n - mean * mean, 0.0)
    scale = g_ref[...] * jax.lax.rsqrt(var + EPS)
    shift = b_ref[...] - mean * scale
    o_ref[...] = jnp.maximum(y_ref[...] * scale + shift, 0.0).astype(o_ref.dtype)


def _bn_add_relu_kernel(y_ref, sum_ref, ssq_ref, g_ref, b_ref, id_ref, o_ref, *, count):
    inv_n = 1.0 / count
    mean = sum_ref[...] * inv_n
    var = jnp.maximum(ssq_ref[...] * inv_n - mean * mean, 0.0)
    scale = g_ref[...] * jax.lax.rsqrt(var + EPS)
    shift = b_ref[...] - mean * scale
    out = y_ref[...] * scale + shift + id_ref[...]     # residual add
    o_ref[...] = jnp.maximum(out, 0.0).astype(o_ref.dtype)


# ---------------------------------------------------------------------------
# Tiling helpers
# ---------------------------------------------------------------------------
def _pick_row_tile(ho, q, target_rows=256):
    """Largest divisor `th` of `ho` with (th*q) % 8 == 0 and th*q <= target_rows."""
    best = None
    for th in range(1, ho + 1):
        if ho % th == 0 and (th * q) % 8 == 0 and th * q <= target_rows:
            best = th
    return best if best is not None else ho


def _pick_m_tile(total, target=512):
    """Largest multiple-of-8 divisor of `total` that is <= target."""
    if total <= target:
        return total
    best = None
    for d in range(8, target + 1, 8):
        if total % d == 0:
            best = d
    return best if best is not None else total


# ---------------------------------------------------------------------------
# pallas_call wrappers
# ---------------------------------------------------------------------------
def _conv_stats(phases, w_taps, *, n, ho, wo, q, cin, stride, th):
    rt = ho // th
    rows = th * q
    ss = stride * stride
    rq = phases.shape[1]
    m_flat = n * ho * q

    kernel = functools.partial(_conv_stats_kernel,
                               s=stride, th=th, rt=rt, wo=wo, q=q, cp=CP)
    flops = 2 * n * ho * wo * 9 * cin * CP
    bytes_accessed = (phases.size * phases.dtype.itemsize
                      + w_taps.size * w_taps.dtype.itemsize
                      + m_flat * CP * 4 + 2 * CP * 4)

    return pl.pallas_call(
        kernel,
        grid=(n, rt),
        in_specs=[
            # full phase-decomposed image of one batch element, resident across
            # all of its row-tiles (block index only changes with b)
            pl.BlockSpec((ss, rq, cin), lambda b, i: (b, 0, 0)),
            # replicated weights: DMA'd once
            pl.BlockSpec((9, cin, CP), lambda b, i: (0, 0, 0)),
        ],
        out_specs=(
            pl.BlockSpec((rows, CP), lambda b, i: (b * rt + i, 0)),
            pl.BlockSpec((1, CP), lambda b, i: (0, 0)),   # resident accumulators
            pl.BlockSpec((1, CP), lambda b, i: (0, 0)),
        ),
        out_shape=(
            jax.ShapeDtypeStruct((m_flat, CP), jnp.float32),
            jax.ShapeDtypeStruct((1, CP), jnp.float32),
            jax.ShapeDtypeStruct((1, CP), jnp.float32),
        ),
        compiler_params=pltpu.CompilerParams(
            # stats accumulate across BOTH grid axes -> must stay sequential
            dimension_semantics=("arbitrary", "arbitrary"),
            vmem_limit_bytes=VMEM_LIMIT),
        cost_estimate=pl.CostEstimate(flops=flops, transcendentals=0,
                                      bytes_accessed=bytes_accessed),
    )(phases, w_taps)


def _bn_act(y, ssum, ssq, gamma, beta, *, count, identity=None):
    m = y.shape[0]
    tm = _pick_m_tile(m)
    g = jnp.pad(gamma.astype(jnp.float32), (0, CP - gamma.shape[0])).reshape(1, CP)
    b = jnp.pad(beta.astype(jnp.float32), (0, CP - beta.shape[0])).reshape(1, CP)

    tile = pl.BlockSpec((tm, CP), lambda i: (i, 0))
    rep = pl.BlockSpec((1, CP), lambda i: (0, 0))       # replicated, not re-DMA'd

    args = [y, ssum, ssq, g, b]
    in_specs = [tile, rep, rep, rep, rep]
    if identity is not None:
        kernel = functools.partial(_bn_add_relu_kernel, count=float(count))
        args.append(identity)
        in_specs.append(tile)
        id_bytes = identity.size * identity.dtype.itemsize
    else:
        kernel = functools.partial(_bn_relu_kernel, count=float(count))
        id_bytes = 0

    return pl.pallas_call(
        kernel,
        grid=(m // tm,),
        in_specs=in_specs,
        out_specs=tile,
        out_shape=jax.ShapeDtypeStruct((m, CP), jnp.float32),
        compiler_params=pltpu.CompilerParams(
            dimension_semantics=("parallel",),          # megacore-shardable
            vmem_limit_bytes=VMEM_LIMIT),
        cost_estimate=pl.CostEstimate(
            flops=6 * m * CP, transcendentals=CP,
            bytes_accessed=y.size * 4 + id_bytes + m * CP * 4),
    )(*args)


# ---------------------------------------------------------------------------
# Glue (layout only): phase decomposition, weight reshaping, identity path
# ---------------------------------------------------------------------------
def _make_phases_flat(x_nhwc, stride):
    """Spatially pad (1,1,1,1) and split into stride*stride phase grids so the
    kernel only ever needs stride-1 shifted windows.  Returned shape:
    (N*s*s, R*Q, Cp) f32 with row pitch Q = Wo + 2//s (plus one extra zero row
    so every tap window stays in-bounds).  No 9x im2col blow-up in HBM."""
    n, h, w, c = x_nhwc.shape
    ho = (h + 2 - 3) // stride + 1
    wo = (w + 2 - 3) // stride + 1
    q = wo + 2 // stride
    r = ho + 2 // stride + 1
    c_pad = max(8, ((c + 7) // 8) * 8)
    xp = jnp.pad(x_nhwc.astype(jnp.float32),
                 ((0, 0), (1, 1), (1, 1), (0, c_pad - c)))
    phases = []
    for p in range(stride):
        for pq in range(stride):
            ph = xp[:, p::stride, pq::stride, :]
            ph = jnp.pad(ph, ((0, 0),
                              (0, max(0, r - ph.shape[1])),
                              (0, max(0, q - ph.shape[2])),
                              (0, 0)))[:, :r, :q, :]
            phases.append(ph)
    ph_all = jnp.stack(phases, axis=1)                 # (n, s*s, r, q, c_pad)
    return ph_all.reshape(n * stride * stride, r * q, c_pad), (ho, wo, q, c_pad)


def _weight_to_taps(w_oihw, *, cin_pad, cout_pad):
    """(Cout, Cin, 3, 3) -> (9, cin_pad, cout_pad) bf16, tap order matching the
    kernel's (dy, dx) loop."""
    cout, cin, kh, kw = w_oihw.shape
    w = jnp.transpose(w_oihw.astype(jnp.float32), (2, 3, 1, 0)).reshape(kh * kw, cin, cout)
    w = jnp.pad(w, ((0, 0), (0, cin_pad - cin), (0, cout_pad - cout)))
    return w.astype(jnp.bfloat16)


def _identity_path(x_nhwc, stride, q_pitch):
    """avg_pool2d(2,2) if stride==2, zero-pad channels (module semantics), then
    lay out with the same row pitch / CP channel padding as the conv2 output so
    the add kernel can consume it directly."""
    n, h, w, c = x_nhwc.shape
    out = x_nhwc
    if stride == 2:
        out = out[:, :h - h % 2, :w - w % 2, :]
        out = out.reshape(n, out.shape[1] // 2, 2, out.shape[2] // 2, 2, c).mean(axis=(2, 4))
    ho, wo = out.shape[1], out.shape[2]
    out = jnp.pad(out, ((0, 0), (0, 0), (0, q_pitch - wo), (0, CP - c)))
    return out.reshape(n * ho * q_pitch, CP).astype(jnp.float32)


def basic_block_forward(x_nchw, params, stride):
    """BasicBlock.forward (training-mode BN) for NCHW float32 input."""
    n_out = params["w1"].shape[0]
    x = jnp.transpose(x_nchw, (0, 2, 3, 1)).astype(jnp.float32)   # NHWC
    n, h, w, cin = x.shape

    # ---- conv1 (stride) + BN1 statistics -------------------------------------
    ph1, (ho, wo, q1, cp1) = _make_phases_flat(x, stride)
    w1 = _weight_to_taps(params["w1"], cin_pad=cp1, cout_pad=CP)
    th1 = _pick_row_tile(ho, q1)
    y1, s1, sq1 = _conv_stats(ph1, w1, n=n, ho=ho, wo=wo, q=q1, cin=cp1,
                              stride=stride, th=th1)
    count = n * ho * wo

    # ---- BN1 normalize + ReLU -------------------------------------------------
    h1 = _bn_act(y1, s1, sq1, params["g1"], params["b1"], count=count)
    h1_img = h1.reshape(n, ho, q1, CP)[:, :, :wo, :]

    # ---- conv2 (stride 1) + BN2 statistics -----------------------------------
    ph2, (_, _, q2, cp2) = _make_phases_flat(h1_img, 1)
    w2 = _weight_to_taps(params["w2"], cin_pad=cp2, cout_pad=CP)
    th2 = _pick_row_tile(ho, q2)
    y2, s2, sq2 = _conv_stats(ph2, w2, n=n, ho=ho, wo=wo, q=q2, cin=cp2,
                              stride=1, th=th2)

    # ---- BN2 normalize + identity add + ReLU ---------------------------------
    ident = _identity_path(x, stride, q2)
    out = _bn_act(y2, s2, sq2, params["g2"], params["b2"], count=count,
                  identity=ident)

    out = out.reshape(n, ho, q2, CP)[:, :, :wo, :n_out]
    return jnp.transpose(out, (0, 3, 1, 2))                        # back to NCHW


# ---------------------------------------------------------------------------
# Pure-JAX reference (sanity check)
# ---------------------------------------------------------------------------
def _ref_forward(x, params, stride):
    def conv(y, w, s):
        return jax.lax.conv_general_dilated(
            y, w, (s, s), ((1, 1), (1, 1)),
            dimension_numbers=("NCHW", "OIHW", "NCHW"))

    def bn(y, g, b):
        mean = y.mean(axis=(0, 2, 3), keepdims=True)
        var = jnp.square(y - mean).mean(axis=(0, 2, 3), keepdims=True)
        return (y - mean) * jax.lax.rsqrt(var + EPS) * g.reshape(1, -1, 1, 1) \
            + b.reshape(1, -1, 1, 1)

    out = jnp.maximum(bn(conv(x, params["w1"], stride), params["g1"], params["b1"]), 0.0)
    out = bn(conv(out, params["w2"], 1), params["g2"], params["b2"])

    n, c, h, w = x.shape
    n_out = params["w1"].shape[0]
    ident = x
    if stride == 2:
        ident = ident.reshape(n, c, h // 2, 2, w // 2, 2).mean(axis=(3, 5))
    if c != n_out:
        ident = jnp.pad(ident, ((0, 0), (0, n_out - c), (0, 0), (0, 0)))
    return jnp.maximum(out + ident, 0.0)


# ---------------------------------------------------------------------------
if __name__ == "__main__":
    # BasicBlock(n_in_planes=4, n_out_planes=8, stride=2) on a (2, 4, 16, 16) input
    n_in, n_out, stride = 4, 8, 2
    key = jax.random.PRNGKey(0)
    kx, kw1, kw2, kg1, kb1, kg2, kb2 = jax.random.split(key, 7)

    x = jax.random.normal(kx, (2, n_in, 16, 16), dtype=jnp.float32)
    params = {
        "w1": 0.1 * jax.random.normal(kw1, (n_out, n_in, 3, 3), dtype=jnp.float32),
        "w2": 0.1 * jax.random.normal(kw2, (n_out, n_out, 3, 3), dtype=jnp.float32),
        "g1": 1.0 + 0.1 * jax.random.normal(kg1, (n_out,), dtype=jnp.float32),
        "b1": 0.1 * jax.random.normal(kb1, (n_out,), dtype=jnp.float32),
        "g2": 1.0 + 0.1 * jax.random.normal(kg2, (n_out,), dtype=jnp.float32),
        "b2": 0.1 * jax.random.normal(kb2, (n_out,), dtype=jnp.float32),
    }

    out = jax.jit(basic_block_forward, static_argnames="stride")(x, params, stride=stride)
    out = jax.block_until_ready(out)

    ref = _ref_forward(x, params, stride)
    assert out.shape == (2, n_out, 8, 8), out.shape
    max_err = float(jnp.max(jnp.abs(out - ref)))
    # bf16 MXU operands -> slightly looser tolerance than pure-f32
    assert jnp.allclose(out, ref, atol=3e-2, rtol=3e-2), f"max_err={max_err}"

    print("KERNEL_OK")
</pallas_src>

<mosaic_0001>
module attributes {stable_mosaic.version = 11 : i64} {
  func.func @_conv_stats_kernel(%arg0: i32, %arg1: i32, %arg2: memref<4x90x8xf32, #tpu.memory_space<vmem>>, %arg3: memref<9x8x128xbf16, #tpu.memory_space<vmem>>, %arg4: memref<72x128xf32, #tpu.memory_space<vmem>>, %arg5: memref<1x128xf32, #tpu.memory_space<vmem>>, %arg6: memref<1x128xf32, #tpu.memory_space<vmem>>) attributes {dimension_semantics = [#tpu.dimension_semantics<arbitrary>, #tpu.dimension_semantics<arbitrary>], iteration_bounds = array<i64: 2, 1>, scalar_prefetch = 0 : i64, scratch_operands = 0 : i64, tpu.core_type = #tpu.core_type<tc>, window_params = [{transform_indices = @transform_0, window_bounds = array<i64: 4, 90, 8>}, {pipeline_mode = #tpu.pipeline_mode<synchronous>, transform_indices = @transform_1, window_bounds = array<i64: 9, 8, 128>}, {transform_indices = @transform_2, window_bounds = array<i64: 72, 128>}, {pipeline_mode = #tpu.pipeline_mode<synchronous>, transform_indices = @transform_3, window_bounds = array<i64: 1, 128>}, {pipeline_mode = #tpu.pipeline_mode<synchronous>, transform_indices = @transform_4, window_bounds = array<i64: 1, 128>}]} {
    %c0_i32 = arith.constant 0 : i32
    %0 = arith.cmpi eq, %arg0, %c0_i32 : i32
    %c0_i32_0 = arith.constant 0 : i32
    %1 = arith.cmpi eq, %arg1, %c0_i32_0 : i32
    %2 = arith.andi %0, %1 : i1
    %3 = arith.extui %2 : i1 to i32
    %c0_i32_1 = arith.constant 0 : i32
    %4 = arith.cmpi ne, %3, %c0_i32_1 : i32
    scf.if %4 {
      %cst_71 = arith.constant 0.000000e+00 : f32
      %102 = vector.broadcast %cst_71 : f32 to vector<1x128xf32>
      %c0_72 = arith.constant 0 : index
      %c0_73 = arith.constant 0 : index
      %103 = vector.load %arg5[%c0_72, %c0_73] : memref<1x128xf32, #tpu.memory_space<vmem>>, vector<1x128xf32>
      tpu.vector_store %arg5[%c0_72, %c0_73], %102 {strides = array<i32>} : memref<1x128xf32, #tpu.memory_space<vmem>>, vector<1x128xf32>,
      %cst_74 = arith.constant 0.000000e+00 : f32
      %104 = vector.broadcast %cst_74 : f32 to vector<1x128xf32>
      %c0_75 = arith.constant 0 : index
      %c0_76 = arith.constant 0 : index
      %105 = vector.load %arg6[%c0_75, %c0_76] : memref<1x128xf32, #tpu.memory_space<vmem>>, vector<1x128xf32>
      tpu.vector_store %arg6[%c0_75, %c0_76], %104 {strides = array<i32>} : memref<1x128xf32, #tpu.memory_space<vmem>>, vector<1x128xf32>,
    } else {
    }
    %cst = arith.constant 0.000000e+00 : f32
    %5 = vector.broadcast %cst : f32 to vector<72x128xf32>
    %c0 = arith.constant 0 : index
    %c0_2 = arith.constant 0 : index
    %c0_3 = arith.constant 0 : index
    %6 = vector.load %arg2[%c0, %c0_2, %c0_3] : memref<4x90x8xf32, #tpu.memory_space<vmem>>, vector<1x72x8xf32>
    %7 = vector.shape_cast %6 : vector<1x72x8xf32> to vector<72x8xf32>
    %8 = arith.truncf %7 : vector<72x8xf32> to vector<72x8xbf16>
    %c0_4 = arith.constant 0 : index
    %c0_5 = arith.constant 0 : index
    %c0_6 = arith.constant 0 : index
    %9 = vector.load %arg3[%c0_4, %c0_5, %c0_6] : memref<9x8x128xbf16, #tpu.memory_space<vmem>>, vector<1x8x128xbf16>
    %10 = vector.shape_cast %9 : vector<1x8x128xbf16> to vector<8x128xbf16>
    %cst_7 = arith.constant dense<0.000000e+00> : vector<72x128xf32>
    %11 = tpu.matmul %8, %10, %cst_7 {dimension_numbers = #tpu.dot_dimension_numbers<[1], [0], [0], [1], [0, 0, 1, 1], [], []>} : vector<72x8xbf16>, vector<8x128xbf16>, vector<72x128xf32> -> vector<72x128xf32>
    %12 = arith.addf %5, %11 : vector<72x128xf32>
    %c1 = arith.constant 1 : index
    %c0_8 = arith.constant 0 : index
    %c0_9 = arith.constant 0 : index
    %13 = vector.load %arg2[%c1, %c0_8, %c0_9] : memref<4x90x8xf32, #tpu.memory_space<vmem>>, vector<1x72x8xf32>
    %14 = vector.shape_cast %13 : vector<1x72x8xf32> to vector<72x8xf32>
    %15 = arith.truncf %14 : vector<72x8xf32> to vector<72x8xbf16>
    %c1_10 = arith.constant 1 : index
    %c0_11 = arith.constant 0 : index
    %c0_12 = arith.constant 0 : index
    %16 = vector.load %arg3[%c1_10, %c0_11, %c0_12] : memref<9x8x128xbf16, #tpu.memory_space<vmem>>, vector<1x8x128xbf16>
    %17 = vector.shape_cast %16 : vector<1x8x128xbf16> to vector<8x128xbf16>
    %cst_13 = arith.constant dense<0.000000e+00> : vector<72x128xf32>
    %18 = tpu.matmul %15, %17, %cst_13 {dimension_numbers = #tpu.dot_dimension_numbers<[1], [0], [0], [1], [0, 0, 1, 1], [], []>} : vector<72x8xbf16>, vector<8x128xbf16>, vector<72x128xf32> -> vector<72x128xf32>
    %19 = arith.addf %12, %18 : vector<72x128xf32>
    %c0_14 = arith.constant 0 : index
    %c1_15 = arith.constant 1 : index
    %c0_16 = arith.constant 0 : index
    %20 = vector.load %arg2[%c0_14, %c1_15, %c0_16] : memref<4x90x8xf32, #tpu.memory_space<vmem>>, vector<1x72x8xf32>
    %21 = vector.shape_cast %20 : vector<1x72x8xf32> to vector<72x8xf32>
    %22 = arith.truncf %21 : vector<72x8xf32> to vector<72x8xbf16>
    %c2 = arith.constant 2 : index
    %c0_17 = arith.constant 0 : index
    %c0_18 = arith.constant 0 : index
    %23 = vector.load %arg3[%c2, %c0_17, %c0_18] : memref<9x8x128xbf16, #tpu.memory_space<vmem>>, vector<1x8x128xbf16>
    %24 = vector.shape_cast %23 : vector<1x8x128xbf16> to vector<8x128xbf16>
    %cst_19 = arith.constant dense<0.000000e+00> : vector<72x128xf32>
    %25 = tpu.matmul %22, %24, %cst_19 {dimension_numbers = #tpu.dot_dimension_numbers<[1], [0], [0], [1], [0, 0, 1, 1], [], []>} : vector<72x8xbf16>, vector<8x128xbf16>, vector<72x128xf32> -> vector<72x128xf32>
    %26 = arith.addf %19, %25 : vector<72x128xf32>
    %c2_20 = arith.constant 2 : index
    %c0_21 = arith.constant 0 : index
    %c0_22 = arith.constant 0 : index
    %27 = vector.load %arg2[%c2_20, %c0_21, %c0_22] : memref<4x90x8xf32, #tpu.memory_space<vmem>>, vector<1x72x8xf32>
    %28 = vector.shape_cast %27 : vector<1x72x8xf32> to vector<72x8xf32>
    %29 = arith.truncf %28 : vector<72x8xf32> to vector<72x8xbf16>
    %c3 = arith.constant 3 : index
    %c0_23 = arith.constant 0 : index
    %c0_24 = arith.constant 0 : index
    %30 = vector.load %arg3[%c3, %c0_23, %c0_24] : memref<9x8x128xbf16, #tpu.memory_space<vmem>>, vector<1x8x128xbf16>
    %31 = vector.shape_cast %30 : vector<1x8x128xbf16> to vector<8x128xbf16>
    %cst_25 = arith.constant dense<0.000000e+00> : vector<72x128xf32>
    %32 = tpu.matmul %29, %31, %cst_25 {dimension_numbers = #tpu.dot_dimension_numbers<[1], [0], [0], [1], [0, 0, 1, 1], [], []>} : vector<72x8xbf16>, vector<8x128xbf16>, vector<72x128xf32> -> vector<72x128xf32>
    %33 = arith.addf %26, %32 : vector<72x128xf32>
    %c3_26 = arith.constant 3 : index
    %c0_27 = arith.constant 0 : index
    %c0_28 = arith.constant 0 : index
    %34 = vector.load %arg2[%c3_26, %c0_27, %c0_28] : memref<4x90x8xf32, #tpu.memory_space<vmem>>, vector<1x72x8xf32>
    %35 = vector.shape_cast %34 : vector<1x72x8xf32> to vector<72x8xf32>
    %36 = arith.truncf %35 : vector<72x8xf32> to vector<72x8xbf16>
    %c4 = arith.constant 4 : index
    %c0_29 = arith.constant 0 : index
    %c0_30 = arith.constant 0 : index
    %37 = vector.load %arg3[%c4, %c0_29, %c0_30] : memref<9x8x128xbf16, #tpu.memory_space<vmem>>, vector<1x8x128xbf16>
    %38 = vector.shape_cast %37 : vector<1x8x128xbf16> to vector<8x128xbf16>
    %cst_31 = arith.constant dense<0.000000e+00> : vector<72x128xf32>
    %39 = tpu.matmul %36, %38, %cst_31 {dimension_numbers = #tpu.dot_dimension_numbers<[1], [0], [0], [1], [0, 0, 1, 1], [], []>} : vector<72x8xbf16>, vector<8x128xbf16>, vector<72x128xf32> -> vector<72x128xf32>
    %40 = arith.addf %33, %39 : vector<72x128xf32>
    %c2_32 = arith.constant 2 : index
    %c1_33 = arith.constant 1 : index
    %c0_34 = arith.constant 0 : index
    %41 = vector.load %arg2[%c2_32, %c1_33, %c0_34] : memref<4x90x8xf32, #tpu.memory_space<vmem>>, vector<1x72x8xf32>
    %42 = vector.shape_cast %41 : vector<1x72x8xf32> to vector<72x8xf32>
    %43 = arith.truncf %42 : vector<72x8xf32> to vector<72x8xbf16>
    %c5 = arith.constant 5 : index
    %c0_35 = arith.constant 0 : index
    %c0_36 = arith.constant 0 : index
    %44 = vector.load %arg3[%c5, %c0_35, %c0_36] : memref<9x8x128xbf16, #tpu.memory_space<vmem>>, vector<1x8x128xbf16>
    %45 = vector.shape_cast %44 : vector<1x8x128xbf16> to vector<8x128xbf16>
    %cst_37 = arith.constant dense<0.000000e+00> : vector<72x128xf32>
    %46 = tpu.matmul %43, %45, %cst_37 {dimension_numbers = #tpu.dot_dimension_numbers<[1], [0], [0], [1], [0, 0, 1, 1], [], []>} : vector<72x8xbf16>, vector<8x128xbf16>, vector<72x128xf32> -> vector<72x128xf32>
    %47 = arith.addf %40, %46 : vector<72x128xf32>
    %c0_38 = arith.constant 0 : index
    %c9 = arith.constant 9 : index
    %c0_39 = arith.constant 0 : index
    %48 = vector.load %arg2[%c0_38, %c9, %c0_39] : memref<4x90x8xf32, #tpu.memory_space<vmem>>, vector<1x72x8xf32>
    %49 = vector.shape_cast %48 : vector<1x72x8xf32> to vector<72x8xf32>
    %50 = arith.truncf %49 : vector<72x8xf32> to vector<72x8xbf16>
    %c6 = arith.constant 6 : index
    %c0_40 = arith.constant 0 : index
    %c0_41 = arith.constant 0 : index
    %51 = vector.load %arg3[%c6, %c0_40, %c0_41] : memref<9x8x128xbf16, #tpu.memory_space<vmem>>, vector<1x8x128xbf16>
    %52 = vector.shape_cast %51 : vector<1x8x128xbf16> to vector<8x128xbf16>
    %cst_42 = arith.constant dense<0.000000e+00> : vector<72x128xf32>
    %53 = tpu.matmul %50, %52, %cst_42 {dimension_numbers = #tpu.dot_dimension_numbers<[1], [0], [0], [1], [0, 0, 1, 1], [], []>} : vector<72x8xbf16>, vector<8x128xbf16>, vector<72x128xf32> -> vector<72x128xf32>
    %54 = arith.addf %47, %53 : vector<72x128xf32>
    %c1_43 = arith.constant 1 : index
    %c9_44 = arith.constant 9 : index
    %c0_45 = arith.constant 0 : index
    %55 = vector.load %arg2[%c1_43, %c9_44, %c0_45] : memref<4x90x8xf32, #tpu.memory_space<vmem>>, vector<1x72x8xf32>
    %56 = vector.shape_cast %55 : vector<1x72x8xf32> to vector<72x8xf32>
    %57 = arith.truncf %56 : vector<72x8xf32> to vector<72x8xbf16>
    %c7 = arith.constant 7 : index
    %c0_46 = arith.constant 0 : index
    %c0_47 = arith.constant 0 : index
    %58 = vector.load %arg3[%c7, %c0_46, %c0_47] : memref<9x8x128xbf16, #tpu.memory_space<vmem>>, vector<1x8x128xbf16>
    %59 = vector.shape_cast %58 : vector<1x8x128xbf16> to vector<8x128xbf16>
    %cst_48 = arith.constant dense<0.000000e+00> : vector<72x128xf32>
    %60 = tpu.matmul %57, %59, %cst_48 {dimension_numbers = #tpu.dot_dimension_numbers<[1], [0], [0], [1], [0, 0, 1, 1], [], []>} : vector<72x8xbf16>, vector<8x128xbf16>, vector<72x128xf32> -> vector<72x128xf32>
    %61 = arith.addf %54, %60 : vector<72x128xf32>
    %c0_49 = arith.constant 0 : index
    %c10 = arith.constant 10 : index
    %c0_50 = arith.constant 0 : index
    %62 = vector.load %arg2[%c0_49, %c10, %c0_50] : memref<4x90x8xf32, #tpu.memory_space<vmem>>, vector<1x72x8xf32>
    %63 = vector.shape_cast %62 : vector<1x72x8xf32> to vector<72x8xf32>
    %64 = arith.truncf %63 : vector<72x8xf32> to vector<72x8xbf16>
    %c8 = arith.constant 8 : index
    %c0_51 = arith.constant 0 : index
    %c0_52 = arith.constant 0 : index
    %65 = vector.load %arg3[%c8, %c0_51, %c0_52] : memref<9x8x128xbf16, #tpu.memory_space<vmem>>, vector<1x8x128xbf16>
    %66 = vector.shape_cast %65 : vector<1x8x128xbf16> to vector<8x128xbf16>
    %cst_53 = arith.constant dense<0.000000e+00> : vector<72x128xf32>
    %67 = tpu.matmul %64, %66, %cst_53 {dimension_numbers = #tpu.dot_dimension_numbers<[1], [0], [0], [1], [0, 0, 1, 1], [], []>} : vector<72x8xbf16>, vector<8x128xbf16>, vector<72x128xf32> -> vector<72x128xf32>
    %68 = arith.addf %61, %67 : vector<72x128xf32>
    %c0_54 = arith.constant 0 : index
    %c0_55 = arith.constant 0 : index
    %69 = vector.load %arg4[%c0_54, %c0_55] : memref<72x128xf32, #tpu.memory_space<vmem>>, vector<72x128xf32>
    tpu.vector_store %arg4[%c0_54, %c0_55], %68 {strides = array<i32>} : memref<72x128xf32, #tpu.memory_space<vmem>>, vector<72x128xf32>,
    %70 = tpu.iota {dimensions = array<i32: 0>} : vector<72x128xi32>
    %c9_i32 = arith.constant 9 : i32
    %c0_i32_56 = arith.constant 0 : i32
    %71 = arith.cmpi eq, %c9_i32, %c0_i32_56 : i32
    %c1_i32 = arith.constant 1 : i32
    %72 = arith.select %71, %c1_i32, %c9_i32 : i32
    %73 = vector.broadcast %72 : i32 to vector<72x128xi32>
    %74 = arith.remsi %70, %73 : vector<72x128xi32>
    %c0_i32_57 = arith.constant 0 : i32
    %75 = vector.broadcast %c0_i32_57 : i32 to vector<72x128xi32>
    %76 = arith.cmpi ne, %74, %75 : vector<72x128xi32>
    %c0_i32_58 = arith.constant 0 : i32
    %77 = vector.broadcast %c0_i32_58 : i32 to vector<72x128xi32>
    %78 = arith.cmpi slt, %74, %77 : vector<72x128xi32>
    %c0_i32_59 = arith.constant 0 : i32
    %79 = arith.cmpi slt, %72, %c0_i32_59 : i32
    %80 = vector.broadcast %79 : i1 to vector<72x128xi1>
    %81 = vector.broadcast %80 : vector<72x128xi1> to vector<72x128xi1>
    %82 = arith.xori %78, %81 : vector<72x128xi1>
    %83 = arith.andi %82, %76 : vector<72x128xi1>
    %84 = vector.broadcast %72 : i32 to vector<72x128xi32>
    %85 = arith.addi %74, %84 : vector<72x128xi32>
    %86 = arith.select %83, %85, %74 : vector<72x128xi1>, vector<72x128xi32>
    %c8_i32 = arith.constant 8 : i32
    %87 = vector.broadcast %c8_i32 : i32 to vector<72x128xi32>
    %88 = arith.cmpi slt, %86, %87 : vector<72x128xi32>
    %cst_60 = arith.constant 0.000000e+00 : f32
    %89 = vector.broadcast %cst_60 : f32 to vector<72x128xf32>
    %90 = arith.select %88, %68, %89 : vector<72x128xi1>, vector<72x128xf32>
    %c0_61 = arith.constant 0 : index
    %c0_62 = arith.constant 0 : index
    %91 = vector.load %arg5[%c0_61, %c0_62] : memref<1x128xf32, #tpu.memory_space<vmem>>, vector<1x128xf32>
    %cst_63 = arith.constant dense<0.000000e+00> : vector<128xf32>
    %92 = vector.multi_reduction <add>, %90, %cst_63 [0] : vector<72x128xf32> to vector<128xf32>
    %93 = vector.shape_cast %92 : vector<128xf32> to vector<1x128xf32>
    %94 = arith.addf %91, %93 : vector<1x128xf32>
    %c0_64 = arith.constant 0 : index
    %c0_65 = arith.constant 0 : index
    %95 = vector.load %arg5[%c0_64, %c0_65] : memref<1x128xf32, #tpu.memory_space<vmem>>, vector<1x128xf32>
    tpu.vector_store %arg5[%c0_64, %c0_65], %94 {strides = array<i32>} : memref<1x128xf32, #tpu.memory_space<vmem>>, vector<1x128xf32>,
    %c0_66 = arith.constant 0 : index
    %c0_67 = arith.constant 0 : index
    %96 = vector.load %arg6[%c0_66, %c0_67] : memref<1x128xf32, #tpu.memory_space<vmem>>, vector<1x128xf32>
    %97 = arith.mulf %90, %90 : vector<72x128xf32>
    %cst_68 = arith.constant dense<0.000000e+00> : vector<128xf32>
    %98 = vector.multi_reduction <add>, %97, %cst_68 [0] : vector<72x128xf32> to vector<128xf32>
    %99 = vector.shape_cast %98 : vector<128xf32> to vector<1x128xf32>
    %100 = arith.addf %96, %99 : vector<1x128xf32>
    %c0_69 = arith.constant 0 : index
    %c0_70 = arith.constant 0 : index
    %101 = vector.load %arg6[%c0_69, %c0_70] : memref<1x128xf32, #tpu.memory_space<vmem>>, vector<1x128xf32>
    tpu.vector_store %arg6[%c0_69, %c0_70], %100 {strides = array<i32>} : memref<1x128xf32, #tpu.memory_space<vmem>>, vector<1x128xf32>,
    return
  }
  func.func @transform_0(%arg0: i32, %arg1: i32) -> (i32, i32, i32) {
    %c0_i32 = arith.constant 0 : i32
    %c0_i32_0 = arith.constant 0 : i32
    %c0_i32_1 = arith.constant 0 : i32
    return %arg0, %c0_i32, %c0_i32_0 : i32, i32, i32
  }
  func.func @transform_1(%arg0: i32, %arg1: i32) -> (i32, i32, i32) {
    %c0_i32 = arith.constant 0 : i32
    %c0_i32_0 = arith.constant 0 : i32
    %c0_i32_1 = arith.constant 0 : i32
    %c0_i32_2 = arith.constant 0 : i32
    return %c0_i32, %c0_i32_0, %c0_i32_1 : i32, i32, i32
  }
  func.func @transform_2(%arg0: i32, %arg1: i32) -> (i32, i32) {
    %c1_i32 = arith.constant 1 : i32
    %0 = arith.muli %arg0, %c1_i32 : i32
    %1 = arith.addi %0, %arg1 : i32
    %c0_i32 = arith.constant 0 : i32
    %c0_i32_0 = arith.constant 0 : i32
    return %1, %c0_i32 : i32, i32
  }
  func.func @transform_3(%arg0: i32, %arg1: i32) -> (i32, i32) {
    %c0_i32 = arith.constant 0 : i32
    %c0_i32_0 = arith.constant 0 : i32
    %c0_i32_1 = arith.constant 0 : i32
    return %c0_i32, %c0_i32_0 : i32, i32
  }
  func.func @transform_4(%arg0: i32, %arg1: i32) -> (i32, i32) {
    %c0_i32 = arith.constant 0 : i32
    %c0_i32_0 = arith.constant 0 : i32
    %c0_i32_1 = arith.constant 0 : i32
    return %c0_i32, %c0_i32_0 : i32, i32
  }
}

module attributes {stable_mosaic.version = 11 : i64} {
  func.func @_bn_relu_kernel(%arg0: i32, %arg1: memref<144x128xf32, #tpu.memory_space<vmem>>, %arg2: memref<1x128xf32, #tpu.memory_space<vmem>>, %arg3: memref<1x128xf32, #tpu.memory_space<vmem>>, %arg4: memref<1x128xf32, #tpu.memory_space<vmem>>, %arg5: memref<1x128xf32, #tpu.memory_space<vmem>>, %arg6: memref<144x128xf32, #tpu.memory_space<vmem>>) attributes {dimension_semantics = [#tpu.dimension_semantics<parallel>], iteration_bounds = array<i64: 1>, scalar_prefetch = 0 : i64, scratch_operands = 0 : i64, tpu.core_type = #tpu.core_type<tc>, window_params = [{transform_indices = @transform_0, window_bounds = array<i64: 144, 128>}, {pipeline_mode = #tpu.pipeline_mode<synchronous>, transform_indices = @transform_1, window_bounds = array<i64: 1, 128>}, {pipeline_mode = #tpu.pipeline_mode<synchronous>, transform_indices = @transform_2, window_bounds = array<i64: 1, 128>}, {pipeline_mode = #tpu.pipeline_mode<synchronous>, transform_indices = @transform_3, window_bounds = array<i64: 1, 128>}, {pipeline_mode = #tpu.pipeline_mode<synchronous>, transform_indices = @transform_4, window_bounds = array<i64: 1, 128>}, {transform_indices = @transform_5, window_bounds = array<i64: 144, 128>}]} {
    %c0 = arith.constant 0 : index
    %c0_0 = arith.constant 0 : index
    %0 = vector.load %arg2[%c0, %c0_0] : memref<1x128xf32, #tpu.memory_space<vmem>>, vector<1x128xf32>
    %cst = arith.constant 7.812500e-03 : f32
    %1 = vector.broadcast %cst : f32 to vector<1x128xf32>
    %2 = arith.mulf %0, %1 : vector<1x128xf32>
    %c0_1 = arith.constant 0 : index
    %c0_2 = arith.constant 0 : index
    %3 = vector.load %arg3[%c0_1, %c0_2] : memref<1x128xf32, #tpu.memory_space<vmem>>, vector<1x128xf32>
    %cst_3 = arith.constant 7.812500e-03 : f32
    %4 = vector.broadcast %cst_3 : f32 to vector<1x128xf32>
    %5 = arith.mulf %3, %4 : vector<1x128xf32>
    %6 = arith.mulf %2, %2 : vector<1x128xf32>
    %7 = arith.subf %5, %6 : vector<1x128xf32>
    %cst_4 = arith.constant 0.000000e+00 : f32
    %8 = vector.broadcast %cst_4 : f32 to vector<1x128xf32>
    %9 = arith.maximumf %7, %8 : vector<1x128xf32>
    %c0_5 = arith.constant 0 : index
    %c0_6 = arith.constant 0 : index
    %10 = vector.load %arg4[%c0_5, %c0_6] : memref<1x128xf32, #tpu.memory_space<vmem>>, vector<1x128xf32>
    %cst_7 = arith.constant 9.99999974E-6 : f32
    %11 = vector.broadcast %cst_7 : f32 to vector<1x128xf32>
    %12 = arith.addf %9, %11 : vector<1x128xf32>
    %13 = math.rsqrt %12 : vector<1x128xf32>
    %14 = arith.mulf %10, %13 : vector<1x128xf32>
    %c0_8 = arith.constant 0 : index
    %c0_9 = arith.constant 0 : index
    %15 = vector.load %arg5[%c0_8, %c0_9] : memref<1x128xf32, #tpu.memory_space<vmem>>, vector<1x128xf32>
    %16 = arith.mulf %2, %14 : vector<1x128xf32>
    %17 = arith.subf %15, %16 : vector<1x128xf32>
    %c0_10 = arith.constant 0 : index
    %c0_11 = arith.constant 0 : index
    %18 = vector.load %arg1[%c0_10, %c0_11] : memref<144x128xf32, #tpu.memory_space<vmem>>, vector<144x128xf32>
    %19 = vector.broadcast %14 : vector<1x128xf32> to vector<144x128xf32>
    %20 = arith.mulf %18, %19 : vector<144x128xf32>
    %21 = vector.broadcast %17 : vector<1x128xf32> to vector<144x128xf32>
    %22 = arith.addf %20, %21 : vector<144x128xf32>
    %cst_12 = arith.constant 0.000000e+00 : f32
    %23 = vector.broadcast %cst_12 : f32 to vector<144x128xf32>
    %24 = arith.maximumf %22, %23 : vector<144x128xf32>
    %c0_13 = arith.constant 0 : index
    %c0_14 = arith.constant 0 : index
    %25 = vector.load %arg6[%c0_13, %c0_14] : memref<144x128xf32, #tpu.memory_space<vmem>>, vector<144x128xf32>
    tpu.vector_store %arg6[%c0_13, %c0_14], %24 {strides = array<i32>} : memref<144x128xf32, #tpu.memory_space<vmem>>, vector<144x128xf32>,
    return
  }
  func.func @transform_0(%arg0: i32) -> (i32, i32) {
    %c0_i32 = arith.constant 0 : i32
    %c0_i32_0 = arith.constant 0 : i32
    return %arg0, %c0_i32 : i32, i32
  }
  func.func @transform_1(%arg0: i32) -> (i32, i32) {
    %c0_i32 = arith.constant 0 : i32
    %c0_i32_0 = arith.constant 0 : i32
    %c0_i32_1 = arith.constant 0 : i32
    return %c0_i32, %c0_i32_0 : i32, i32
  }
  func.func @transform_2(%arg0: i32) -> (i32, i32) {
    %c0_i32 = arith.constant 0 : i32
    %c0_i32_0 = arith.constant 0 : i32
    %c0_i32_1 = arith.constant 0 : i32
    return %c0_i32, %c0_i32_0 : i32, i32
  }
  func.func @transform_3(%arg0: i32) -> (i32, i32) {
    %c0_i32 = arith.constant 0 : i32
    %c0_i32_0 = arith.constant 0 : i32
    %c0_i32_1 = arith.constant 0 : i32
    return %c0_i32, %c0_i32_0 : i32, i32
  }
  func.func @transform_4(%arg0: i32) -> (i32, i32) {
    %c0_i32 = arith.constant 0 : i32
    %c0_i32_0 = arith.constant 0 : i32
    %c0_i32_1 = arith.constant 0 : i32
    return %c0_i32, %c0_i32_0 : i32, i32
  }
  func.func @transform_5(%arg0: i32) -> (i32, i32) {
    %c0_i32 = arith.constant 0 : i32
    %c0_i32_0 = arith.constant 0 : i32
    return %arg0, %c0_i32 : i32, i32
  }
}

module attributes {stable_mosaic.version = 11 : i64} {
  func.func @_conv_stats_kernel(%arg0: i32, %arg1: i32, %arg2: memref<1x110x128xf32, #tpu.memory_space<vmem>>, %arg3: memref<9x128x128xbf16, #tpu.memory_space<vmem>>, %arg4: memref<80x128xf32, #tpu.memory_space<vmem>>, %arg5: memref<1x128xf32, #tpu.memory_space<vmem>>, %arg6: memref<1x128xf32, #tpu.memory_space<vmem>>) attributes {dimension_semantics = [#tpu.dimension_semantics<arbitrary>, #tpu.dimension_semantics<arbitrary>], iteration_bounds = array<i64: 2, 1>, scalar_prefetch = 0 : i64, scratch_operands = 0 : i64, tpu.core_type = #tpu.core_type<tc>, window_params = [{transform_indices = @transform_0, window_bounds = array<i64: 1, 110, 128>}, {pipeline_mode = #tpu.pipeline_mode<synchronous>, transform_indices = @transform_1, window_bounds = array<i64: 9, 128, 128>}, {transform_indices = @transform_2, window_bounds = array<i64: 80, 128>}, {pipeline_mode = #tpu.pipeline_mode<synchronous>, transform_indices = @transform_3, window_bounds = array<i64: 1, 128>}, {pipeline_mode = #tpu.pipeline_mode<synchronous>, transform_indices = @transform_4, window_bounds = array<i64: 1, 128>}]} {
    %c0_i32 = arith.constant 0 : i32
    %0 = arith.cmpi eq, %arg0, %c0_i32 : i32
    %c0_i32_0 = arith.constant 0 : i32
    %1 = arith.cmpi eq, %arg1, %c0_i32_0 : i32
    %2 = arith.andi %0, %1 : i1
    %3 = arith.extui %2 : i1 to i32
    %c0_i32_1 = arith.constant 0 : i32
    %4 = arith.cmpi ne, %3, %c0_i32_1 : i32
    scf.if %4 {
      %cst_67 = arith.constant 0.000000e+00 : f32
      %102 = vector.broadcast %cst_67 : f32 to vector<1x128xf32>
      %c0_68 = arith.constant 0 : index
      %c0_69 = arith.constant 0 : index
      %103 = vector.load %arg5[%c0_68, %c0_69] : memref<1x128xf32, #tpu.memory_space<vmem>>, vector<1x128xf32>
      tpu.vector_store %arg5[%c0_68, %c0_69], %102 {strides = array<i32>} : memref<1x128xf32, #tpu.memory_space<vmem>>, vector<1x128xf32>,
      %cst_70 = arith.constant 0.000000e+00 : f32
      %104 = vector.broadcast %cst_70 : f32 to vector<1x128xf32>
      %c0_71 = arith.constant 0 : index
      %c0_72 = arith.constant 0 : index
      %105 = vector.load %arg6[%c0_71, %c0_72] : memref<1x128xf32, #tpu.memory_space<vmem>>, vector<1x128xf32>
      tpu.vector_store %arg6[%c0_71, %c0_72], %104 {strides = array<i32>} : memref<1x128xf32, #tpu.memory_space<vmem>>, vector<1x128xf32>,
    } else {
    }
    %cst = arith.constant 0.000000e+00 : f32
    %5 = vector.broadcast %cst : f32 to vector<80x128xf32>
    %c0 = arith.constant 0 : index
    %c0_2 = arith.constant 0 : index
    %c0_3 = arith.constant 0 : index
    %6 = vector.load %arg2[%c0, %c0_2, %c0_3] : memref<1x110x128xf32, #tpu.memory_space<vmem>>, vector<1x80x128xf32>
    %7 = vector.shape_cast %6 : vector<1x80x128xf32> to vector<80x128xf32>
    %8 = arith.truncf %7 : vector<80x128xf32> to vector<80x128xbf16>
    %c0_4 = arith.constant 0 : index
    %c0_5 = arith.constant 0 : index
    %c0_6 = arith.constant 0 : index
    %9 = vector.load %arg3[%c0_4, %c0_5, %c0_6] : memref<9x128x128xbf16, #tpu.memory_space<vmem>>, vector<1x128x128xbf16>
    %10 = vector.shape_cast %9 : vector<1x128x128xbf16> to vector<128x128xbf16>
    %cst_7 = arith.constant dense<0.000000e+00> : vector<80x128xf32>
    %11 = tpu.matmul %8, %10, %cst_7 {dimension_numbers = #tpu.dot_dimension_numbers<[1], [0], [0], [1], [0, 0, 1, 1], [], []>} : vector<80x128xbf16>, vector<128x128xbf16>, vector<80x128xf32> -> vector<80x128xf32>
    %12 = arith.addf %5, %11 : vector<80x128xf32>
    %c0_8 = arith.constant 0 : index
    %c1 = arith.constant 1 : index
    %c0_9 = arith.constant 0 : index
    %13 = vector.load %arg2[%c0_8, %c1, %c0_9] : memref<1x110x128xf32, #tpu.memory_space<vmem>>, vector<1x80x128xf32>
    %14 = vector.shape_cast %13 : vector<1x80x128xf32> to vector<80x128xf32>
    %15 = arith.truncf %14 : vector<80x128xf32> to vector<80x128xbf16>
    %c1_10 = arith.constant 1 : index
    %c0_11 = arith.constant 0 : index
    %c0_12 = arith.constant 0 : index
    %16 = vector.load %arg3[%c1_10, %c0_11, %c0_12] : memref<9x128x128xbf16, #tpu.memory_space<vmem>>, vector<1x128x128xbf16>
    %17 = vector.shape_cast %16 : vector<1x128x128xbf16> to vector<128x128xbf16>
    %cst_13 = arith.constant dense<0.000000e+00> : vector<80x128xf32>
    %18 = tpu.matmul %15, %17, %cst_13 {dimension_numbers = #tpu.dot_dimension_numbers<[1], [0], [0], [1], [0, 0, 1, 1], [], []>} : vector<80x128xbf16>, vector<128x128xbf16>, vector<80x128xf32> -> vector<80x128xf32>
    %19 = arith.addf %12, %18 : vector<80x128xf32>
    %c0_14 = arith.constant 0 : index
    %c2 = arith.constant 2 : index
    %c0_15 = arith.constant 0 : index
    %20 = vector.load %arg2[%c0_14, %c2, %c0_15] : memref<1x110x128xf32, #tpu.memory_space<vmem>>, vector<1x80x128xf32>
    %21 = vector.shape_cast %20 : vector<1x80x128xf32> to vector<80x128xf32>
    %22 = arith.truncf %21 : vector<80x128xf32> to vector<80x128xbf16>
    %c2_16 = arith.constant 2 : index
    %c0_17 = arith.constant 0 : index
    %c0_18 = arith.constant 0 : index
    %23 = vector.load %arg3[%c2_16, %c0_17, %c0_18] : memref<9x128x128xbf16, #tpu.memory_space<vmem>>, vector<1x128x128xbf16>
    %24 = vector.shape_cast %23 : vector<1x128x128xbf16> to vector<128x128xbf16>
    %cst_19 = arith.constant dense<0.000000e+00> : vector<80x128xf32>
    %25 = tpu.matmul %22, %24, %cst_19 {dimension_numbers = #tpu.dot_dimension_numbers<[1], [0], [0], [1], [0, 0, 1, 1], [], []>} : vector<80x128xbf16>, vector<128x128xbf16>, vector<80x128xf32> -> vector<80x128xf32>
    %26 = arith.addf %19, %25 : vector<80x128xf32>
    %c0_20 = arith.constant 0 : index
    %c10 = arith.constant 10 : index
    %c0_21 = arith.constant 0 : index
    %27 = vector.load %arg2[%c0_20, %c10, %c0_21] : memref<1x110x128xf32, #tpu.memory_space<vmem>>, vector<1x80x128xf32>
    %28 = vector.shape_cast %27 : vector<1x80x128xf32> to vector<80x128xf32>
    %29 = arith.truncf %28 : vector<80x128xf32> to vector<80x128xbf16>
    %c3 = arith.constant 3 : index
    %c0_22 = arith.constant 0 : index
    %c0_23 = arith.constant 0 : index
    %30 = vector.load %arg3[%c3, %c0_22, %c0_23] : memref<9x128x128xbf16, #tpu.memory_space<vmem>>, vector<1x128x128xbf16>
    %31 = vector.shape_cast %30 : vector<1x128x128xbf16> to vector<128x128xbf16>
    %cst_24 = arith.constant dense<0.000000e+00> : vector<80x128xf32>
    %32 = tpu.matmul %29, %31, %cst_24 {dimension_numbers = #tpu.dot_dimension_numbers<[1], [0], [0], [1], [0, 0, 1, 1], [], []>} : vector<80x128xbf16>, vector<128x128xbf16>, vector<80x128xf32> -> vector<80x128xf32>
    %33 = arith.addf %26, %32 : vector<80x128xf32>
    %c0_25 = arith.constant 0 : index
    %c11 = arith.constant 11 : index
    %c0_26 = arith.constant 0 : index
    %34 = vector.load %arg2[%c0_25, %c11, %c0_26] : memref<1x110x128xf32, #tpu.memory_space<vmem>>, vector<1x80x128xf32>
    %35 = vector.shape_cast %34 : vector<1x80x128xf32> to vector<80x128xf32>
    %36 = arith.truncf %35 : vector<80x128xf32> to vector<80x128xbf16>
    %c4 = arith.constant 4 : index
    %c0_27 = arith.constant 0 : index
    %c0_28 = arith.constant 0 : index
    %37 = vector.load %arg3[%c4, %c0_27, %c0_28] : memref<9x128x128xbf16, #tpu.memory_space<vmem>>, vector<1x128x128xbf16>
    %38 = vector.shape_cast %37 : vector<1x128x128xbf16> to vector<128x128xbf16>
    %cst_29 = arith.constant dense<0.000000e+00> : vector<80x128xf32>
    %39 = tpu.matmul %36, %38, %cst_29 {dimension_numbers = #tpu.dot_dimension_numbers<[1], [0], [0], [1], [0, 0, 1, 1], [], []>} : vector<80x128xbf16>, vector<128x128xbf16>, vector<80x128xf32> -> vector<80x128xf32>
    %40 = arith.addf %33, %39 : vector<80x128xf32>
    %c0_30 = arith.constant 0 : index
    %c12 = arith.constant 12 : index
    %c0_31 = arith.constant 0 : index
    %41 = vector.load %arg2[%c0_30, %c12, %c0_31] : memref<1x110x128xf32, #tpu.memory_space<vmem>>, vector<1x80x128xf32>
    %42 = vector.shape_cast %41 : vector<1x80x128xf32> to vector<80x128xf32>
    %43 = arith.truncf %42 : vector<80x128xf32> to vector<80x128xbf16>
    %c5 = arith.constant 5 : index
    %c0_32 = arith.constant 0 : index
    %c0_33 = arith.constant 0 : index
    %44 = vector.load %arg3[%c5, %c0_32, %c0_33] : memref<9x128x128xbf16, #tpu.memory_space<vmem>>, vector<1x128x128xbf16>
    %45 = vector.shape_cast %44 : vector<1x128x128xbf16> to vector<128x128xbf16>
    %cst_34 = arith.constant dense<0.000000e+00> : vector<80x128xf32>
    %46 = tpu.matmul %43, %45, %cst_34 {dimension_numbers = #tpu.dot_dimension_numbers<[1], [0], [0], [1], [0, 0, 1, 1], [], []>} : vector<80x128xbf16>, vector<128x128xbf16>, vector<80x128xf32> -> vector<80x128xf32>
    %47 = arith.addf %40, %46 : vector<80x128xf32>
    %c0_35 = arith.constant 0 : index
    %c20 = arith.constant 20 : index
    %c0_36 = arith.constant 0 : index
    %48 = vector.load %arg2[%c0_35, %c20, %c0_36] : memref<1x110x128xf32, #tpu.memory_space<vmem>>, vector<1x80x128xf32>
    %49 = vector.shape_cast %48 : vector<1x80x128xf32> to vector<80x128xf32>
    %50 = arith.truncf %49 : vector<80x128xf32> to vector<80x128xbf16>
    %c6 = arith.constant 6 : index
    %c0_37 = arith.constant 0 : index
    %c0_38 = arith.constant 0 : index
    %51 = vector.load %arg3[%c6, %c0_37, %c0_38] : memref<9x128x128xbf16, #tpu.memory_space<vmem>>, vector<1x128x128xbf16>
    %52 = vector.shape_cast %51 : vector<1x128x128xbf16> to vector<128x128xbf16>
    %cst_39 = arith.constant dense<0.000000e+00> : vector<80x128xf32>
    %53 = tpu.matmul %50, %52, %cst_39 {dimension_numbers = #tpu.dot_dimension_numbers<[1], [0], [0], [1], [0, 0, 1, 1], [], []>} : vector<80x128xbf16>, vector<128x128xbf16>, vector<80x128xf32> -> vector<80x128xf32>
    %54 = arith.addf %47, %53 : vector<80x128xf32>
    %c0_40 = arith.constant 0 : index
    %c21 = arith.constant 21 : index
    %c0_41 = arith.constant 0 : index
    %55 = vector.load %arg2[%c0_40, %c21, %c0_41] : memref<1x110x128xf32, #tpu.memory_space<vmem>>, vector<1x80x128xf32>
    %56 = vector.shape_cast %55 : vector<1x80x128xf32> to vector<80x128xf32>
    %57 = arith.truncf %56 : vector<80x128xf32> to vector<80x128xbf16>
    %c7 = arith.constant 7 : index
    %c0_42 = arith.constant 0 : index
    %c0_43 = arith.constant 0 : index
    %58 = vector.load %arg3[%c7, %c0_42, %c0_43] : memref<9x128x128xbf16, #tpu.memory_space<vmem>>, vector<1x128x128xbf16>
    %59 = vector.shape_cast %58 : vector<1x128x128xbf16> to vector<128x128xbf16>
    %cst_44 = arith.constant dense<0.000000e+00> : vector<80x128xf32>
    %60 = tpu.matmul %57, %59, %cst_44 {dimension_numbers = #tpu.dot_dimension_numbers<[1], [0], [0], [1], [0, 0, 1, 1], [], []>} : vector<80x128xbf16>, vector<128x128xbf16>, vector<80x128xf32> -> vector<80x128xf32>
    %61 = arith.addf %54, %60 : vector<80x128xf32>
    %c0_45 = arith.constant 0 : index
    %c22 = arith.constant 22 : index
    %c0_46 = arith.constant 0 : index
    %62 = vector.load %arg2[%c0_45, %c22, %c0_46] : memref<1x110x128xf32, #tpu.memory_space<vmem>>, vector<1x80x128xf32>
    %63 = vector.shape_cast %62 : vector<1x80x128xf32> to vector<80x128xf32>
    %64 = arith.truncf %63 : vector<80x128xf32> to vector<80x128xbf16>
    %c8 = arith.constant 8 : index
    %c0_47 = arith.constant 0 : index
    %c0_48 = arith.constant 0 : index
    %65 = vector.load %arg3[%c8, %c0_47, %c0_48] : memref<9x128x128xbf16, #tpu.memory_space<vmem>>, vector<1x128x128xbf16>
    %66 = vector.shape_cast %65 : vector<1x128x128xbf16> to vector<128x128xbf16>
    %cst_49 = arith.constant dense<0.000000e+00> : vector<80x128xf32>
    %67 = tpu.matmul %64, %66, %cst_49 {dimension_numbers = #tpu.dot_dimension_numbers<[1], [0], [0], [1], [0, 0, 1, 1], [], []>} : vector<80x128xbf16>, vector<128x128xbf16>, vector<80x128xf32> -> vector<80x128xf32>
    %68 = arith.addf %61, %67 : vector<80x128xf32>
    %c0_50 = arith.constant 0 : index
    %c0_51 = arith.constant 0 : index
    %69 = vector.load %arg4[%c0_50, %c0_51] : memref<80x128xf32, #tpu.memory_space<vmem>>, vector<80x128xf32>
    tpu.vector_store %arg4[%c0_50, %c0_51], %68 {strides = array<i32>} : memref<80x128xf32, #tpu.memory_space<vmem>>, vector<80x128xf32>,
    %70 = tpu.iota {dimensions = array<i32: 0>} : vector<80x128xi32>
    %c10_i32 = arith.constant 10 : i32
    %c0_i32_52 = arith.constant 0 : i32
    %71 = arith.cmpi eq, %c10_i32, %c0_i32_52 : i32
    %c1_i32 = arith.constant 1 : i32
    %72 = arith.select %71, %c1_i32, %c10_i32 : i32
    %73 = vector.broadcast %72 : i32 to vector<80x128xi32>
    %74 = arith.remsi %70, %73 : vector<80x128xi32>
    %c0_i32_53 = arith.constant 0 : i32
    %75 = vector.broadcast %c0_i32_53 : i32 to vector<80x128xi32>
    %76 = arith.cmpi ne, %74, %75 : vector<80x128xi32>
    %c0_i32_54 = arith.constant 0 : i32
    %77 = vector.broadcast %c0_i32_54 : i32 to vector<80x128xi32>
    %78 = arith.cmpi slt, %74, %77 : vector<80x128xi32>
    %c0_i32_55 = arith.constant 0 : i32
    %79 = arith.cmpi slt, %72, %c0_i32_55 : i32
    %80 = vector.broadcast %79 : i1 to vector<80x128xi1>
    %81 = vector.broadcast %80 : vector<80x128xi1> to vector<80x128xi1>
    %82 = arith.xori %78, %81 : vector<80x128xi1>
    %83 = arith.andi %82, %76 : vector<80x128xi1>
    %84 = vector.broadcast %72 : i32 to vector<80x128xi32>
    %85 = arith.addi %74, %84 : vector<80x128xi32>
    %86 = arith.select %83, %85, %74 : vector<80x128xi1>, vector<80x128xi32>
    %c8_i32 = arith.constant 8 : i32
    %87 = vector.broadcast %c8_i32 : i32 to vector<80x128xi32>
    %88 = arith.cmpi slt, %86, %87 : vector<80x128xi32>
    %cst_56 = arith.constant 0.000000e+00 : f32
    %89 = vector.broadcast %cst_56 : f32 to vector<80x128xf32>
    %90 = arith.select %88, %68, %89 : vector<80x128xi1>, vector<80x128xf32>
    %c0_57 = arith.constant 0 : index
    %c0_58 = arith.constant 0 : index
    %91 = vector.load %arg5[%c0_57, %c0_58] : memref<1x128xf32, #tpu.memory_space<vmem>>, vector<1x128xf32>
    %cst_59 = arith.constant dense<0.000000e+00> : vector<128xf32>
    %92 = vector.multi_reduction <add>, %90, %cst_59 [0] : vector<80x128xf32> to vector<128xf32>
    %93 = vector.shape_cast %92 : vector<128xf32> to vector<1x128xf32>
    %94 = arith.addf %91, %93 : vector<1x128xf32>
    %c0_60 = arith.constant 0 : index
    %c0_61 = arith.constant 0 : index
    %95 = vector.load %arg5[%c0_60, %c0_61] : memref<1x128xf32, #tpu.memory_space<vmem>>, vector<1x128xf32>
    tpu.vector_store %arg5[%c0_60, %c0_61], %94 {strides = array<i32>} : memref<1x128xf32, #tpu.memory_space<vmem>>, vector<1x128xf32>,
    %c0_62 = arith.constant 0 : index
    %c0_63 = arith.constant 0 : index
    %96 = vector.load %arg6[%c0_62, %c0_63] : memref<1x128xf32, #tpu.memory_space<vmem>>, vector<1x128xf32>
    %97 = arith.mulf %90, %90 : vector<80x128xf32>
    %cst_64 = arith.constant dense<0.000000e+00> : vector<128xf32>
    %98 = vector.multi_reduction <add>, %97, %cst_64 [0] : vector<80x128xf32> to vector<128xf32>
    %99 = vector.shape_cast %98 : vector<128xf32> to vector<1x128xf32>
    %100 = arith.addf %96, %99 : vector<1x128xf32>
    %c0_65 = arith.constant 0 : index
    %c0_66 = arith.constant 0 : index
    %101 = vector.load %arg6[%c0_65, %c0_66] : memref<1x128xf32, #tpu.memory_space<vmem>>, vector<1x128xf32>
    tpu.vector_store %arg6[%c0_65, %c0_66], %100 {strides = array<i32>} : memref<1x128xf32, #tpu.memory_space<vmem>>, vector<1x128xf32>,
    return
  }
  func.func @transform_0(%arg0: i32, %arg1: i32) -> (i32, i32, i32) {
    %c0_i32 = arith.constant 0 : i32
    %c0_i32_0 = arith.constant 0 : i32
    %c0_i32_1 = arith.constant 0 : i32
    return %arg0, %c0_i32, %c0_i32_0 : i32, i32, i32
  }
  func.func @transform_1(%arg0: i32, %arg1: i32) -> (i32, i32, i32) {
    %c0_i32 = arith.constant 0 : i32
    %c0_i32_0 = arith.constant 0 : i32
    %c0_i32_1 = arith.constant 0 : i32
    %c0_i32_2 = arith.constant 0 : i32
    return %c0_i32, %c0_i32_0, %c0_i32_1 : i32, i32, i32
  }
  func.func @transform_2(%arg0: i32, %arg1: i32) -> (i32, i32) {
    %c1_i32 = arith.constant 1 : i32
    %0 = arith.muli %arg0, %c1_i32 : i32
    %1 = arith.addi %0, %arg1 : i32
    %c0_i32 = arith.constant 0 : i32
    %c0_i32_0 = arith.constant 0 : i32
    return %1, %c0_i32 : i32, i32
  }
  func.func @transform_3(%arg0: i32, %arg1: i32) -> (i32, i32) {
    %c0_i32 = arith.constant 0 : i32
    %c0_i32_0 = arith.constant 0 : i32
    %c0_i32_1 = arith.constant 0 : i32
    return %c0_i32, %c0_i32_0 : i32, i32
  }
  func.func @transform_4(%arg0: i32, %arg1: i32) -> (i32, i32) {
    %c0_i32 = arith.constant 0 : i32
    %c0_i32_0 = arith.constant 0 : i32
    %c0_i32_1 = arith.constant 0 : i32
    return %c0_i32, %c0_i32_0 : i32, i32
  }
}

module attributes {stable_mosaic.version = 11 : i64} {
  func.func @_bn_add_relu_kernel(%arg0: i32, %arg1: memref<160x128xf32, #tpu.memory_space<vmem>>, %arg2: memref<1x128xf32, #tpu.memory_space<vmem>>, %arg3: memref<1x128xf32, #tpu.memory_space<vmem>>, %arg4: memref<1x128xf32, #tpu.memory_space<vmem>>, %arg5: memref<1x128xf32, #tpu.memory_space<vmem>>, %arg6: memref<160x128xf32, #tpu.memory_space<vmem>>, %arg7: memref<160x128xf32, #tpu.memory_space<vmem>>) attributes {dimension_semantics = [#tpu.dimension_semantics<parallel>], iteration_bounds = array<i64: 1>, scalar_prefetch = 0 : i64, scratch_operands = 0 : i64, tpu.core_type = #tpu.core_type<tc>, window_params = [{transform_indices = @transform_0, window_bounds = array<i64: 160, 128>}, {pipeline_mode = #tpu.pipeline_mode<synchronous>, transform_indices = @transform_1, window_bounds = array<i64: 1, 128>}, {pipeline_mode = #tpu.pipeline_mode<synchronous>, transform_indices = @transform_2, window_bounds = array<i64: 1, 128>}, {pipeline_mode = #tpu.pipeline_mode<synchronous>, transform_indices = @transform_3, window_bounds = array<i64: 1, 128>}, {pipeline_mode = #tpu.pipeline_mode<synchronous>, transform_indices = @transform_4, window_bounds = array<i64: 1, 128>}, {transform_indices = @transform_5, window_bounds = array<i64: 160, 128>}, {transform_indices = @transform_6, window_bounds = array<i64: 160, 128>}]} {
    %c0 = arith.constant 0 : index
    %c0_0 = arith.constant 0 : index
    %0 = vector.load %arg2[%c0, %c0_0] : memref<1x128xf32, #tpu.memory_space<vmem>>, vector<1x128xf32>
    %cst = arith.constant 7.812500e-03 : f32
    %1 = vector.broadcast %cst : f32 to vector<1x128xf32>
    %2 = arith.mulf %0, %1 : vector<1x128xf32>
    %c0_1 = arith.constant 0 : index
    %c0_2 = arith.constant 0 : index
    %3 = vector.load %arg3[%c0_1, %c0_2] : memref<1x128xf32, #tpu.memory_space<vmem>>, vector<1x128xf32>
    %cst_3 = arith.constant 7.812500e-03 : f32
    %4 = vector.broadcast %cst_3 : f32 to vector<1x128xf32>
    %5 = arith.mulf %3, %4 : vector<1x128xf32>
    %6 = arith.mulf %2, %2 : vector<1x128xf32>
    %7 = arith.subf %5, %6 : vector<1x128xf32>
    %cst_4 = arith.constant 0.000000e+00 : f32
    %8 = vector.broadcast %cst_4 : f32 to vector<1x128xf32>
    %9 = arith.maximumf %7, %8 : vector<1x128xf32>
    %c0_5 = arith.constant 0 : index
    %c0_6 = arith.constant 0 : index
    %10 = vector.load %arg4[%c0_5, %c0_6] : memref<1x128xf32, #tpu.memory_space<vmem>>, vector<1x128xf32>
    %cst_7 = arith.constant 9.99999974E-6 : f32
    %11 = vector.broadcast %cst_7 : f32 to vector<1x128xf32>
    %12 = arith.addf %9, %11 : vector<1x128xf32>
    %13 = math.rsqrt %12 : vector<1x128xf32>
    %14 = arith.mulf %10, %13 : vector<1x128xf32>
    %c0_8 = arith.constant 0 : index
    %c0_9 = arith.constant 0 : index
    %15 = vector.load %arg5[%c0_8, %c0_9] : memref<1x128xf32, #tpu.memory_space<vmem>>, vector<1x128xf32>
    %16 = arith.mulf %2, %14 : vector<1x128xf32>
    %17 = arith.subf %15, %16 : vector<1x128xf32>
    %c0_10 = arith.constant 0 : index
    %c0_11 = arith.constant 0 : index
    %18 = vector.load %arg1[%c0_10, %c0_11] : memref<160x128xf32, #tpu.memory_space<vmem>>, vector<160x128xf32>
    %19 = vector.broadcast %14 : vector<1x128xf32> to vector<160x128xf32>
    %20 = arith.mulf %18, %19 : vector<160x128xf32>
    %21 = vector.broadcast %17 : vector<1x128xf32> to vector<160x128xf32>
    %22 = arith.addf %20, %21 : vector<160x128xf32>
    %c0_12 = arith.constant 0 : index
    %c0_13 = arith.constant 0 : index
    %23 = vector.load %arg6[%c0_12, %c0_13] : memref<160x128xf32, #tpu.memory_space<vmem>>, vector<160x128xf32>
    %24 = arith.addf %22, %23 : vector<160x128xf32>
    %cst_14 = arith.constant 0.000000e+00 : f32
    %25 = vector.broadcast %cst_14 : f32 to vector<160x128xf32>
    %26 = arith.maximumf %24, %25 : vector<160x128xf32>
    %c0_15 = arith.constant 0 : index
    %c0_16 = arith.constant 0 : index
    %27 = vector.load %arg7[%c0_15, %c0_16] : memref<160x128xf32, #tpu.memory_space<vmem>>, vector<160x128xf32>
    tpu.vector_store %arg7[%c0_15, %c0_16], %26 {strides = array<i32>} : memref<160x128xf32, #tpu.memory_space<vmem>>, vector<160x128xf32>,
    return
  }
  func.func @transform_0(%arg0: i32) -> (i32, i32) {
    %c0_i32 = arith.constant 0 : i32
    %c0_i32_0 = arith.constant 0 : i32
    return %arg0, %c0_i32 : i32, i32
  }
  func.func @transform_1(%arg0: i32) -> (i32, i32) {
    %c0_i32 = arith.constant 0 : i32
    %c0_i32_0 = arith.constant 0 : i32
    %c0_i32_1 = arith.constant 0 : i32
    return %c0_i32, %c0_i32_0 : i32, i32
  }
  func.func @transform_2(%arg0: i32) -> (i32, i32) {
    %c0_i32 = arith.constant 0 : i32
    %c0_i32_0 = arith.constant 0 : i32
    %c0_i32_1 = arith.constant 0 : i32
    return %c0_i32, %c0_i32_0 : i32, i32
  }
  func.func @transform_3(%arg0: i32) -> (i32, i32) {
    %c0_i32 = arith.constant 0 : i32
    %c0_i32_0 = arith.constant 0 : i32
    %c0_i32_1 = arith.constant 0 : i32
    return %c0_i32, %c0_i32_0 : i32, i32
  }
  func.func @transform_4(%arg0: i32) -> (i32, i32) {
    %c0_i32 = arith.constant 0 : i32
    %c0_i32_0 = arith.constant 0 : i32
    %c0_i32_1 = arith.constant 0 : i32
    return %c0_i32, %c0_i32_0 : i32, i32
  }
  func.func @transform_5(%arg0: i32) -> (i32, i32) {
    %c0_i32 = arith.constant 0 : i32
    %c0_i32_0 = arith.constant 0 : i32
    return %arg0, %c0_i32 : i32, i32
  }
  func.func @transform_6(%arg0: i32) -> (i32, i32) {
    %c0_i32 = arith.constant 0 : i32
    %c0_i32_0 = arith.constant 0 : i32
    return %arg0, %c0_i32 : i32, i32
  }
}

</mosaic_0001>

<llo_original>
// kernel: basic_block_forward.5
$region0: #{basic_block_forward.5}
  #allocation0 [shape = 'u32[]', space=smem, size = 0x4, offset = 0x4, fixed_abs, tag = 'smem constant byte address 0x4 - core index']
  #allocation1 [shape = 'u32[72,128]{1,0:T(1,128)}', space=vmem, size = 0x9000, scoped, tag = 'internal scratch']
  %s0 = inlined_call_operand.vmem [shape: f32[144,128], index: 0, kind: input, shape index: {}]
  %s1 = inlined_call_operand.vmem [shape: f32[1,128], index: 1, kind: input, shape index: {}]
  %s2 = inlined_call_operand.vmem [shape: f32[1,128], index: 2, kind: input, shape index: {}]
  %s3 = inlined_call_operand.vmem [shape: f32[1,128], index: 3, kind: input, shape index: {}]
  %s4 = inlined_call_operand.vmem [shape: f32[1,128], index: 4, kind: input, shape index: {}]
  %s5 = inlined_call_operand.vmem [shape: f32[144,128], index: 5, kind: output, shape index: {}]
  %s6 = sld [smem:[#allocation0]]
  $region30: #{basic_block_forward.5} parent=0
    _
  %s8 = ssub.s32 1, %s6
  %s9 = scalar_select 0, %s8, %s6
  // Predicated region
  $region2: #{basic_block_forward.5} parent=0 // pred_check
    _
  $region3: #{basic_block_forward.5} parent=0 // pred_check_branch
    %11 = sbr.rel (0) target = $region5
  $region4: #{basic_block_forward.5} parent=0 // pred_region
    _
  $region5: #{basic_block_forward.5} parent=0 // pred_fallthru
    _
  // Predicated region
  $region6: #{basic_block_forward.5} parent=0 // pred_check
    _
  $region7: #{basic_block_forward.5} parent=0 // pred_check_branch
    %13 = sbr.rel (0) target = $region9
  $region8: #{basic_block_forward.5} parent=0 // pred_region
    _
  $region9: #{basic_block_forward.5} parent=0 // pred_fallthru
    _
  // Predicated region
  $region10: #{basic_block_forward.5} parent=0 // pred_check
    _
  $region11: #{basic_block_forward.5} parent=0 // pred_check_branch
    %15 = sbr.rel (0) target = $region13
  $region12: #{basic_block_forward.5} parent=0 // pred_region
    _
  $region13: #{basic_block_forward.5} parent=0 // pred_fallthru
    _
  // Predicated region
  $region14: #{basic_block_forward.5} parent=0 // pred_check
    _
  $region15: #{basic_block_forward.5} parent=0 // pred_check_branch
    %17 = sbr.rel (0) target = $region17
  $region16: #{basic_block_forward.5} parent=0 // pred_region
    _
  $region17: #{basic_block_forward.5} parent=0 // pred_fallthru
    _
  // Predicated region
  $region18: #{basic_block_forward.5} parent=0 // pred_check
    _
  $region19: #{basic_block_forward.5} parent=0 // pred_check_branch
    %19 = sbr.rel (0) target = $region21
  $region20: #{basic_block_forward.5} parent=0 // pred_region
    _
  $region21: #{basic_block_forward.5} parent=0 // pred_fallthru
    _
  %v20 = vld [vmem:[%s1] sm:$0x1]
  %v21 = vmul.f32 %v20, 0.0078125
  %v22 = vld [vmem:[%s2] sm:$0x1]
  %v23 = vmul.f32 %v22, 0.0078125
  %v24 = vmul.f32 %v21, %v21
  %v25 = vsub.f32 %v23, %v24
  %v26 = vmax.f32 %v25, 0.0
  %v27 = vld [vmem:[%s3] sm:$0x1]
  %v28 = vadd.f32 %v26, 1e-05
  %v29 = vrsqrt.pop %v28
  %v30 = vmul.f32 %v29, %v28
  %v31 = vmul.f32 %v30, %v29
  %v32 = vmul.f32 0.5, %v31
  %v33 = vsub.f32 1.5, %v32
  %v34 = vmul.f32 %v29, %v33
  %vm35 = vweird.f32 %v28
  %vm36 = vweird.f32 %v29
  %vm37 = vmor %vm35, %vm36
  %v38 = vsel %vm37, %v29, %v34
  %v39 = vmul.f32 %v27, %v38
  %v40 = vld [vmem:[%s4] sm:$0x1]
  %v41 = vmul.f32 %v21, %v39
  %v42 = vsub.f32 %v40, %v41
  %v43 = vld [vmem:[%s0] sm:$0xff]
  %v44 = vld [vmem:[%s0 + $0x8] sm:$0xff]
  %v45 = vld [vmem:[%s0 + $0x10] sm:$0xff]
  %v46 = vld [vmem:[%s0 + $0x18] sm:$0xff]
  %v47 = vld [vmem:[%s0 + $0x20] sm:$0xff]
  %v48 = vld [vmem:[%s0 + $0x28] sm:$0xff]
  %v49 = vld [vmem:[%s0 + $0x30] sm:$0xff]
  %v50 = vld [vmem:[%s0 + $0x38] sm:$0xff]
  %v51 = vld [vmem:[%s0 + $0x40] sm:$0xff]
  %v52 = vld [vmem:[%s0 + $0x48] sm:$0xff]
  %v53 = vld [vmem:[%s0 + $0x50] sm:$0xff]
  %v54 = vld [vmem:[%s0 + $0x58] sm:$0xff]
  %v55 = vld [vmem:[%s0 + $0x60] sm:$0xff]
  %v56 = vld [vmem:[%s0 + $0x68] sm:$0xff]
  %v57 = vld [vmem:[%s0 + $0x70] sm:$0xff]
  %v58 = vld [vmem:[%s0 + $0x78] sm:$0xff]
  %v59 = vld [vmem:[%s0 + $0x80] sm:$0xff]
  %v60 = vld [vmem:[%s0 + $0x88] sm:$0xff]
  %v62 = vperm.slane %v39, 0
  %v64 = vmul.f32 %v43, %v62
  %v65 = vmul.f32 %v44, %v62
  %v66 = vmul.f32 %v45, %v62
  %v67 = vmul.f32 %v46, %v62
  %v68 = vmul.f32 %v47, %v62
  %v69 = vmul.f32 %v48, %v62
  %v70 = vmul.f32 %v49, %v62
  %v71 = vmul.f32 %v50, %v62
  %v72 = vmul.f32 %v51, %v62
  %v73 = vmul.f32 %v52, %v62
  %v74 = vmul.f32 %v53, %v62
  %v75 = vmul.f32 %v54, %v62
  %v76 = vmul.f32 %v55, %v62
  %v77 = vmul.f32 %v56, %v62
  %v78 = vmul.f32 %v57, %v62
  %v79 = vmul.f32 %v58, %v62
  %v80 = vmul.f32 %v59, %v62
  %v81 = vmul.f32 %v60, %v62
  %v83 = vperm.slane %v42, 0
  %v85 = vadd.f32 %v64, %v83
  %v86 = vadd.f32 %v65, %v83
  %v87 = vadd.f32 %v66, %v83
  %v88 = vadd.f32 %v67, %v83
  %v89 = vadd.f32 %v68, %v83
  %v90 = vadd.f32 %v69, %v83
  %v91 = vadd.f32 %v70, %v83
  %v92 = vadd.f32 %v71, %v83
  %v93 = vadd.f32 %v72, %v83
  %v94 = vadd.f32 %v73, %v83
  %v95 = vadd.f32 %v74, %v83
  %v96 = vadd.f32 %v75, %v83
  %v97 = vadd.f32 %v76, %v83
  %v98 = vadd.f32 %v77, %v83
  %v99 = vadd.f32 %v78, %v83
  %v100 = vadd.f32 %v79, %v83
  %v101 = vadd.f32 %v80, %v83
  %v102 = vadd.f32 %v81, %v83
  %v103 = vmax.f32 %v85, 0.0
  %v104 = vmax.f32 %v86, 0.0
  %v105 = vmax.f32 %v87, 0.0
  %v106 = vmax.f32 %v88, 0.0
  %v107 = vmax.f32 %v89, 0.0
  %v108 = vmax.f32 %v90, 0.0
  %v109 = vmax.f32 %v91, 0.0
  %v110 = vmax.f32 %v92, 0.0
  %v111 = vmax.f32 %v93, 0.0
  %v112 = vmax.f32 %v94, 0.0
  %v113 = vmax.f32 %v95, 0.0
  %v114 = vmax.f32 %v96, 0.0
  %v115 = vmax.f32 %v97, 0.0
  %v116 = vmax.f32 %v98, 0.0
  %v117 = vmax.f32 %v99, 0.0
  %v118 = vmax.f32 %v100, 0.0
  %v119 = vmax.f32 %v101, 0.0
  %v120 = vmax.f32 %v102, 0.0
  %121 = vst [vmem:[%s5] sm:$0xff] %v103
  %122 = vst [vmem:[%s5 + $0x8] sm:$0xff] %v104
  %123 = vst [vmem:[%s5 + $0x10] sm:$0xff] %v105
  %124 = vst [vmem:[%s5 + $0x18] sm:$0xff] %v106
  %125 = vst [vmem:[%s5 + $0x20] sm:$0xff] %v107
  %126 = vst [vmem:[%s5 + $0x28] sm:$0xff] %v108
  %127 = vst [vmem:[%s5 + $0x30] sm:$0xff] %v109
  %128 = vst [vmem:[%s5 + $0x38] sm:$0xff] %v110
  %129 = vst [vmem:[%s5 + $0x40] sm:$0xff] %v111
  %130 = vst [vmem:[%s5 + $0x48] sm:$0xff] %v112
  %131 = vst [vmem:[%s5 + $0x50] sm:$0xff] %v113
  %132 = vst [vmem:[%s5 + $0x58] sm:$0xff] %v114
  %133 = vst [vmem:[%s5 + $0x60] sm:$0xff] %v115
  %134 = vst [vmem:[%s5 + $0x68] sm:$0xff] %v116
  %135 = vst [vmem:[%s5 + $0x70] sm:$0xff] %v117
  %136 = vst [vmem:[%s5 + $0x78] sm:$0xff] %v118
  %137 = vst [vmem:[%s5 + $0x80] sm:$0xff] %v119
  %138 = vst [vmem:[%s5 + $0x88] sm:$0xff] %v120
  // Predicated region
  $region22: #{basic_block_forward.5} parent=0 // pred_check
    _
  $region23: #{basic_block_forward.5} parent=0 // pred_check_branch
    %140 = sbr.rel (0) target = $region25
  $region24: #{basic_block_forward.5} parent=0 // pred_region
    _
  $region25: #{basic_block_forward.5} parent=0 // pred_fallthru
    _
  // Predicated region
  $region26: #{basic_block_forward.5} parent=0 // pred_check
    _
  $region27: #{basic_block_forward.5} parent=0 // pred_check_branch
    %142 = sbr.rel (0) target = $region29
  $region28: #{basic_block_forward.5} parent=0 // pred_region
    _
  $region29: #{basic_block_forward.5} parent=0 // pred_fallthru
    _

// kernel: basic_block_forward.4
$region0: #{basic_block_forward.4}
  #allocation0 [shape = 'u32[]', space=smem, size = 0x4, offset = 0x4, fixed_abs, tag = 'smem constant byte address 0x4 - core index']
  #allocation1 [shape = 'u32[72,128]{1,0:T(1,128)}', space=vmem, size = 0x9000, scoped, tag = 'internal scratch']
  %s0 = inlined_call_operand.vmem [shape: f32[8,90,8], index: 0, kind: input, shape index: {}]
  %s1 = inlined_call_operand.vmem [shape: bf16[9,8,128], index: 1, kind: input, shape index: {}]
  %s2 = inlined_call_operand.vmem [shape: f32[144,128], index: 2, kind: output, shape index: {0}]
  %s3 = inlined_call_operand.vmem [shape: f32[1,128], index: 3, kind: output, shape index: {1}]
  %s4 = inlined_call_operand.vmem [shape: f32[1,128], index: 4, kind: output, shape index: {2}]
  %5 = xla_tuple %s2, %s3, %s4
  %s6 = sld [smem:[#allocation0]]
  $region61: #{basic_block_forward.4} parent=0
    _
  %s8 = ssub.s32 1, %s6
  %s9 = scalar_select 0, %s8, %s6
  loop: start=0, step=1, limit=4
  $region2: #{basic_block_forward.4} parent=0 // loop_pre_header
    _
  $region3: #{basic_block_forward.4} parent=0 // loop_header
    %s11 = sphi 0, %s15
    %p12 = scmp.ge.s32.totalorder %s11, 4
    %s18 = sphi 0, %s30
    %s19 = sphi 0, %s26
    %s20 = sphi 0, %s18
    %s21 = sphi 0, %s19
    %s22 = sphi 0, %s20
    %s23 = sphi 0, %s21
    %s33 = sphi 0, %s35
    %s36 = sphi 0, %s33
    %s37 = sphi 0, %s36
    %s53 = sphi 0, %s37
    %s57 = sphi 0, %s57
    %s59 = sphi 0, %s57
    %s60 = sphi 0, %s59
    %s74 = sphi 0, %s60
    %s82 = sphi 0, %s84
    %s85 = sphi 0, %s82
    %s86 = sphi 0, %s85
    %s102 = sphi 0, %s86
    %s106 = sphi 0, %s106
    %s108 = sphi 0, %s106
    %s109 = sphi 0, %s108
    %s123 = sphi 0, %s109
    %s127 = sphi 0, %s127
    %s129 = sphi 0, %s127
    %s130 = sphi 0, %s129
    %s144 = sphi 0, %s130
  $region4: #{basic_block_forward.4} parent=0 // loop_header_branch
    %14 = sbr.rel (%p12) target = $region8
  $region5: #{basic_block_forward.4} parent=0 // loop_body
    %s16 = ssub.s32 %s11, 1
    %s17 = ssub.s32 %s11, 2
    %s24 = sadd.s32 1, %s19
    %p25 = scmp.ge.s32.totalorder %s24, 1
    %s26 = scalar_select %p25, 0, %s24
    %s27 = sadd.s32 1, %s18
    %s28 = scalar_select %p25, %s27, %s18
    %p29 = scmp.ge.s32.totalorder %s28, 2
    %s30 = scalar_select %p29, 0, %s28
    %s31 = ssub.s32 %s18, %s30
    %p32 = scmp.eq.s32.totalorder %s31, 0
    %s34 = sadd.s32 %s33, 1
    %s35 = scalar_select %p32, %s33, %s34
    %p38 = pneg %p32
    %p39 = scmp.eq.s32.totalorder %s11, 1
    %p40 = por %p38, %p39
    %p41 = scmp.ne.s32.totalorder %s33, %s36
    %p42 = scmp.eq.s32.totalorder %s11, 0
    %p43 = por %p41, %p42
    %p44 = scmp.ne.s32.totalorder %s33, %s36
    %p45 = scmp.eq.s32.totalorder %s16, 1
    %p46 = por %p44, %p45
    %p47 = scmp.ne.s32.totalorder %s36, %s37
    %p48 = scmp.eq.s32.totalorder %s16, 0
    %p49 = por %p47, %p48
    %p50 = scmp.ne.s32.totalorder %s36, %s37
    %p51 = scmp.eq.s32.totalorder %s17, 1
    %p52 = por %p50, %p51
    %p54 = scmp.ne.s32.totalorder %s37, %s53
    %p55 = scmp.eq.s32.totalorder %s17, 0
    %p56 = por %p54, %p55
    %s58 = sadd.s32 %s57, 1
    %p61 = scmp.eq.s32.totalorder %s11, 1
    %p62 = scmp.ne.s32.totalorder %s57, %s59
    %p63 = scmp.eq.s32.totalorder %s11, 0
    %p64 = por %p62, %p63
    %p65 = scmp.ne.s32.totalorder %s57, %s59
    %p66 = scmp.eq.s32.totalorder %s16, 1
    %p67 = por %p65, %p66
    %p68 = scmp.ne.s32.totalorder %s59, %s60
    %p69 = scmp.eq.s32.totalorder %s16, 0
    %p70 = por %p68, %p69
    %p71 = scmp.ne.s32.totalorder %s59, %s60
    %p72 = scmp.eq.s32.totalorder %s17, 1
    %p73 = por %p71, %p72
    %p75 = scmp.ne.s32.totalorder %s60, %s74
    %p76 = scmp.eq.s32.totalorder %s17, 0
    %p77 = por %p75, %p76
    %s78 = sadd.s32 %s18, %s19
    %s79 = sadd.s32 %s30, %s26
    %s80 = ssub.s32 %s78, %s79
    %p81 = scmp.eq.s32.totalorder %s80, 0
    %s83 = sadd.s32 %s82, 1
    %s84 = scalar_select %p81, %s82, %s83
    %p87 = pneg %p81
    %p88 = scmp.eq.s32.totalorder %s11, 1
    %p89 = por %p87, %p88
    %p90 = scmp.ne.s32.totalorder %s82, %s85
    %p91 = scmp.eq.s32.totalorder %s11, 0
    %p92 = por %p90, %p91
    %p93 = scmp.ne.s32.totalorder %s82, %s85
    %p94 = scmp.eq.s32.totalorder %s16, 1
    %p95 = por %p93, %p94
    %p96 = scmp.ne.s32.totalorder %s85, %s86
    %p97 = scmp.eq.s32.totalorder %s16, 0
    %p98 = por %p96, %p97
    %p99 = scmp.ne.s32.totalorder %s85, %s86
    %p100 = scmp.eq.s32.totalorder %s17, 1
    %p101 = por %p99, %p100
    %p103 = scmp.ne.s32.totalorder %s86, %s102
    %p104 = scmp.eq.s32.totalorder %s17, 0
    %p105 = por %p103, %p104
    %s107 = sadd.s32 %s106, 1
    %p110 = scmp.eq.s32.totalorder %s11, 1
    %p111 = scmp.ne.s32.totalorder %s106, %s108
    %p112 = scmp.eq.s32.totalorder %s11, 0
    %p113 = por %p111, %p112
    %p114 = scmp.ne.s32.totalorder %s106, %s108
    %p115 = scmp.eq.s32.totalorder %s16, 1
    %p116 = por %p114, %p115
    %p117 = scmp.ne.s32.totalorder %s108, %s109
    %p118 = scmp.eq.s32.totalorder %s16, 0
    %p119 = por %p117, %p118
    %p120 = scmp.ne.s32.totalorder %s108, %s109
    %p121 = scmp.eq.s32.totalorder %s17, 1
    %p122 = por %p120, %p121
    %p124 = scmp.ne.s32.totalorder %s109, %s123
    %p125 = scmp.eq.s32.totalorder %s17, 0
    %p126 = por %p124, %p125
    %s128 = sadd.s32 %s127, 1
    %p131 = scmp.eq.s32.totalorder %s11, 1
    %p132 = scmp.ne.s32.totalorder %s127, %s129
    %p133 = scmp.eq.s32.totalorder %s11, 0
    %p134 = por %p132, %p133
    %p135 = scmp.ne.s32.totalorder %s127, %s129
    %p136 = scmp.eq.s32.totalorder %s16, 1
    %p137 = por %p135, %p136
    %p138 = scmp.ne.s32.totalorder %s129, %s130
    %p139 = scmp.eq.s32.totalorder %s16, 0
    %p140 = por %p138, %p139
    %p141 = scmp.ne.s32.totalorder %s129, %s130
    %p142 = scmp.eq.s32.totalorder %s17, 1
    %p143 = por %p141, %p142
    %p145 = scmp.ne.s32.totalorder %s130, %s144
    %p146 = scmp.eq.s32.totalorder %s17, 0
    %p147 = por %p145, %p146
    %p148 = scmp.le.s32.totalorder 1, %s11
    %p149 = scmp.lt.s32.totalorder %s11, 3
    %p150 = pnand %p148, %p149
    %p151 = pneg %p150
    // Predicated region
    $region9: #{basic_block_forward.4} parent=5 // pred_check
      _
    $region10: #{basic_block_forward.4} parent=5 // pred_check_branch
      %153 = sbr.rel (%p150) target = $region12
    $region11: #{basic_block_forward.4} parent=5 // pred_region
      %s154 = ssub.s32 %s11, 1
      // Predicated region
      $region13: #{basic_block_forward.4} parent=11 // pred_check
        %p155 = pneg %p70
      $region14: #{basic_block_forward.4} parent=11 // pred_check_branch
        %157 = sbr.rel (%p155) target = $region16
      $region15: #{basic_block_forward.4} parent=11 // pred_region
        _
      $region16: #{basic_block_forward.4} parent=11 // pred_fallthru
        _
    $region12: #{basic_block_forward.4} parent=5 // pred_fallthru
      _
    %p158 = scmp.lt.s32.totalorder %s11, 2
    // Predicated region
    $region17: #{basic_block_forward.4} parent=5 // pred_check
      %p159 = pneg %p158
    $region18: #{basic_block_forward.4} parent=5 // pred_check_branch
      %161 = sbr.rel (%p159) target = $region20
    $region19: #{basic_block_forward.4} parent=5 // pred_region
      // Predicated region
      $region21: #{basic_block_forward.4} parent=19 // pred_check
        %p162 = pneg %p43
      $region22: #{basic_block_forward.4} parent=19 // pred_check_branch
        %164 = sbr.rel (%p162) target = $region24
      $region23: #{basic_block_forward.4} parent=19 // pred_region
        %s165 = smul.u32 4, %s18
        %p166 = scmp.lt.s32.totalorder %s165, 7
        %s167 = scalar_select %p166, %s165, 7
        %s168 = smul.addr %s167, 12
        %s169 = smul.addr %s168, 8
        %s170 = scalar_lea.vmem %s0, %s169
        %s171 = smul.u32 4, %s18
      $region24: #{basic_block_forward.4} parent=19 // pred_fallthru
        _
    $region20: #{basic_block_forward.4} parent=5 // pred_fallthru
      _
    %p172 = scmp.le.s32.totalorder 1, %s11
    %p173 = scmp.lt.s32.totalorder %s11, 3
    %p174 = pnand %p172, %p173
    %p175 = pneg %p174
    // Predicated region
    $region25: #{basic_block_forward.4} parent=5 // pred_check
      _
    $region26: #{basic_block_forward.4} parent=5 // pred_check_branch
      %177 = sbr.rel (%p174) target = $region28
    $region27: #{basic_block_forward.4} parent=5 // pred_region
      %s178 = ssub.s32 %s11, 1
      %s179 = smul.u32 4, %s20
      %p180 = scmp.lt.s32.totalorder %s179, 7
      %s181 = scalar_select %p180, %s179, 7
      %s182 = smul.addr %s181, 12
      %s183 = smul.addr %s182, 8
      %s184 = scalar_lea.vmem %s0, %s183
      %p185 = pneg %p49
      %p186 = pneg %p46
      %p187 = pneg %p70
      %p188 = pneg %p67
      %p189 = pneg %p98
      %p190 = pneg %p95
      %s191 = sadd.s32 %s20, %s21
      %s192 = smul.u32 9, %s191
      %p193 = scmp.lt.s32.totalorder %s192, 17
      %s194 = scalar_select %p193, %s192, 17
      %s195 = smul.addr %s194, 8
      %s196 = scalar_lea.vmem %s2, %s195
      %p197 = pneg %p119
      %p198 = pneg %p116
      %p199 = pneg %p140
      %p200 = pneg %p137
      %s201 = smul.u32 4, %s20
      %p202 = scmp.lt.s32.totalorder %s201, 7
      %s203 = scalar_select %p202, %s201, 7
      %s204 = smul.addr %s203, 12
      %s205 = smul.addr %s204, 8
      %s206 = scalar_lea.vmem %s0, %s205
      %s207 = smul.u32 4, %s20
      %s208 = sadd.s32 %s20, %s21
      %s209 = smul.u32 9, %s208
      %p210 = scmp.lt.s32.totalorder %s209, 17
      %s211 = scalar_select %p210, %s209, 17
      %s212 = smul.addr %s211, 8
      %s213 = scalar_lea.vmem %s2, %s212
      %s214 = sadd.s32 %s20, %s21
      %s215 = smul.u32 9, %s214
      %p217 = scmp.eq.s32.totalorder %s20, 0
      %p218 = scmp.eq.s32.totalorder %s21, 0
      %p219 = pnand %p217, %p218
      %p220 = pneg %p219
      // Predicated region
      $region29: #{basic_block_forward.4} parent=27 // pred_check
        _
      $region30: #{basic_block_forward.4} parent=27 // pred_check_branch
        %222 = sbr.rel (%p219) target = $region32
      $region31: #{basic_block_forward.4} parent=27 // pred_region
        %223 = vst [vmem:[%s3] sm:$0x1] 0.0
        %224 = vst [vmem:[%s4] sm:$0x1] 0.0
      $region32: #{basic_block_forward.4} parent=27 // pred_fallthru
        _
      %v225 = vld [vmem:[%s206] sm:$0xff]
      %v226 = vld [vmem:[%s206 + $0x8] sm:$0xff]
      %v227 = vld [vmem:[%s206 + $0x10] sm:$0xff]
      %v228 = vld [vmem:[%s206 + $0x18] sm:$0xff]
      %v229 = vld [vmem:[%s206 + $0x20] sm:$0xff]
      %v230 = vld [vmem:[%s206 + $0x28] sm:$0xff]
      %v231 = vld [vmem:[%s206 + $0x30] sm:$0xff]
      %v232 = vld [vmem:[%s206 + $0x38] sm:$0xff]
      %v233 = vld [vmem:[%s206 + $0x40] sm:$0xff]
      %v234 = vpack.c.bf16 %v226, %v225
      %v235 = vpack.c.bf16 %v228, %v227
      %v236 = vpack.c.bf16 %v230, %v229
      %v237 = vpack.c.bf16 %v232, %v231
      %v238 = vpack.c.bf16 %v233, %v233
      %v239 = vld [vmem:[%s1] sm:$0xf]
      %s240 = scalar_lea.vmem %s206, 96
      %v241 = vld [vmem:[%s240] sm:$0xff]
      %v242 = vld [vmem:[%s240 + $0x8] sm:$0xff]
      %v243 = vld [vmem:[%s240 + $0x10] sm:$0xff]
      %v244 = vld [vmem:[%s240 + $0x18] sm:$0xff]
      %v245 = vld [vmem:[%s240 + $0x20] sm:$0xff]
      %v246 = vld [vmem:[%s240 + $0x28] sm:$0xff]
      %v247 = vld [vmem:[%s240 + $0x30] sm:$0xff]
      %v248 = vld [vmem:[%s240 + $0x38] sm:$0xff]
      %v249 = vld [vmem:[%s240 + $0x40] sm:$0xff]
      %v250 = vpack.c.bf16 %v242, %v241
      %v251 = vpack.c.bf16 %v244, %v243
      %v252 = vpack.c.bf16 %v246, %v245
      %v253 = vpack.c.bf16 %v248, %v247
      %v254 = vpack.c.bf16 %v249, %v249
      %s255 = scalar_lea.vmem %s1, 4
      %v256 = vld [vmem:[%s255] sm:$0xf]
      %vm257 = vcmask 64512
      %v259 = vsel %vm257, %v250, 0
      %v262 = vsel %vm257, %v251, 0
      %v265 = vsel %vm257, %v252, 0
      %v268 = vsel %vm257, %v253, 0
      %v271 = vsel %vm257, %v254, 0
      %vm273 = vcmask 1043456
      %v275 = vsel %vm273, %v256, 0
      %277 = vmatpush.bf16.msra.mxu0 0
      %278 = vmatpush.bf16.msra.mxu0 0
      %279 = vmatpush.bf16.msra.mxu0 0
      %280 = vmatpush.bf16.msra.mxu0 0
      %281 = vmatpush.bf16.msra.mxu0 0
      %282 = vmatpush.bf16.msra.mxu0 0
      %283 = vmatpush.bf16.msra.mxu0 0
      %284 = vmatpush.bf16.msra.mxu0 %v275
      %285 = vmatmul.bf16.gmra.mxu0 %v259
      %v286 = vpop.f32.mrf.mxu0
      %v287 = vadd.f32 0.0, %v286
      %v288 = vpop.f32.mrf.mxu0
      %v289 = vadd.f32 0.0, %v288
      %290 = vmatmul.bf16.gmra.mxu0 %v262
      %v291 = vpop.f32.mrf.mxu0
      %v292 = vadd.f32 0.0, %v291
      %v293 = vpop.f32.mrf.mxu0
      %v294 = vadd.f32 0.0, %v293
      %295 = vmatmul.bf16.gmra.mxu0 %v265
      %v296 = vpop.f32.mrf.mxu0
      %v297 = vadd.f32 0.0, %v296
      %v298 = vpop.f32.mrf.mxu0
      %v299 = vadd.f32 0.0, %v298
      %300 = vmatmul.bf16.gmra.mxu0 %v268
      %v301 = vpop.f32.mrf.mxu0
      %v302 = vadd.f32 0.0, %v301
      %v303 = vpop.f32.mrf.mxu0
      %v304 = vadd.f32 0.0, %v303
      %305 = vmatmul.bf16.gmra.mxu0 %v271
      %v306 = vpop.f32.mrf.mxu0
      %v307 = vadd.f32 0.0, %v306
      %v308 = vpop.f32.mrf.mxu0
      %309 = vdwg.mxu0
      %v311 = vsel %vm257, %v234, 0
      %v314 = vsel %vm257, %v235, 0
      %v317 = vsel %vm257, %v236, 0
      %v320 = vsel %vm257, %v237, 0
      %v323 = vsel %vm257, %v238, 0
      %v326 = vsel %vm273, %v239, 0
      %328 = vmatpush.bf16.msra.mxu0 0
      %329 = vmatpush.bf16.msra.mxu0 0
      %330 = vmatpush.bf16.msra.mxu0 0
      %331 = vmatpush.bf16.msra.mxu0 0
      %332 = vmatpush.bf16.msra.mxu0 0
      %333 = vmatpush.bf16.msra.mxu0 0
      %334 = vmatpush.bf16.msra.mxu0 0
      %335 = vmatpush.bf16.msra.mxu0 %v326
      %336 = vmatmul.bf16.gmra.mxu0 %v311
      %v337 = vpop.f32.mrf.mxu0
      %v338 = vadd.f32 %v287, %v337
      %v339 = vpop.f32.mrf.mxu0
      %v340 = vadd.f32 %v289, %v339
      %341 = vmatmul.bf16.gmra.mxu0 %v314
      %v342 = vpop.f32.mrf.mxu0
      %v343 = vadd.f32 %v292, %v342
      %v344 = vpop.f32.mrf.mxu0
      %v345 = vadd.f32 %v294, %v344
      %346 = vmatmul.bf16.gmra.mxu0 %v317
      %v347 = vpop.f32.mrf.mxu0
      %v348 = vadd.f32 %v297, %v347
      %v349 = vpop.f32.mrf.mxu0
      %v350 = vadd.f32 %v299, %v349
      %351 = vmatmul.bf16.gmra.mxu0 %v320
      %v352 = vpop.f32.mrf.mxu0
      %v353 = vadd.f32 %v302, %v352
      %v354 = vpop.f32.mrf.mxu0
      %v355 = vadd.f32 %v304, %v354
      %356 = vmatmul.bf16.gmra.mxu0 %v323
      %v357 = vpop.f32.mrf.mxu0
      %v358 = vadd.f32 %v307, %v357
      %v359 = vpop.f32.mrf.mxu0
      %360 = vdwg.mxu0
      %v361 = vld [vmem:[%s206 + $0x1] sm:$0xff]
      %v362 = vld [vmem:[%s206 + $0x9] sm:$0xff]
      %v363 = vld [vmem:[%s206 + $0x11] sm:$0xff]
      %v364 = vld [vmem:[%s206 + $0x19] sm:$0xff]
      %v365 = vld [vmem:[%s206 + $0x21] sm:$0xff]
      %v366 = vld [vmem:[%s206 + $0x29] sm:$0xff]
      %v367 = vld [vmem:[%s206 + $0x31] sm:$0xff]
      %v368 = vld [vmem:[%s206 + $0x39] sm:$0xff]
      %v369 = vld [vmem:[%s206 + $0x41] sm:$0xff]
      %v370 = vpack.c.bf16 %v362, %v361
      %v371 = vpack.c.bf16 %v364, %v363
      %v372 = vpack.c.bf16 %v366, %v365
      %v373 = vpack.c.bf16 %v368, %v367
      %v374 = vpack.c.bf16 %v369, %v369
      %s375 = scalar_lea.vmem %s1, 8
      %v376 = vld [vmem:[%s375] sm:$0xf]
      %v378 = vsel %vm257, %v370, 0
      %v381 = vsel %vm257, %v371, 0
      %v384 = vsel %vm257, %v372, 0
      %v387 = vsel %vm257, %v373, 0
      %v390 = vsel %vm257, %v374, 0
      %v393 = vsel %vm273, %v376, 0
      %395 = vmatpush.bf16.msra.mxu0 0
      %396 = vmatpush.bf16.msra.mxu0 0
      %397 = vmatpush.bf16.msra.mxu0 0
      %398 = vmatpush.bf16.msra.mxu0 0
      %399 = vmatpush.bf16.msra.mxu0 0
      %400 = vmatpush.bf16.msra.mxu0 0
      %401 = vmatpush.bf16.msra.mxu0 0
      %402 = vmatpush.bf16.msra.mxu0 %v393
      %403 = vmatmul.bf16.gmra.mxu0 %v378
      %v404 = vpop.f32.mrf.mxu0
      %v405 = vadd.f32 0.0, %v404
      %v406 = vpop.f32.mrf.mxu0
      %v407 = vadd.f32 0.0, %v406
      %408 = vmatmul.bf16.gmra.mxu0 %v381
      %v409 = vpop.f32.mrf.mxu0
      %v410 = vadd.f32 0.0, %v409
      %v411 = vpop.f32.mrf.mxu0
      %v412 = vadd.f32 0.0, %v411
      %413 = vmatmul.bf16.gmra.mxu0 %v384
      %v414 = vpop.f32.mrf.mxu0
      %v415 = vadd.f32 0.0, %v414
      %v416 = vpop.f32.mrf.mxu0
      %v417 = vadd.f32 0.0, %v416
      %418 = vmatmul.bf16.gmra.mxu0 %v387
      %v419 = vpop.f32.mrf.mxu0
      %v420 = vadd.f32 0.0, %v419
      %v421 = vpop.f32.mrf.mxu0
      %v422 = vadd.f32 0.0, %v421
      %423 = vmatmul.bf16.gmra.mxu0 %v390
      %v424 = vpop.f32.mrf.mxu0
      %v425 = vadd.f32 0.0, %v424
      %v426 = vpop.f32.mrf.mxu0
      %427 = vdwg.mxu0
      %v428 = vadd.f32 %v338, %v405
      %v429 = vadd.f32 %v340, %v407
      %v430 = vadd.f32 %v343, %v410
      %v431 = vadd.f32 %v345, %v412
      %v432 = vadd.f32 %v348, %v415
      %v433 = vadd.f32 %v350, %v417
      %v434 = vadd.f32 %v353, %v420
      %v435 = vadd.f32 %v355, %v422
      %v436 = vadd.f32 %v358, %v425
      %s437 = scalar_lea.vmem %s206, 192
      %v438 = vld [vmem:[%s437] sm:$0xff]
      %v439 = vld [vmem:[%s437 + $0x8] sm:$0xff]
      %v440 = vld [vmem:[%s437 + $0x10] sm:$0xff]
      %v441 = vld [vmem:[%s437 + $0x18] sm:$0xff]
      %v442 = vld [vmem:[%s437 + $0x20] sm:$0xff]
      %v443 = vld [vmem:[%s437 + $0x28] sm:$0xff]
      %v444 = vld [vmem:[%s437 + $0x30] sm:$0xff]
      %v445 = vld [vmem:[%s437 + $0x38] sm:$0xff]
      %v446 = vld [vmem:[%s437 + $0x40] sm:$0xff]
      %v447 = vpack.c.bf16 %v439, %v438
      %v448 = vpack.c.bf16 %v441, %v440
      %v449 = vpack.c.bf16 %v443, %v442
      %v450 = vpack.c.bf16 %v445, %v444
      %v451 = vpack.c.bf16 %v446, %v446
      %s452 = scalar_lea.vmem %s1, 12
      %v453 = vld [vmem:[%s452] sm:$0xf]
      %v455 = vsel %vm257, %v447, 0
      %v458 = vsel %vm257, %v448, 0
      %v461 = vsel %vm257, %v449, 0
      %v464 = vsel %vm257, %v450, 0
      %v467 = vsel %vm257, %v451, 0
      %v470 = vsel %vm273, %v453, 0
      %472 = vmatpush.bf16.msra.mxu0 0
      %473 = vmatpush.bf16.msra.mxu0 0
      %474 = vmatpush.bf16.msra.mxu0 0
      %475 = vmatpush.bf16.msra.mxu0 0
      %476 = vmatpush.bf16.msra.mxu0 0
      %477 = vmatpush.bf16.msra.mxu0 0
      %478 = vmatpush.bf16.msra.mxu0 0
      %479 = vmatpush.bf16.msra.mxu0 %v470
      %480 = vmatmul.bf16.gmra.mxu0 %v455
      %v481 = vpop.f32.mrf.mxu0
      %v482 = vadd.f32 0.0, %v481
      %v483 = vpop.f32.mrf.mxu0
      %v484 = vadd.f32 0.0, %v483
      %485 = vmatmul.bf16.gmra.mxu0 %v458
      %v486 = vpop.f32.mrf.mxu0
      %v487 = vadd.f32 0.0, %v486
      %v488 = vpop.f32.mrf.mxu0
      %v489 = vadd.f32 0.0, %v488
      %490 = vmatmul.bf16.gmra.mxu0 %v461
      %v491 = vpop.f32.mrf.mxu0
      %v492 = vadd.f32 0.0, %v491
      %v493 = vpop.f32.mrf.mxu0
      %v494 = vadd.f32 0.0, %v493
      %495 = vmatmul.bf16.gmra.mxu0 %v464
      %v496 = vpop.f32.mrf.mxu0
      %v497 = vadd.f32 0.0, %v496
      %v498 = vpop.f32.mrf.mxu0
      %v499 = vadd.f32 0.0, %v498
      %500 = vmatmul.bf16.gmra.mxu0 %v467
      %v501 = vpop.f32.mrf.mxu0
      %v502 = vadd.f32 0.0, %v501
      %v503 = vpop.f32.mrf.mxu0
      %504 = vdwg.mxu0
      %v505 = vadd.f32 %v428, %v482
      %v506 = vadd.f32 %v429, %v484
      %v507 = vadd.f32 %v430, %v487
      %v508 = vadd.f32 %v431, %v489
      %v509 = vadd.f32 %v432, %v492
      %v510 = vadd.f32 %v433, %v494
      %v511 = vadd.f32 %v434, %v497
      %v512 = vadd.f32 %v435, %v499
      %v513 = vadd.f32 %v436, %v502
      %s514 = scalar_lea.vmem %s206, 288
      %v515 = vld [vmem:[%s514] sm:$0xff]
      %v516 = vld [vmem:[%s514 + $0x8] sm:$0xff]
      %v517 = vld [vmem:[%s514 + $0x10] sm:$0xff]
      %v518 = vld [vmem:[%s514 + $0x18] sm:$0xff]
      %v519 = vld [vmem:[%s514 + $0x20] sm:$0xff]
      %v520 = vld [vmem:[%s514 + $0x28] sm:$0xff]
      %v521 = vld [vmem:[%s514 + $0x30] sm:$0xff]
      %v522 = vld [vmem:[%s514 + $0x38] sm:$0xff]
      %v523 = vld [vmem:[%s514 + $0x40] sm:$0xff]
      %v524 = vpack.c.bf16 %v516, %v515
      %v525 = vpack.c.bf16 %v518, %v517
      %v526 = vpack.c.bf16 %v520, %v519
      %v527 = vpack.c.bf16 %v522, %v521
      %v528 = vpack.c.bf16 %v523, %v523
      %s529 = scalar_lea.vmem %s1, 16
      %v530 = vld [vmem:[%s529] sm:$0xf]
      %v532 = vsel %vm257, %v524, 0
      %v535 = vsel %vm257, %v525, 0
      %v538 = vsel %vm257, %v526, 0
      %v541 = vsel %vm257, %v527, 0
      %v544 = vsel %vm257, %v528, 0
      %v547 = vsel %vm273, %v530, 0
      %549 = vmatpush.bf16.msra.mxu0 0
      %550 = vmatpush.bf16.msra.mxu0 0
      %551 = vmatpush.bf16.msra.mxu0 0
      %552 = vmatpush.bf16.msra.mxu0 0
      %553 = vmatpush.bf16.msra.mxu0 0
      %554 = vmatpush.bf16.msra.mxu0 0
      %555 = vmatpush.bf16.msra.mxu0 0
      %556 = vmatpush.bf16.msra.mxu0 %v547
      %557 = vmatmul.bf16.gmra.mxu0 %v532
      %v558 = vpop.f32.mrf.mxu0
      %v559 = vadd.f32 0.0, %v558
      %v560 = vpop.f32.mrf.mxu0
      %v561 = vadd.f32 0.0, %v560
      %562 = vmatmul.bf16.gmra.mxu0 %v535
      %v563 = vpop.f32.mrf.mxu0
      %v564 = vadd.f32 0.0, %v563
      %v565 = vpop.f32.mrf.mxu0
      %v566 = vadd.f32 0.0, %v565
      %567 = vmatmul.bf16.gmra.mxu0 %v538
      %v568 = vpop.f32.mrf.mxu0
      %v569 = vadd.f32 0.0, %v568
      %v570 = vpop.f32.mrf.mxu0
      %v571 = vadd.f32 0.0, %v570
      %572 = vmatmul.bf16.gmra.mxu0 %v541
      %v573 = vpop.f32.mrf.mxu0
      %v574 = vadd.f32 0.0, %v573
      %v575 = vpop.f32.mrf.mxu0
      %v576 = vadd.f32 0.0, %v575
      %577 = vmatmul.bf16.gmra.mxu0 %v544
      %v578 = vpop.f32.mrf.mxu0
      %v579 = vadd.f32 0.0, %v578
      %v580 = vpop.f32.mrf.mxu0
      %581 = vdwg.mxu0
      %v582 = vadd.f32 %v505, %v559
      %v583 = vadd.f32 %v506, %v561
      %v584 = vadd.f32 %v507, %v564
      %v585 = vadd.f32 %v508, %v566
      %v586 = vadd.f32 %v509, %v569
      %v587 = vadd.f32 %v510, %v571
      %v588 = vadd.f32 %v511, %v574
      %v589 = vadd.f32 %v512, %v576
      %v590 = vadd.f32 %v513, %v579
      %v591 = vld [vmem:[%s437 + $0x1] sm:$0xff]
      %v592 = vld [vmem:[%s437 + $0x9] sm:$0xff]
      %v593 = vld [vmem:[%s437 + $0x11] sm:$0xff]
      %v594 = vld [vmem:[%s437 + $0x19] sm:$0xff]
      %v595 = vld [vmem:[%s437 + $0x21] sm:$0xff]
      %v596 = vld [vmem:[%s437 + $0x29] sm:$0xff]
      %v597 = vld [vmem:[%s437 + $0x31] sm:$0xff]
      %v598 = vld [vmem:[%s437 + $0x39] sm:$0xff]
      %v599 = vld [vmem:[%s437 + $0x41] sm:$0xff]
      %v600 = vpack.c.bf16 %v592, %v591
      %v601 = vpack.c.bf16 %v594, %v593
      %v602 = vpack.c.bf16 %v596, %v595
      %v603 = vpack.c.bf16 %v598, %v597
      %v604 = vpack.c.bf16 %v599, %v599
      %s605 = scalar_lea.vmem %s1, 20
      %v606 = vld [vmem:[%s605] sm:$0xf]
      %v608 = vsel %vm257, %v600, 0
      %v611 = vsel %vm257, %v601, 0
      %v614 = vsel %vm257, %v602, 0
      %v617 = vsel %vm257, %v603, 0
      %v620 = vsel %vm257, %v604, 0
      %v623 = vsel %vm273, %v606, 0
      %625 = vmatpush.bf16.msra.mxu0 0
      %626 = vmatpush.bf16.msra.mxu0 0
      %627 = vmatpush.bf16.msra.mxu0 0
      %628 = vmatpush.bf16.msra.mxu0 0
      %629 = vmatpush.bf16.msra.mxu0 0
      %630 = vmatpush.bf16.msra.mxu0 0
      %631 = vmatpush.bf16.msra.mxu0 0
      %632 = vmatpush.bf16.msra.mxu0 %v623
      %633 = vmatmul.bf16.gmra.mxu0 %v608
      %v634 = vpop.f32.mrf.mxu0
      %v635 = vadd.f32 0.0, %v634
      %v636 = vpop.f32.mrf.mxu0
      %v637 = vadd.f32 0.0, %v636
      %638 = vmatmul.bf16.gmra.mxu0 %v611
      %v639 = vpop.f32.mrf.mxu0
      %v640 = vadd.f32 0.0, %v639
      %v641 = vpop.f32.mrf.mxu0
      %v642 = vadd.f32 0.0, %v641
      %643 = vmatmul.bf16.gmra.mxu0 %v614
      %v644 = vpop.f32.mrf.mxu0
      %v645 = vadd.f32 0.0, %v644
      %v646 = vpop.f32.mrf.mxu0
      %v647 = vadd.f32 0.0, %v646
      %648 = vmatmul.bf16.gmra.mxu0 %v617
      %v649 = vpop.f32.mrf.mxu0
      %v650 = vadd.f32 0.0, %v649
      %v651 = vpop.f32.mrf.mxu0
      %v652 = vadd.f32 0.0, %v651
      %653 = vmatmul.bf16.gmra.mxu0 %v620
      %v654 = vpop.f32.mrf.mxu0
      %v655 = vadd.f32 0.0, %v654
      %v656 = vpop.f32.mrf.mxu0
      %657 = vdwg.mxu0
      %v658 = vadd.f32 %v582, %v635
      %v659 = vadd.f32 %v583, %v637
      %v660 = vadd.f32 %v584, %v640
      %v661 = vadd.f32 %v585, %v642
      %v662 = vadd.f32 %v586, %v645
      %v663 = vadd.f32 %v587, %v647
      %v664 = vadd.f32 %v588, %v650
      %v665 = vadd.f32 %v589, %v652
      %v666 = vadd.f32 %v590, %v655
      %v667 = vld [vmem:[%s206 + $0x9] sm:$0xff]
      %v668 = vld [vmem:[%s206 + $0x11] sm:$0xff]
      %v669 = vld [vmem:[%s206 + $0x19] sm:$0xff]
      %v670 = vld [vmem:[%s206 + $0x21] sm:$0xff]
      %v671 = vld [vmem:[%s206 + $0x29] sm:$0xff]
      %v672 = vld [vmem:[%s206 + $0x31] sm:$0xff]
      %v673 = vld [vmem:[%s206 + $0x39] sm:$0xff]
      %v674 = vld [vmem:[%s206 + $0x41] sm:$0xff]
      %v675 = vld [vmem:[%s206 + $0x49] sm:$0xff]
      %v676 = vpack.c.bf16 %v668, %v667
      %v677 = vpack.c.bf16 %v670, %v669
      %v678 = vpack.c.bf16 %v672, %v671
      %v679 = vpack.c.bf16 %v674, %v673
      %v680 = vpack.c.bf16 %v675, %v675
      %s681 = scalar_lea.vmem %s1, 24
      %v682 = vld [vmem:[%s681] sm:$0xf]
      %v684 = vsel %vm257, %v676, 0
      %v687 = vsel %vm257, %v677, 0
      %v690 = vsel %vm257, %v678, 0
      %v693 = vsel %vm257, %v679, 0
      %v696 = vsel %vm257, %v680, 0
      %v699 = vsel %vm273, %v682, 0
      %701 = vmatpush.bf16.msra.mxu0 0
      %702 = vmatpush.bf16.msra.mxu0 0
      %703 = vmatpush.bf16.msra.mxu0 0
      %704 = vmatpush.bf16.msra.mxu0 0
      %705 = vmatpush.bf16.msra.mxu0 0
      %706 = vmatpush.bf16.msra.mxu0 0
      %707 = vmatpush.bf16.msra.mxu0 0
      %708 = vmatpush.bf16.msra.mxu0 %v699
      %709 = vmatmul.bf16.gmra.mxu0 %v684
      %v710 = vpop.f32.mrf.mxu0
      %v711 = vadd.f32 0.0, %v710
      %v712 = vpop.f32.mrf.mxu0
      %v713 = vadd.f32 0.0, %v712
      %714 = vmatmul.bf16.gmra.mxu0 %v687
      %v715 = vpop.f32.mrf.mxu0
      %v716 = vadd.f32 0.0, %v715
      %v717 = vpop.f32.mrf.mxu0
      %v718 = vadd.f32 0.0, %v717
      %719 = vmatmul.bf16.gmra.mxu0 %v690
      %v720 = vpop.f32.mrf.mxu0
      %v721 = vadd.f32 0.0, %v720
      %v722 = vpop.f32.mrf.mxu0
      %v723 = vadd.f32 0.0, %v722
      %724 = vmatmul.bf16.gmra.mxu0 %v693
      %v725 = vpop.f32.mrf.mxu0
      %v726 = vadd.f32 0.0, %v725
      %v727 = vpop.f32.mrf.mxu0
      %v728 = vadd.f32 0.0, %v727
      %729 = vmatmul.bf16.gmra.mxu0 %v696
      %v730 = vpop.f32.mrf.mxu0
      %v731 = vadd.f32 0.0, %v730
      %v732 = vpop.f32.mrf.mxu0
      %733 = vdwg.mxu0
      %v734 = vadd.f32 %v658, %v711
      %v735 = vadd.f32 %v659, %v713
      %v736 = vadd.f32 %v660, %v716
      %v737 = vadd.f32 %v661, %v718
      %v738 = vadd.f32 %v662, %v721
      %v739 = vadd.f32 %v663, %v723
      %v740 = vadd.f32 %v664, %v726
      %v741 = vadd.f32 %v665, %v728
      %v742 = vadd.f32 %v666, %v731
      %v743 = vld [vmem:[%s240 + $0x9] sm:$0xff]
      %v744 = vld [vmem:[%s240 + $0x11] sm:$0xff]
      %v745 = vld [vmem:[%s240 + $0x19] sm:$0xff]
      %v746 = vld [vmem:[%s240 + $0x21] sm:$0xff]
      %v747 = vld [vmem:[%s240 + $0x29] sm:$0xff]
      %v748 = vld [vmem:[%s240 + $0x31] sm:$0xff]
      %v749 = vld [vmem:[%s240 + $0x39] sm:$0xff]
      %v750 = vld [vmem:[%s240 + $0x41] sm:$0xff]
      %v751 = vld [vmem:[%s240 + $0x49] sm:$0xff]
      %v752 = vpack.c.bf16 %v744, %v743
      %v753 = vpack.c.bf16 %v746, %v745
      %v754 = vpack.c.bf16 %v748, %v747
      %v755 = vpack.c.bf16 %v750, %v749
      %v756 = vpack.c.bf16 %v751, %v751
      %s757 = scalar_lea.vmem %s1, 28
      %v758 = vld [vmem:[%s757] sm:$0xf]
      %v760 = vsel %vm257, %v752, 0
      %v763 = vsel %vm257, %v753, 0
      %v766 = vsel %vm257, %v754, 0
      %v769 = vsel %vm257, %v755, 0
      %v772 = vsel %vm257, %v756, 0
      %v775 = vsel %vm273, %v758, 0
      %777 = vmatpush.bf16.msra.mxu0 0
      %778 = vmatpush.bf16.msra.mxu0 0
      %779 = vmatpush.bf16.msra.mxu0 0
      %780 = vmatpush.bf16.msra.mxu0 0
      %781 = vmatpush.bf16.msra.mxu0 0
      %782 = vmatpush.bf16.msra.mxu0 0
      %783 = vmatpush.bf16.msra.mxu0 0
      %784 = vmatpush.bf16.msra.mxu0 %v775
      %785 = vmatmul.bf16.gmra.mxu0 %v760
      %v786 = vpop.f32.mrf.mxu0
      %v787 = vadd.f32 0.0, %v786
      %v788 = vpop.f32.mrf.mxu0
      %v789 = vadd.f32 0.0, %v788
      %790 = vmatmul.bf16.gmra.mxu0 %v763
      %v791 = vpop.f32.mrf.mxu0
      %v792 = vadd.f32 0.0, %v791
      %v793 = vpop.f32.mrf.mxu0
      %v794 = vadd.f32 0.0, %v793
      %795 = vmatmul.bf16.gmra.mxu0 %v766
      %v796 = vpop.f32.mrf.mxu0
      %v797 = vadd.f32 0.0, %v796
      %v798 = vpop.f32.mrf.mxu0
      %v799 = vadd.f32 0.0, %v798
      %800 = vmatmul.bf16.gmra.mxu0 %v769
      %v801 = vpop.f32.mrf.mxu0
      %v802 = vadd.f32 0.0, %v801
      %v803 = vpop.f32.mrf.mxu0
      %v804 = vadd.f32 0.0, %v803
      %805 = vmatmul.bf16.gmra.mxu0 %v772
      %v806 = vpop.f32.mrf.mxu0
      %v807 = vadd.f32 0.0, %v806
      %v808 = vpop.f32.mrf.mxu0
      %809 = vdwg.mxu0
      %v810 = vadd.f32 %v734, %v787
      %v811 = vadd.f32 %v735, %v789
      %v812 = vadd.f32 %v736, %v792
      %v813 = vadd.f32 %v737, %v794
      %v814 = vadd.f32 %v738, %v797
      %v815 = vadd.f32 %v739, %v799
      %v816 = vadd.f32 %v740, %v802
      %v817 = vadd.f32 %v741, %v804
      %v818 = vadd.f32 %v742, %v807
      %v819 = vld [vmem:[%s206 + $0xa] sm:$0xff]
      %v820 = vld [vmem:[%s206 + $0x12] sm:$0xff]
      %v821 = vld [vmem:[%s206 + $0x1a] sm:$0xff]
      %v822 = vld [vmem:[%s206 + $0x22] sm:$0xff]
      %v823 = vld [vmem:[%s206 + $0x2a] sm:$0xff]
      %v824 = vld [vmem:[%s206 + $0x32] sm:$0xff]
      %v825 = vld [vmem:[%s206 + $0x3a] sm:$0xff]
      %v826 = vld [vmem:[%s206 + $0x42] sm:$0xff]
      %v827 = vld [vmem:[%s206 + $0x4a] sm:$0xff]
      %v828 = vpack.c.bf16 %v820, %v819
      %v829 = vpack.c.bf16 %v822, %v821
      %v830 = vpack.c.bf16 %v824, %v823
      %v831 = vpack.c.bf16 %v826, %v825
      %v832 = vpack.c.bf16 %v827, %v827
      %s833 = scalar_lea.vmem %s1, 32
      %v834 = vld [vmem:[%s833] sm:$0xf]
      %v836 = vsel %vm257, %v828, 0
      %v839 = vsel %vm257, %v829, 0
      %v842 = vsel %vm257, %v830, 0
      %v845 = vsel %vm257, %v831, 0
      %v848 = vsel %vm257, %v832, 0
      %v851 = vsel %vm273, %v834, 0
      %853 = vmatpush.bf16.msra.mxu0 0
      %854 = vmatpush.bf16.msra.mxu0 0
      %855 = vmatpush.bf16.msra.mxu0 0
      %856 = vmatpush.bf16.msra.mxu0 0
      %857 = vmatpush.bf16.msra.mxu0 0
      %858 = vmatpush.bf16.msra.mxu0 0
      %859 = vmatpush.bf16.msra.mxu0 0
      %860 = vmatpush.bf16.msra.mxu0 %v851
      %861 = vmatmul.bf16.gmra.mxu0 %v836
      %v862 = vpop.f32.mrf.mxu0
      %v863 = vadd.f32 0.0, %v862
      %v864 = vpop.f32.mrf.mxu0
      %v865 = vadd.f32 0.0, %v864
      %866 = vmatmul.bf16.gmra.mxu0 %v839
      %v867 = vpop.f32.mrf.mxu0
      %v868 = vadd.f32 0.0, %v867
      %v869 = vpop.f32.mrf.mxu0
      %v870 = vadd.f32 0.0, %v869
      %871 = vmatmul.bf16.gmra.mxu0 %v842
      %v872 = vpop.f32.mrf.mxu0
      %v873 = vadd.f32 0.0, %v872
      %v874 = vpop.f32.mrf.mxu0
      %v875 = vadd.f32 0.0, %v874
      %876 = vmatmul.bf16.gmra.mxu0 %v845
      %v877 = vpop.f32.mrf.mxu0
      %v878 = vadd.f32 0.0, %v877
      %v879 = vpop.f32.mrf.mxu0
      %v880 = vadd.f32 0.0, %v879
      %881 = vmatmul.bf16.gmra.mxu0 %v848
      %v882 = vpop.f32.mrf.mxu0
      %v883 = vadd.f32 0.0, %v882
      %v884 = vpop.f32.mrf.mxu0
      %885 = vdwg.mxu0
      %v886 = vadd.f32 %v810, %v863
      %v887 = vadd.f32 %v811, %v865
      %v888 = vadd.f32 %v812, %v868
      %v889 = vadd.f32 %v813, %v870
      %v890 = vadd.f32 %v814, %v873
      %v891 = vadd.f32 %v815, %v875
      %v892 = vadd.f32 %v816, %v878
      %v893 = vadd.f32 %v817, %v880
      %v894 = vadd.f32 %v818, %v883
      %895 = vst [vmem:[%s213] sm:$0xff] %v886
      %896 = vst [vmem:[%s213 + $0x8] sm:$0xff] %v887
      %897 = vst [vmem:[%s213 + $0x10] sm:$0xff] %v888
      %898 = vst [vmem:[%s213 + $0x18] sm:$0xff] %v889
      %899 = vst [vmem:[%s213 + $0x20] sm:$0xff] %v890
      %900 = vst [vmem:[%s213 + $0x28] sm:$0xff] %v891
      %901 = vst [vmem:[%s213 + $0x30] sm:$0xff] %v892
      %902 = vst [vmem:[%s213 + $0x38] sm:$0xff] %v893
      %903 = vst [vmem:[%s213 + $0x40] sm:$0xff] %v894
      %v904 = vlaneseq
      %v905 = vshrl.u32 %v904, 7
      %v906 = vadd.s32 %v905, 8
      %v907 = vadd.s32 %v905, 16
      %v908 = vadd.s32 %v905, 24
      %v909 = vadd.s32 %v905, 32
      %v910 = vadd.s32 %v905, 40
      %v911 = vadd.s32 %v905, 48
      %v912 = vadd.s32 %v905, 56
      %v913 = vadd.s32 %v905, 64
      %vm914 = vcmp.lt.s32.totalorder %v905, 0
      %v915 = vsub.s32 0, %v905
      %v916 = vsel %vm914, %v915, %v905
      %v917 = vand.u32 %v916, 65535
      %v918 = vshrl.u32 %v916, 16
      %v920 = vmul.u32 %v917, 14564
      %v921 = vmul.u32 %v917, 58254
      %v922 = vmul.u32 %v918, 14564
      %v923 = vmul.u32 %v918, 58254
      %v924 = vshll.u32 %v921, 16
      %v925 = vshrl.u32 %v921, 16
      %v926 = vshll.u32 %v922, 16
      %v927 = vshrl.u32 %v922, 16
      %vm928 = vc.u32 %v920, %v924
      %v929 = vsel %vm928, 1, 0
      %v930 = vadd.s32 %v920, %v924
      %v931 = vadd.s32 %v923, %v929
      %vm932 = vc.u32 %v930, %v926
      %v933 = vsel %vm932, 1, 0
      %v934 = vadd.s32 %v930, %v926
      %v935 = vadd.s32 %v931, %v933
      %v936 = vadd.s32 %v935, %v925
      %v937 = vadd.s32 %v936, %v927
      %v938 = vshrl.u32 %v937, 3
      %v939 = vmul.u32 %v938, 9
      %v940 = vsub.s32 %v916, %v939
      %v941 = vsub.s32 0, %v940
      %v942 = vsel %vm914, %v941, %v940
      %vm943 = vcmp.lt.s32.totalorder %v906, 0
      %v944 = vsub.s32 0, %v906
      %v945 = vsel %vm943, %v944, %v906
      %v946 = vand.u32 %v945, 65535
      %v947 = vshrl.u32 %v945, 16
      %v949 = vmul.u32 %v946, 14564
      %v950 = vmul.u32 %v946, 58254
      %v951 = vmul.u32 %v947, 14564
      %v952 = vmul.u32 %v947, 58254
      %v953 = vshll.u32 %v950, 16
      %v954 = vshrl.u32 %v950, 16
      %v955 = vshll.u32 %v951, 16
      %v956 = vshrl.u32 %v951, 16
      %vm957 = vc.u32 %v949, %v953
      %v958 = vsel %vm957, 1, 0
      %v959 = vadd.s32 %v949, %v953
      %v960 = vadd.s32 %v952, %v958
      %vm961 = vc.u32 %v959, %v955
      %v962 = vsel %vm961, 1, 0
      %v963 = vadd.s32 %v959, %v955
      %v964 = vadd.s32 %v960, %v962
      %v965 = vadd.s32 %v964, %v954
      %v966 = vadd.s32 %v965, %v956
      %v967 = vshrl.u32 %v966, 3
      %v968 = vmul.u32 %v967, 9
      %v969 = vsub.s32 %v945, %v968
      %v970 = vsub.s32 0, %v969
      %v971 = vsel %vm943, %v970, %v969
      %vm972 = vcmp.lt.s32.totalorder %v907, 0
      %v973 = vsub.s32 0, %v907
      %v974 = vsel %vm972, %v973, %v907
      %v975 = vand.u32 %v974, 65535
      %v976 = vshrl.u32 %v974, 16
      %v978 = vmul.u32 %v975, 14564
      %v979 = vmul.u32 %v975, 58254
      %v980 = vmul.u32 %v976, 14564
      %v981 = vmul.u32 %v976, 58254
      %v982 = vshll.u32 %v979, 16
      %v983 = vshrl.u32 %v979, 16
      %v984 = vshll.u32 %v980, 16
      %v985 = vshrl.u32 %v980, 16
      %vm986 = vc.u32 %v978, %v982
      %v987 = vsel %vm986, 1, 0
      %v988 = vadd.s32 %v978, %v982
      %v989 = vadd.s32 %v981, %v987
      %vm990 = vc.u32 %v988, %v984
      %v991 = vsel %vm990, 1, 0
      %v992 = vadd.s32 %v988, %v984
      %v993 = vadd.s32 %v989, %v991
      %v994 = vadd.s32 %v993, %v983
      %v995 = vadd.s32 %v994, %v985
      %v996 = vshrl.u32 %v995, 3
      %v997 = vmul.u32 %v996, 9
      %v998 = vsub.s32 %v974, %v997
      %v999 = vsub.s32 0, %v998
      %v1000 = vsel %vm972, %v999, %v998
      %vm1001 = vcmp.lt.s32.totalorder %v908, 0
      %v1002 = vsub.s32 0, %v908
      %v1003 = vsel %vm1001, %v1002, %v908
      %v1004 = vand.u32 %v1003, 65535
      %v1005 = vshrl.u32 %v1003, 16
      %v1007 = vmul.u32 %v1004, 14564
      %v1008 = vmul.u32 %v1004, 58254
      %v1009 = vmul.u32 %v1005, 14564
      %v1010 = vmul.u32 %v1005, 58254
      %v1011 = vshll.u32 %v1008, 16
      %v1012 = vshrl.u32 %v1008, 16
      %v1013 = vshll.u32 %v1009, 16
      %v1014 = vshrl.u32 %v1009, 16
      %vm1015 = vc.u32 %v1007, %v1011
      %v1016 = vsel %vm1015, 1, 0
      %v1017 = vadd.s32 %v1007, %v1011
      %v1018 = vadd.s32 %v1010, %v1016
      %vm1019 = vc.u32 %v1017, %v1013
      %v1020 = vsel %vm1019, 1, 0
      %v1021 = vadd.s32 %v1017, %v1013
      %v1022 = vadd.s32 %v1018, %v1020
      %v1023 = vadd.s32 %v1022, %v1012
      %v1024 = vadd.s32 %v1023, %v1014
      %v1025 = vshrl.u32 %v1024, 3
      %v1026 = vmul.u32 %v1025, 9
      %v1027 = vsub.s32 %v1003, %v1026
      %v1028 = vsub.s32 0, %v1027
      %v1029 = vsel %vm1001, %v1028, %v1027
      %vm1030 = vcmp.lt.s32.totalorder %v909, 0
      %v1031 = vsub.s32 0, %v909
      %v1032 = vsel %vm1030, %v1031, %v909
      %v1033 = vand.u32 %v1032, 65535
      %v1034 = vshrl.u32 %v1032, 16
      %v1036 = vmul.u32 %v1033, 14564
      %v1037 = vmul.u32 %v1033, 58254
      %v1038 = vmul.u32 %v1034, 14564
      %v1039 = vmul.u32 %v1034, 58254
      %v1040 = vshll.u32 %v1037, 16
      %v1041 = vshrl.u32 %v1037, 16
      %v1042 = vshll.u32 %v1038, 16
      %v1043 = vshrl.u32 %v1038, 16
      %vm1044 = vc.u32 %v1036, %v1040
      %v1045 = vsel %vm1044, 1, 0
      %v1046 = vadd.s32 %v1036, %v1040
      %v1047 = vadd.s32 %v1039, %v1045
      %vm1048 = vc.u32 %v1046, %v1042
      %v1049 = vsel %vm1048, 1, 0
      %v1050 = vadd.s32 %v1046, %v1042
      %v1051 = vadd.s32 %v1047, %v1049
      %v1052 = vadd.s32 %v1051, %v1041
      %v1053 = vadd.s32 %v1052, %v1043
      %v1054 = vshrl.u32 %v1053, 3
      %v1055 = vmul.u32 %v1054, 9
      %v1056 = vsub.s32 %v1032, %v1055
      %v1057 = vsub.s32 0, %v1056
      %v1058 = vsel %vm1030, %v1057, %v1056
      %vm1059 = vcmp.lt.s32.totalorder %v910, 0
      %v1060 = vsub.s32 0, %v910
      %v1061 = vsel %vm1059, %v1060, %v910
      %v1062 = vand.u32 %v1061, 65535
      %v1063 = vshrl.u32 %v1061, 16
      %v1065 = vmul.u32 %v1062, 14564
      %v1066 = vmul.u32 %v1062, 58254
      %v1067 = vmul.u32 %v1063, 14564
      %v1068 = vmul.u32 %v1063, 58254
      %v1069 = vshll.u32 %v1066, 16
      %v1070 = vshrl.u32 %v1066, 16
      %v1071 = vshll.u32 %v1067, 16
      %v1072 = vshrl.u32 %v1067, 16
      %vm1073 = vc.u32 %v1065, %v1069
      %v1074 = vsel %vm1073, 1, 0
      %v1075 = vadd.s32 %v1065, %v1069
      %v1076 = vadd.s32 %v1068, %v1074
      %vm1077 = vc.u32 %v1075, %v1071
      %v1078 = vsel %vm1077, 1, 0
      %v1079 = vadd.s32 %v1075, %v1071
      %v1080 = vadd.s32 %v1076, %v1078
      %v1081 = vadd.s32 %v1080, %v1070
      %v1082 = vadd.s32 %v1081, %v1072
      %v1083 = vshrl.u32 %v1082, 3
      %v1084 = vmul.u32 %v1083, 9
      %v1085 = vsub.s32 %v1061, %v1084
      %v1086 = vsub.s32 0, %v1085
      %v1087 = vsel %vm1059, %v1086, %v1085
      %vm1088 = vcmp.lt.s32.totalorder %v911, 0
      %v1089 = vsub.s32 0, %v911
      %v1090 = vsel %vm1088, %v1089, %v911
      %v1091 = vand.u32 %v1090, 65535
      %v1092 = vshrl.u32 %v1090, 16
      %v1094 = vmul.u32 %v1091, 14564
      %v1095 = vmul.u32 %v1091, 58254
      %v1096 = vmul.u32 %v1092, 14564
      %v1097 = vmul.u32 %v1092, 58254
      %v1098 = vshll.u32 %v1095, 16
      %v1099 = vshrl.u32 %v1095, 16
      %v1100 = vshll.u32 %v1096, 16
      %v1101 = vshrl.u32 %v1096, 16
      %vm1102 = vc.u32 %v1094, %v1098
      %v1103 = vsel %vm1102, 1, 0
      %v1104 = vadd.s32 %v1094, %v1098
      %v1105 = vadd.s32 %v1097, %v1103
      %vm1106 = vc.u32 %v1104, %v1100
      %v1107 = vsel %vm1106, 1, 0
      %v1108 = vadd.s32 %v1104, %v1100
      %v1109 = vadd.s32 %v1105, %v1107
      %v1110 = vadd.s32 %v1109, %v1099
      %v1111 = vadd.s32 %v1110, %v1101
      %v1112 = vshrl.u32 %v1111, 3
      %v1113 = vmul.u32 %v1112, 9
      %v1114 = vsub.s32 %v1090, %v1113
      %v1115 = vsub.s32 0, %v1114
      %v1116 = vsel %vm1088, %v1115, %v1114
      %vm1117 = vcmp.lt.s32.totalorder %v912, 0
      %v1118 = vsub.s32 0, %v912
      %v1119 = vsel %vm1117, %v1118, %v912
      %v1120 = vand.u32 %v1119, 65535
      %v1121 = vshrl.u32 %v1119, 16
      %v1123 = vmul.u32 %v1120, 14564
      %v1124 = vmul.u32 %v1120, 58254
      %v1125 = vmul.u32 %v1121, 14564
      %v1126 = vmul.u32 %v1121, 58254
      %v1127 = vshll.u32 %v1124, 16
      %v1128 = vshrl.u32 %v1124, 16
      %v1129 = vshll.u32 %v1125, 16
      %v1130 = vshrl.u32 %v1125, 16
      %vm1131 = vc.u32 %v1123, %v1127
      %v1132 = vsel %vm1131, 1, 0
      %v1133 = vadd.s32 %v1123, %v1127
      %v1134 = vadd.s32 %v1126, %v1132
      %vm1135 = vc.u32 %v1133, %v1129
      %v1136 = vsel %vm1135, 1, 0
      %v1137 = vadd.s32 %v1133, %v1129
      %v1138 = vadd.s32 %v1134, %v1136
      %v1139 = vadd.s32 %v1138, %v1128
      %v1140 = vadd.s32 %v1139, %v1130
      %v1141 = vshrl.u32 %v1140, 3
      %v1142 = vmul.u32 %v1141, 9
      %v1143 = vsub.s32 %v1119, %v1142
      %v1144 = vsub.s32 0, %v1143
      %v1145 = vsel %vm1117, %v1144, %v1143
      %vm1146 = vcmp.lt.s32.totalorder %v913, 0
      %v1147 = vsub.s32 0, %v913
      %v1148 = vsel %vm1146, %v1147, %v913
      %v1149 = vand.u32 %v1148, 65535
      %v1150 = vshrl.u32 %v1148, 16
      %v1152 = vmul.u32 %v1149, 14564
      %v1153 = vmul.u32 %v1149, 58254
      %v1154 = vmul.u32 %v1150, 14564
      %v1155 = vmul.u32 %v1150, 58254
      %v1156 = vshll.u32 %v1153, 16
      %v1157 = vshrl.u32 %v1153, 16
      %v1158 = vshll.u32 %v1154, 16
      %v1159 = vshrl.u32 %v1154, 16
      %vm1160 = vc.u32 %v1152, %v1156
      %v1161 = vsel %vm1160, 1, 0
      %v1162 = vadd.s32 %v1152, %v1156
      %v1163 = vadd.s32 %v1155, %v1161
      %vm1164 = vc.u32 %v1162, %v1158
      %v1165 = vsel %vm1164, 1, 0
      %v1166 = vadd.s32 %v1162, %v1158
      %v1167 = vadd.s32 %v1163, %v1165
      %v1168 = vadd.s32 %v1167, %v1157
      %v1169 = vadd.s32 %v1168, %v1159
      %v1170 = vshrl.u32 %v1169, 3
      %v1171 = vmul.u32 %v1170, 9
      %v1172 = vsub.s32 %v1148, %v1171
      %v1173 = vsub.s32 0, %v1172
      %v1174 = vsel %vm1146, %v1173, %v1172
      %vm1175 = vcmp.ne.s32.totalorder %v942, 0
      %vm1176 = vcmp.ne.s32.totalorder %v971, 0
      %vm1177 = vcmp.ne.s32.totalorder %v1000, 0
      %vm1178 = vcmp.ne.s32.totalorder %v1029, 0
      %vm1179 = vcmp.ne.s32.totalorder %v1058, 0
      %vm1180 = vcmp.ne.s32.totalorder %v1087, 0
      %vm1181 = vcmp.ne.s32.totalorder %v1116, 0
      %vm1182 = vcmp.ne.s32.totalorder %v1145, 0
      %vm1183 = vcmp.ne.s32.totalorder %v1174, 0
      %vm1184 = vcmp.lt.s32.totalorder %v942, 0
      %vm1185 = vcmp.lt.s32.totalorder %v971, 0
      %vm1186 = vcmp.lt.s32.totalorder %v1000, 0
      %vm1187 = vcmp.lt.s32.totalorder %v1029, 0
      %vm1188 = vcmp.lt.s32.totalorder %v1058, 0
      %vm1189 = vcmp.lt.s32.totalorder %v1087, 0
      %vm1190 = vcmp.lt.s32.totalorder %v1116, 0
      %vm1191 = vcmp.lt.s32.totalorder %v1145, 0
      %vm1192 = vcmp.lt.s32.totalorder %v1174, 0
      %vm1193 = vmand %vm1184, %vm1175
      %vm1194 = vmand %vm1185, %vm1176
      %vm1195 = vmand %vm1186, %vm1177
      %vm1196 = vmand %vm1187, %vm1178
      %vm1197 = vmand %vm1188, %vm1179
      %vm1198 = vmand %vm1189, %vm1180
      %vm1199 = vmand %vm1190, %vm1181
      %vm1200 = vmand %vm1191, %vm1182
      %vm1201 = vmand %vm1192, %vm1183
      %v1202 = vadd.s32 %v942, 9
      %v1203 = vadd.s32 %v971, 9
      %v1204 = vadd.s32 %v1000, 9
      %v1205 = vadd.s32 %v1029, 9
      %v1206 = vadd.s32 %v1058, 9
      %v1207 = vadd.s32 %v1087, 9
      %v1208 = vadd.s32 %v1116, 9
      %v1209 = vadd.s32 %v1145, 9
      %v1210 = vadd.s32 %v1174, 9
      %v1211 = vsel %vm1193, %v1202, %v942
      %v1212 = vsel %vm1194, %v1203, %v971
      %v1213 = vsel %vm1195, %v1204, %v1000
      %v1214 = vsel %vm1196, %v1205, %v1029
      %v1215 = vsel %vm1197, %v1206, %v1058
      %v1216 = vsel %vm1198, %v1207, %v1087
      %v1217 = vsel %vm1199, %v1208, %v1116
      %v1218 = vsel %vm1200, %v1209, %v1145
      %v1219 = vsel %vm1201, %v1210, %v1174
      %vm1220 = vcmp.lt.s32.totalorder %v1211, 8
      %vm1221 = vcmp.lt.s32.totalorder %v1212, 8
      %vm1222 = vcmp.lt.s32.totalorder %v1213, 8
      %vm1223 = vcmp.lt.s32.totalorder %v1214, 8
      %vm1224 = vcmp.lt.s32.totalorder %v1215, 8
      %vm1225 = vcmp.lt.s32.totalorder %v1216, 8
      %vm1226 = vcmp.lt.s32.totalorder %v1217, 8
      %vm1227 = vcmp.lt.s32.totalorder %v1218, 8
      %vm1228 = vcmp.lt.s32.totalorder %v1219, 8
      %v1229 = vsel %vm1220, %v886, 0.0
      %v1230 = vsel %vm1221, %v887, 0.0
      %v1231 = vsel %vm1222, %v888, 0.0
      %v1232 = vsel %vm1223, %v889, 0.0
      %v1233 = vsel %vm1224, %v890, 0.0
      %v1234 = vsel %vm1225, %v891, 0.0
      %v1235 = vsel %vm1226, %v892, 0.0
      %v1236 = vsel %vm1227, %v893, 0.0
      %v1237 = vsel %vm1228, %v894, 0.0
      %v1238 = vld [vmem:[%s3] sm:$0x1]
      %v1239 = vadd.f32 %v1229, %v1230
      %v1240 = vadd.f32 %v1239, %v1231
      %v1241 = vadd.f32 %v1240, %v1232
      %v1242 = vadd.f32 %v1241, %v1233
      %v1243 = vadd.f32 %v1242, %v1234
      %v1244 = vadd.f32 %v1243, %v1235
      %v1245 = vadd.f32 %v1244, %v1236
      %v1246 = vadd.f32 %v1245, %v1237
      %v1247 = vrot.slane %v1246, 4
      %v1248 = vadd.f32 %v1246, %v1247
      %v1249 = vrot.slane %v1248, 2
      %v1250 = vadd.f32 %v1248, %v1249
      %v1251 = vrot.slane %v1250, 1
      %v1252 = vadd.f32 %v1250, %v1251
      %v1253 = vadd.f32 %v1238, %v1252
      %1254 = vst [vmem:[%s3] sm:$0x1] %v1253
      %v1255 = vld [vmem:[%s4] sm:$0x1]
      %v1256 = vmul.f32 %v1229, %v1229
      %v1257 = vmul.f32 %v1230, %v1230
      %v1258 = vmul.f32 %v1231, %v1231
      %v1259 = vmul.f32 %v1232, %v1232
      %v1260 = vmul.f32 %v1233, %v1233
      %v1261 = vmul.f32 %v1234, %v1234
      %v1262 = vmul.f32 %v1235, %v1235
      %v1263 = vmul.f32 %v1236, %v1236
      %v1264 = vmul.f32 %v1237, %v1237
      %v1265 = vadd.f32 %v1256, %v1257
      %v1266 = vadd.f32 %v1265, %v1258
      %v1267 = vadd.f32 %v1266, %v1259
      %v1268 = vadd.f32 %v1267, %v1260
      %v1269 = vadd.f32 %v1268, %v1261
      %v1270 = vadd.f32 %v1269, %v1262
      %v1271 = vadd.f32 %v1270, %v1263
      %v1272 = vadd.f32 %v1271, %v1264
      %v1273 = vrot.slane %v1272, 4
      %v1274 = vadd.f32 %v1272, %v1273
      %v1275 = vrot.slane %v1274, 2
      %v1276 = vadd.f32 %v1274, %v1275
      %v1277 = vrot.slane %v1276, 1
      %v1278 = vadd.f32 %v1276, %v1277
      %v1279 = vadd.f32 %v1255, %v1278
      %1280 = vst [vmem:[%s4] sm:$0x1] %v1279
      %s1281 = sadd.s32 %s20, %s21
      %s1282 = smul.u32 9, %s1281
      %p1283 = scmp.lt.s32.totalorder %s1282, 17
      %s1284 = scalar_select %p1283, %s1282, 17
      %s1285 = smul.addr %s1284, 8
      %s1286 = scalar_lea.vmem %s2, %s1285
      // Predicated region
      $region33: #{basic_block_forward.4} parent=27 // pred_check
        %p1287 = pneg %p95
      $region34: #{basic_block_forward.4} parent=27 // pred_check_branch
        %1289 = sbr.rel (%p1287) target = $region36
      $region35: #{basic_block_forward.4} parent=27 // pred_region
        %s1290 = sadd.s32 %s20, %s21
        %s1291 = smul.u32 9, %s1290
      $region36: #{basic_block_forward.4} parent=27 // pred_fallthru
        _
      // Predicated region
      $region37: #{basic_block_forward.4} parent=27 // pred_check
        %p1292 = pneg %p116
      $region38: #{basic_block_forward.4} parent=27 // pred_check_branch
        %1294 = sbr.rel (%p1292) target = $region40
      $region39: #{basic_block_forward.4} parent=27 // pred_region
        _
      $region40: #{basic_block_forward.4} parent=27 // pred_fallthru
        _
      // Predicated region
      $region41: #{basic_block_forward.4} parent=27 // pred_check
        %p1295 = pneg %p137
      $region42: #{basic_block_forward.4} parent=27 // pred_check_branch
        %1297 = sbr.rel (%p1295) target = $region44
      $region43: #{basic_block_forward.4} parent=27 // pred_region
        _
      $region44: #{basic_block_forward.4} parent=27 // pred_fallthru
        _
      // Predicated region
      $region45: #{basic_block_forward.4} parent=27 // pred_check
        %p1298 = pneg %p116
      $region46: #{basic_block_forward.4} parent=27 // pred_check_branch
        %1300 = sbr.rel (%p1298) target = $region48
      $region47: #{basic_block_forward.4} parent=27 // pred_region
        _
      $region48: #{basic_block_forward.4} parent=27 // pred_fallthru
        _
      // Predicated region
      $region49: #{basic_block_forward.4} parent=27 // pred_check
        %p1301 = pneg %p137
      $region50: #{basic_block_forward.4} parent=27 // pred_check_branch
        %1303 = sbr.rel (%p1301) target = $region52
      $region51: #{basic_block_forward.4} parent=27 // pred_region
        _
      $region52: #{basic_block_forward.4} parent=27 // pred_fallthru
        _
    $region28: #{basic_block_forward.4} parent=5 // pred_fallthru
      _
    %p1304 = scmp.le.s32.totalorder 2, %s11
    // Predicated region
    $region53: #{basic_block_forward.4} parent=5 // pred_check
      %p1305 = pneg %p1304
    $region54: #{basic_block_forward.4} parent=5 // pred_check_branch
      %1307 = sbr.rel (%p1305) target = $region56
    $region55: #{basic_block_forward.4} parent=5 // pred_region
      %s1308 = ssub.s32 %s11, 2
      // Predicated region
      $region57: #{basic_block_forward.4} parent=55 // pred_check
        %p1309 = pneg %p101
      $region58: #{basic_block_forward.4} parent=55 // pred_check_branch
        %1311 = sbr.rel (%p1309) target = $region60
      $region59: #{basic_block_forward.4} parent=55 // pred_region
        %s1312 = sadd.s32 %s22, %s23
        %s1313 = smul.u32 9, %s1312
        %p1314 = scmp.lt.s32.totalorder %s1313, 17
        %s1315 = scalar_select %p1314, %s1313, 17
        %s1316 = smul.addr %s1315, 8
        %s1317 = scalar_lea.vmem %s2, %s1316
      $region60: #{basic_block_forward.4} parent=55 // pred_fallthru
        _
    $region56: #{basic_block_forward.4} parent=5 // pred_fallthru
      _
  $region6: #{basic_block_forward.4} parent=0 // loop_footer
    %s15 = sadd.s32 1, %s11
  $region7: #{basic_block_forward.4} parent=0 // loop_footer_branch
    %10 = sbr.rel target = $region3
  $region8: #{basic_block_forward.4} parent=0 // loop_exit
    _

// kernel: basic_block_forward.7
$region0: #{basic_block_forward.7}
  #allocation0 [shape = 'u32[]', space=smem, size = 0x4, offset = 0x4, fixed_abs, tag = 'smem constant byte address 0x4 - core index']
  #allocation1 [shape = 'u32[72,128]{1,0:T(1,128)}', space=vmem, size = 0x9000, scoped, tag = 'internal scratch']
  %s0 = inlined_call_operand.vmem [shape: f32[160,128], index: 0, kind: input, shape index: {}]
  %s1 = inlined_call_operand.vmem [shape: f32[1,128], index: 1, kind: input, shape index: {}]
  %s2 = inlined_call_operand.vmem [shape: f32[1,128], index: 2, kind: input, shape index: {}]
  %s3 = inlined_call_operand.vmem [shape: f32[1,128], index: 3, kind: input, shape index: {}]
  %s4 = inlined_call_operand.vmem [shape: f32[1,128], index: 4, kind: input, shape index: {}]
  %s5 = inlined_call_operand.vmem [shape: f32[160,128], index: 5, kind: input, shape index: {}]
  %s6 = inlined_call_operand.vmem [shape: f32[160,128], index: 6, kind: output, shape index: {}]
  %s7 = sld [smem:[#allocation0]]
  $region34: #{basic_block_forward.7} parent=0
    _
  %s9 = ssub.s32 1, %s7
  %s10 = scalar_select 0, %s9, %s7
  // Predicated region
  $region2: #{basic_block_forward.7} parent=0 // pred_check
    _
  $region3: #{basic_block_forward.7} parent=0 // pred_check_branch
    %12 = sbr.rel (0) target = $region5
  $region4: #{basic_block_forward.7} parent=0 // pred_region
    _
  $region5: #{basic_block_forward.7} parent=0 // pred_fallthru
    _
  // Predicated region
  $region6: #{basic_block_forward.7} parent=0 // pred_check
    _
  $region7: #{basic_block_forward.7} parent=0 // pred_check_branch
    %14 = sbr.rel (0) target = $region9
  $region8: #{basic_block_forward.7} parent=0 // pred_region
    _
  $region9: #{basic_block_forward.7} parent=0 // pred_fallthru
    _
  // Predicated region
  $region10: #{basic_block_forward.7} parent=0 // pred_check
    _
  $region11: #{basic_block_forward.7} parent=0 // pred_check_branch
    %16 = sbr.rel (0) target = $region13
  $region12: #{basic_block_forward.7} parent=0 // pred_region
    _
  $region13: #{basic_block_forward.7} parent=0 // pred_fallthru
    _
  // Predicated region
  $region14: #{basic_block_forward.7} parent=0 // pred_check
    _
  $region15: #{basic_block_forward.7} parent=0 // pred_check_branch
    %18 = sbr.rel (0) target = $region17
  $region16: #{basic_block_forward.7} parent=0 // pred_region
    _
  $region17: #{basic_block_forward.7} parent=0 // pred_fallthru
    _
  // Predicated region
  $region18: #{basic_block_forward.7} parent=0 // pred_check
    _
  $region19: #{basic_block_forward.7} parent=0 // pred_check_branch
    %20 = sbr.rel (0) target = $region21
  $region20: #{basic_block_forward.7} parent=0 // pred_region
    _
  $region21: #{basic_block_forward.7} parent=0 // pred_fallthru
    _
  // Predicated region
  $region22: #{basic_block_forward.7} parent=0 // pred_check
    _
  $region23: #{basic_block_forward.7} parent=0 // pred_check_branch
    %22 = sbr.rel (0) target = $region25
  $region24: #{basic_block_forward.7} parent=0 // pred_region
    _
  $region25: #{basic_block_forward.7} parent=0 // pred_fallthru
    _
  %v23 = vld [vmem:[%s1] sm:$0x1]
  %v24 = vmul.f32 %v23, 0.0078125
  %v25 = vld [vmem:[%s2] sm:$0x1]
  %v26 = vmul.f32 %v25, 0.0078125
  %v27 = vmul.f32 %v24, %v24
  %v28 = vsub.f32 %v26, %v27
  %v29 = vmax.f32 %v28, 0.0
  %v30 = vld [vmem:[%s3] sm:$0x1]
  %v31 = vadd.f32 %v29, 1e-05
  %v32 = vrsqrt.pop %v31
  %v33 = vmul.f32 %v32, %v31
  %v34 = vmul.f32 %v33, %v32
  %v35 = vmul.f32 0.5, %v34
  %v36 = vsub.f32 1.5, %v35
  %v37 = vmul.f32 %v32, %v36
  %vm38 = vweird.f32 %v31
  %vm39 = vweird.f32 %v32
  %vm40 = vmor %vm38, %vm39
  %v41 = vsel %vm40, %v32, %v37
  %v42 = vmul.f32 %v30, %v41
  %v43 = vld [vmem:[%s4] sm:$0x1]
  %v44 = vmul.f32 %v24, %v42
  %v45 = vsub.f32 %v43, %v44
  %v46 = vld [vmem:[%s0] sm:$0xff]
  %v47 = vld [vmem:[%s0 + $0x8] sm:$0xff]
  %v48 = vld [vmem:[%s0 + $0x10] sm:$0xff]
  %v49 = vld [vmem:[%s0 + $0x18] sm:$0xff]
  %v50 = vld [vmem:[%s0 + $0x20] sm:$0xff]
  %v51 = vld [vmem:[%s0 + $0x28] sm:$0xff]
  %v52 = vld [vmem:[%s0 + $0x30] sm:$0xff]
  %v53 = vld [vmem:[%s0 + $0x38] sm:$0xff]
  %v54 = vld [vmem:[%s0 + $0x40] sm:$0xff]
  %v55 = vld [vmem:[%s0 + $0x48] sm:$0xff]
  %v56 = vld [vmem:[%s0 + $0x50] sm:$0xff]
  %v57 = vld [vmem:[%s0 + $0x58] sm:$0xff]
  %v58 = vld [vmem:[%s0 + $0x60] sm:$0xff]
  %v59 = vld [vmem:[%s0 + $0x68] sm:$0xff]
  %v60 = vld [vmem:[%s0 + $0x70] sm:$0xff]
  %v61 = vld [vmem:[%s0 + $0x78] sm:$0xff]
  %v62 = vld [vmem:[%s0 + $0x80] sm:$0xff]
  %v63 = vld [vmem:[%s0 + $0x88] sm:$0xff]
  %v64 = vld [vmem:[%s0 + $0x90] sm:$0xff]
  %v65 = vld [vmem:[%s0 + $0x98] sm:$0xff]
  %v67 = vperm.slane %v42, 0
  %v69 = vmul.f32 %v46, %v67
  %v70 = vmul.f32 %v47, %v67
  %v71 = vmul.f32 %v48, %v67
  %v72 = vmul.f32 %v49, %v67
  %v73 = vmul.f32 %v50, %v67
  %v74 = vmul.f32 %v51, %v67
  %v75 = vmul.f32 %v52, %v67
  %v76 = vmul.f32 %v53, %v67
  %v77 = vmul.f32 %v54, %v67
  %v78 = vmul.f32 %v55, %v67
  %v79 = vmul.f32 %v56, %v67
  %v80 = vmul.f32 %v57, %v67
  %v81 = vmul.f32 %v58, %v67
  %v82 = vmul.f32 %v59, %v67
  %v83 = vmul.f32 %v60, %v67
  %v84 = vmul.f32 %v61, %v67
  %v85 = vmul.f32 %v62, %v67
  %v86 = vmul.f32 %v63, %v67
  %v87 = vmul.f32 %v64, %v67
  %v88 = vmul.f32 %v65, %v67
  %v90 = vperm.slane %v45, 0
  %v92 = vadd.f32 %v69, %v90
  %v93 = vadd.f32 %v70, %v90
  %v94 = vadd.f32 %v71, %v90
  %v95 = vadd.f32 %v72, %v90
  %v96 = vadd.f32 %v73, %v90
  %v97 = vadd.f32 %v74, %v90
  %v98 = vadd.f32 %v75, %v90
  %v99 = vadd.f32 %v76, %v90
  %v100 = vadd.f32 %v77, %v90
  %v101 = vadd.f32 %v78, %v90
  %v102 = vadd.f32 %v79, %v90
  %v103 = vadd.f32 %v80, %v90
  %v104 = vadd.f32 %v81, %v90
  %v105 = vadd.f32 %v82, %v90
  %v106 = vadd.f32 %v83, %v90
  %v107 = vadd.f32 %v84, %v90
  %v108 = vadd.f32 %v85, %v90
  %v109 = vadd.f32 %v86, %v90
  %v110 = vadd.f32 %v87, %v90
  %v111 = vadd.f32 %v88, %v90
  %v112 = vld [vmem:[%s5] sm:$0xff]
  %v113 = vld [vmem:[%s5 + $0x8] sm:$0xff]
  %v114 = vld [vmem:[%s5 + $0x10] sm:$0xff]
  %v115 = vld [vmem:[%s5 + $0x18] sm:$0xff]
  %v116 = vld [vmem:[%s5 + $0x20] sm:$0xff]
  %v117 = vld [vmem:[%s5 + $0x28] sm:$0xff]
  %v118 = vld [vmem:[%s5 + $0x30] sm:$0xff]
  %v119 = vld [vmem:[%s5 + $0x38] sm:$0xff]
  %v120 = vld [vmem:[%s5 + $0x40] sm:$0xff]
  %v121 = vld [vmem:[%s5 + $0x48] sm:$0xff]
  %v122 = vld [vmem:[%s5 + $0x50] sm:$0xff]
  %v123 = vld [vmem:[%s5 + $0x58] sm:$0xff]
  %v124 = vld [vmem:[%s5 + $0x60] sm:$0xff]
  %v125 = vld [vmem:[%s5 + $0x68] sm:$0xff]
  %v126 = vld [vmem:[%s5 + $0x70] sm:$0xff]
  %v127 = vld [vmem:[%s5 + $0x78] sm:$0xff]
  %v128 = vld [vmem:[%s5 + $0x80] sm:$0xff]
  %v129 = vld [vmem:[%s5 + $0x88] sm:$0xff]
  %v130 = vld [vmem:[%s5 + $0x90] sm:$0xff]
  %v131 = vld [vmem:[%s5 + $0x98] sm:$0xff]
  %v132 = vadd.f32 %v92, %v112
  %v133 = vadd.f32 %v93, %v113
  %v134 = vadd.f32 %v94, %v114
  %v135 = vadd.f32 %v95, %v115
  %v136 = vadd.f32 %v96, %v116
  %v137 = vadd.f32 %v97, %v117
  %v138 = vadd.f32 %v98, %v118
  %v139 = vadd.f32 %v99, %v119
  %v140 = vadd.f32 %v100, %v120
  %v141 = vadd.f32 %v101, %v121
  %v142 = vadd.f32 %v102, %v122
  %v143 = vadd.f32 %v103, %v123
  %v144 = vadd.f32 %v104, %v124
  %v145 = vadd.f32 %v105, %v125
  %v146 = vadd.f32 %v106, %v126
  %v147 = vadd.f32 %v107, %v127
  %v148 = vadd.f32 %v108, %v128
  %v149 = vadd.f32 %v109, %v129
  %v150 = vadd.f32 %v110, %v130
  %v151 = vadd.f32 %v111, %v131
  %v152 = vmax.f32 %v132, 0.0
  %v153 = vmax.f32 %v133, 0.0
  %v154 = vmax.f32 %v134, 0.0
  %v155 = vmax.f32 %v135, 0.0
  %v156 = vmax.f32 %v136, 0.0
  %v157 = vmax.f32 %v137, 0.0
  %v158 = vmax.f32 %v138, 0.0
  %v159 = vmax.f32 %v139, 0.0
  %v160 = vmax.f32 %v140, 0.0
  %v161 = vmax.f32 %v141, 0.0
  %v162 = vmax.f32 %v142, 0.0
  %v163 = vmax.f32 %v143, 0.0
  %v164 = vmax.f32 %v144, 0.0
  %v165 = vmax.f32 %v145, 0.0
  %v166 = vmax.f32 %v146, 0.0
  %v167 = vmax.f32 %v147, 0.0
  %v168 = vmax.f32 %v148, 0.0
  %v169 = vmax.f32 %v149, 0.0
  %v170 = vmax.f32 %v150, 0.0
  %v171 = vmax.f32 %v151, 0.0
  %172 = vst [vmem:[%s6] sm:$0xff] %v152
  %173 = vst [vmem:[%s6 + $0x8] sm:$0xff] %v153
  %174 = vst [vmem:[%s6 + $0x10] sm:$0xff] %v154
  %175 = vst [vmem:[%s6 + $0x18] sm:$0xff] %v155
  %176 = vst [vmem:[%s6 + $0x20] sm:$0xff] %v156
  %177 = vst [vmem:[%s6 + $0x28] sm:$0xff] %v157
  %178 = vst [vmem:[%s6 + $0x30] sm:$0xff] %v158
  %179 = vst [vmem:[%s6 + $0x38] sm:$0xff] %v159
  %180 = vst [vmem:[%s6 + $0x40] sm:$0xff] %v160
  %181 = vst [vmem:[%s6 + $0x48] sm:$0xff] %v161
  %182 = vst [vmem:[%s6 + $0x50] sm:$0xff] %v162
  %183 = vst [vmem:[%s6 + $0x58] sm:$0xff] %v163
  %184 = vst [vmem:[%s6 + $0x60] sm:$0xff] %v164
  %185 = vst [vmem:[%s6 + $0x68] sm:$0xff] %v165
  %186 = vst [vmem:[%s6 + $0x70] sm:$0xff] %v166
  %187 = vst [vmem:[%s6 + $0x78] sm:$0xff] %v167
  %188 = vst [vmem:[%s6 + $0x80] sm:$0xff] %v168
  %189 = vst [vmem:[%s6 + $0x88] sm:$0xff] %v169
  %190 = vst [vmem:[%s6 + $0x90] sm:$0xff] %v170
  %191 = vst [vmem:[%s6 + $0x98] sm:$0xff] %v171
  // Predicated region
  $region26: #{basic_block_forward.7} parent=0 // pred_check
    _
  $region27: #{basic_block_forward.7} parent=0 // pred_check_branch
    %193 = sbr.rel (0) target = $region29
  $region28: #{basic_block_forward.7} parent=0 // pred_region
    _
  $region29: #{basic_block_forward.7} parent=0 // pred_fallthru
    _
  // Predicated region
  $region30: #{basic_block_forward.7} parent=0 // pred_check
    _
  $region31: #{basic_block_forward.7} parent=0 // pred_check_branch
    %195 = sbr.rel (0) target = $region33
  $region32: #{basic_block_forward.7} parent=0 // pred_region
    _
  $region33: #{basic_block_forward.7} parent=0 // pred_fallthru
    _

// kernel: basic_block_forward.6
$region0: #{basic_block_forward.6}
  #allocation0 [shape = 'u32[]', space=smem, size = 0x4, offset = 0x4, fixed_abs, tag = 'smem constant byte address 0x4 - core index']
  #allocation1 [shape = 'u32[72,128]{1,0:T(1,128)}', space=vmem, size = 0x9000, scoped, tag = 'internal scratch']
  %s0 = inlined_call_operand.vmem [shape: f32[2,110,128], index: 0, kind: input, shape index: {}]
  %s1 = inlined_call_operand.vmem [shape: bf16[9,128,128], index: 1, kind: input, shape index: {}]
  %s2 = inlined_call_operand.vmem [shape: f32[160,128], index: 2, kind: output, shape index: {0}]
  %s3 = inlined_call_operand.vmem [shape: f32[1,128], index: 3, kind: output, shape index: {1}]
  %s4 = inlined_call_operand.vmem [shape: f32[1,128], index: 4, kind: output, shape index: {2}]
  %5 = xla_tuple %s2, %s3, %s4
  %s6 = sld [smem:[#allocation0]]
  $region61: #{basic_block_forward.6} parent=0
    _
  %s8 = ssub.s32 1, %s6
  %s9 = scalar_select 0, %s8, %s6
  loop: start=0, step=1, limit=4
  $region2: #{basic_block_forward.6} parent=0 // loop_pre_header
    _
  $region3: #{basic_block_forward.6} parent=0 // loop_header
    %s11 = sphi 0, %s15
    %p12 = scmp.ge.s32.totalorder %s11, 4
    %s18 = sphi 0, %s30
    %s19 = sphi 0, %s26
    %s20 = sphi 0, %s18
    %s21 = sphi 0, %s19
    %s22 = sphi 0, %s20
    %s23 = sphi 0, %s21
    %s33 = sphi 0, %s35
    %s36 = sphi 0, %s33
    %s37 = sphi 0, %s36
    %s53 = sphi 0, %s37
    %s57 = sphi 0, %s57
    %s59 = sphi 0, %s57
    %s60 = sphi 0, %s59
    %s74 = sphi 0, %s60
    %s82 = sphi 0, %s84
    %s85 = sphi 0, %s82
    %s86 = sphi 0, %s85
    %s102 = sphi 0, %s86
    %s106 = sphi 0, %s106
    %s108 = sphi 0, %s106
    %s109 = sphi 0, %s108
    %s123 = sphi 0, %s109
    %s127 = sphi 0, %s127
    %s129 = sphi 0, %s127
    %s130 = sphi 0, %s129
    %s144 = sphi 0, %s130
  $region4: #{basic_block_forward.6} parent=0 // loop_header_branch
    %14 = sbr.rel (%p12) target = $region8
  $region5: #{basic_block_forward.6} parent=0 // loop_body
    %s16 = ssub.s32 %s11, 1
    %s17 = ssub.s32 %s11, 2
    %s24 = sadd.s32 1, %s19
    %p25 = scmp.ge.s32.totalorder %s24, 1
    %s26 = scalar_select %p25, 0, %s24
    %s27 = sadd.s32 1, %s18
    %s28 = scalar_select %p25, %s27, %s18
    %p29 = scmp.ge.s32.totalorder %s28, 2
    %s30 = scalar_select %p29, 0, %s28
    %s31 = ssub.s32 %s18, %s30
    %p32 = scmp.eq.s32.totalorder %s31, 0
    %s34 = sadd.s32 %s33, 1
    %s35 = scalar_select %p32, %s33, %s34
    %p38 = pneg %p32
    %p39 = scmp.eq.s32.totalorder %s11, 1
    %p40 = por %p38, %p39
    %p41 = scmp.ne.s32.totalorder %s33, %s36
    %p42 = scmp.eq.s32.totalorder %s11, 0
    %p43 = por %p41, %p42
    %p44 = scmp.ne.s32.totalorder %s33, %s36
    %p45 = scmp.eq.s32.totalorder %s16, 1
    %p46 = por %p44, %p45
    %p47 = scmp.ne.s32.totalorder %s36, %s37
    %p48 = scmp.eq.s32.totalorder %s16, 0
    %p49 = por %p47, %p48
    %p50 = scmp.ne.s32.totalorder %s36, %s37
    %p51 = scmp.eq.s32.totalorder %s17, 1
    %p52 = por %p50, %p51
    %p54 = scmp.ne.s32.totalorder %s37, %s53
    %p55 = scmp.eq.s32.totalorder %s17, 0
    %p56 = por %p54, %p55
    %s58 = sadd.s32 %s57, 1
    %p61 = scmp.eq.s32.totalorder %s11, 1
    %p62 = scmp.ne.s32.totalorder %s57, %s59
    %p63 = scmp.eq.s32.totalorder %s11, 0
    %p64 = por %p62, %p63
    %p65 = scmp.ne.s32.totalorder %s57, %s59
    %p66 = scmp.eq.s32.totalorder %s16, 1
    %p67 = por %p65, %p66
    %p68 = scmp.ne.s32.totalorder %s59, %s60
    %p69 = scmp.eq.s32.totalorder %s16, 0
    %p70 = por %p68, %p69
    %p71 = scmp.ne.s32.totalorder %s59, %s60
    %p72 = scmp.eq.s32.totalorder %s17, 1
    %p73 = por %p71, %p72
    %p75 = scmp.ne.s32.totalorder %s60, %s74
    %p76 = scmp.eq.s32.totalorder %s17, 0
    %p77 = por %p75, %p76
    %s78 = sadd.s32 %s18, %s19
    %s79 = sadd.s32 %s30, %s26
    %s80 = ssub.s32 %s78, %s79
    %p81 = scmp.eq.s32.totalorder %s80, 0
    %s83 = sadd.s32 %s82, 1
    %s84 = scalar_select %p81, %s82, %s83
    %p87 = pneg %p81
    %p88 = scmp.eq.s32.totalorder %s11, 1
    %p89 = por %p87, %p88
    %p90 = scmp.ne.s32.totalorder %s82, %s85
    %p91 = scmp.eq.s32.totalorder %s11, 0
    %p92 = por %p90, %p91
    %p93 = scmp.ne.s32.totalorder %s82, %s85
    %p94 = scmp.eq.s32.totalorder %s16, 1
    %p95 = por %p93, %p94
    %p96 = scmp.ne.s32.totalorder %s85, %s86
    %p97 = scmp.eq.s32.totalorder %s16, 0
    %p98 = por %p96, %p97
    %p99 = scmp.ne.s32.totalorder %s85, %s86
    %p100 = scmp.eq.s32.totalorder %s17, 1
    %p101 = por %p99, %p100
    %p103 = scmp.ne.s32.totalorder %s86, %s102
    %p104 = scmp.eq.s32.totalorder %s17, 0
    %p105 = por %p103, %p104
    %s107 = sadd.s32 %s106, 1
    %p110 = scmp.eq.s32.totalorder %s11, 1
    %p111 = scmp.ne.s32.totalorder %s106, %s108
    %p112 = scmp.eq.s32.totalorder %s11, 0
    %p113 = por %p111, %p112
    %p114 = scmp.ne.s32.totalorder %s106, %s108
    %p115 = scmp.eq.s32.totalorder %s16, 1
    %p116 = por %p114, %p115
    %p117 = scmp.ne.s32.totalorder %s108, %s109
    %p118 = scmp.eq.s32.totalorder %s16, 0
    %p119 = por %p117, %p118
    %p120 = scmp.ne.s32.totalorder %s108, %s109
    %p121 = scmp.eq.s32.totalorder %s17, 1
    %p122 = por %p120, %p121
    %p124 = scmp.ne.s32.totalorder %s109, %s123
    %p125 = scmp.eq.s32.totalorder %s17, 0
    %p126 = por %p124, %p125
    %s128 = sadd.s32 %s127, 1
    %p131 = scmp.eq.s32.totalorder %s11, 1
    %p132 = scmp.ne.s32.totalorder %s127, %s129
    %p133 = scmp.eq.s32.totalorder %s11, 0
    %p134 = por %p132, %p133
    %p135 = scmp.ne.s32.totalorder %s127, %s129
    %p136 = scmp.eq.s32.totalorder %s16, 1
    %p137 = por %p135, %p136
    %p138 = scmp.ne.s32.totalorder %s129, %s130
    %p139 = scmp.eq.s32.totalorder %s16, 0
    %p140 = por %p138, %p139
    %p141 = scmp.ne.s32.totalorder %s129, %s130
    %p142 = scmp.eq.s32.totalorder %s17, 1
    %p143 = por %p141, %p142
    %p145 = scmp.ne.s32.totalorder %s130, %s144
    %p146 = scmp.eq.s32.totalorder %s17, 0
    %p147 = por %p145, %p146
    %p148 = scmp.le.s32.totalorder 1, %s11
    %p149 = scmp.lt.s32.totalorder %s11, 3
    %p150 = pnand %p148, %p149
    %p151 = pneg %p150
    // Predicated region
    $region9: #{basic_block_forward.6} parent=5 // pred_check
      _
    $region10: #{basic_block_forward.6} parent=5 // pred_check_branch
      %153 = sbr.rel (%p150) target = $region12
    $region11: #{basic_block_forward.6} parent=5 // pred_region
      %s154 = ssub.s32 %s11, 1
      // Predicated region
      $region13: #{basic_block_forward.6} parent=11 // pred_check
        %p155 = pneg %p70
      $region14: #{basic_block_forward.6} parent=11 // pred_check_branch
        %157 = sbr.rel (%p155) target = $region16
      $region15: #{basic_block_forward.6} parent=11 // pred_region
        _
      $region16: #{basic_block_forward.6} parent=11 // pred_fallthru
        _
    $region12: #{basic_block_forward.6} parent=5 // pred_fallthru
      _
    %p158 = scmp.lt.s32.totalorder %s11, 2
    // Predicated region
    $region17: #{basic_block_forward.6} parent=5 // pred_check
      %p159 = pneg %p158
    $region18: #{basic_block_forward.6} parent=5 // pred_check_branch
      %161 = sbr.rel (%p159) target = $region20
    $region19: #{basic_block_forward.6} parent=5 // pred_region
      // Predicated region
      $region21: #{basic_block_forward.6} parent=19 // pred_check
        %p162 = pneg %p43
      $region22: #{basic_block_forward.6} parent=19 // pred_check_branch
        %164 = sbr.rel (%p162) target = $region24
      $region23: #{basic_block_forward.6} parent=19 // pred_region
        %p165 = scmp.lt.s32.totalorder %s18, 1
        %s166 = scalar_select %p165, %s18, 1
        %s167 = smul.addr %s166, 14
        %s168 = smul.addr %s167, 8
        %s169 = scalar_lea.vmem %s0, %s168
      $region24: #{basic_block_forward.6} parent=19 // pred_fallthru
        _
    $region20: #{basic_block_forward.6} parent=5 // pred_fallthru
      _
    %p170 = scmp.le.s32.totalorder 1, %s11
    %p171 = scmp.lt.s32.totalorder %s11, 3
    %p172 = pnand %p170, %p171
    %p173 = pneg %p172
    // Predicated region
    $region25: #{basic_block_forward.6} parent=5 // pred_check
      _
    $region26: #{basic_block_forward.6} parent=5 // pred_check_branch
      %175 = sbr.rel (%p172) target = $region28
    $region27: #{basic_block_forward.6} parent=5 // pred_region
      %s176 = ssub.s32 %s11, 1
      %p177 = scmp.lt.s32.totalorder %s20, 1
      %s178 = scalar_select %p177, %s20, 1
      %s179 = smul.addr %s178, 14
      %s180 = smul.addr %s179, 8
      %s181 = scalar_lea.vmem %s0, %s180
      %p182 = pneg %p49
      %p183 = pneg %p46
      %p184 = pneg %p70
      %p185 = pneg %p67
      %p186 = pneg %p98
      %p187 = pneg %p95
      %s188 = sadd.s32 %s20, %s21
      %s189 = smul.u32 10, %s188
      %p190 = scmp.lt.s32.totalorder %s189, 19
      %s191 = scalar_select %p190, %s189, 19
      %s192 = smul.addr %s191, 8
      %s193 = scalar_lea.vmem %s2, %s192
      %p194 = pneg %p119
      %p195 = pneg %p116
      %p196 = pneg %p140
      %p197 = pneg %p137
      %p198 = scmp.lt.s32.totalorder %s20, 1
      %s199 = scalar_select %p198, %s20, 1
      %s200 = smul.addr %s199, 14
      %s201 = smul.addr %s200, 8
      %s202 = scalar_lea.vmem %s0, %s201
      %s203 = sadd.s32 %s20, %s21
      %s204 = smul.u32 10, %s203
      %p205 = scmp.lt.s32.totalorder %s204, 19
      %s206 = scalar_select %p205, %s204, 19
      %s207 = smul.addr %s206, 8
      %s208 = scalar_lea.vmem %s2, %s207
      %s209 = sadd.s32 %s20, %s21
      %s210 = smul.u32 10, %s209
      %p211 = scmp.eq.s32.totalorder %s20, 0
      %p212 = scmp.eq.s32.totalorder %s21, 0
      %p213 = pnand %p211, %p212
      %p214 = pneg %p213
      // Predicated region
      $region29: #{basic_block_forward.6} parent=27 // pred_check
        _
      $region30: #{basic_block_forward.6} parent=27 // pred_check_branch
        %216 = sbr.rel (%p213) target = $region32
      $region31: #{basic_block_forward.6} parent=27 // pred_region
        %217 = vst [vmem:[%s3] sm:$0x1] 0.0
        %218 = vst [vmem:[%s4] sm:$0x1] 0.0
      $region32: #{basic_block_forward.6} parent=27 // pred_fallthru
        _
      %v219 = vld [vmem:[%s202] sm:$0xff]
      %v220 = vld [vmem:[%s202 + $0x8] sm:$0xff]
      %v221 = vld [vmem:[%s202 + $0x10] sm:$0xff]
      %v222 = vld [vmem:[%s202 + $0x18] sm:$0xff]
      %v223 = vld [vmem:[%s202 + $0x20] sm:$0xff]
      %v224 = vld [vmem:[%s202 + $0x28] sm:$0xff]
      %v225 = vld [vmem:[%s202 + $0x30] sm:$0xff]
      %v226 = vld [vmem:[%s202 + $0x38] sm:$0xff]
      %v227 = vld [vmem:[%s202 + $0x40] sm:$0xff]
      %v228 = vld [vmem:[%s202 + $0x48] sm:$0xff]
      %v229 = vpack.c.bf16 %v220, %v219
      %v230 = vpack.c.bf16 %v222, %v221
      %v231 = vpack.c.bf16 %v224, %v223
      %v232 = vpack.c.bf16 %v226, %v225
      %v233 = vpack.c.bf16 %v228, %v227
      %v234 = vld [vmem:[%s1] sm:$0xf]
      %v235 = vld [vmem:[%s1 + $0x4] sm:$0xf]
      %v236 = vld [vmem:[%s1 + $0x8] sm:$0xf]
      %v237 = vld [vmem:[%s1 + $0xc] sm:$0xf]
      %v238 = vld [vmem:[%s1 + $0x10] sm:$0xf]
      %v239 = vld [vmem:[%s1 + $0x14] sm:$0xf]
      %v240 = vld [vmem:[%s1 + $0x18] sm:$0xf]
      %v241 = vld [vmem:[%s1 + $0x1c] sm:$0xf]
      %v242 = vld [vmem:[%s1 + $0x20] sm:$0xf]
      %v243 = vld [vmem:[%s1 + $0x24] sm:$0xf]
      %v244 = vld [vmem:[%s1 + $0x28] sm:$0xf]
      %v245 = vld [vmem:[%s1 + $0x2c] sm:$0xf]
      %v246 = vld [vmem:[%s1 + $0x30] sm:$0xf]
      %v247 = vld [vmem:[%s1 + $0x34] sm:$0xf]
      %v248 = vld [vmem:[%s1 + $0x38] sm:$0xf]
      %v249 = vld [vmem:[%s1 + $0x3c] sm:$0xf]
      %v250 = vld [vmem:[%s202 + $0x1] sm:$0xff]
      %v251 = vld [vmem:[%s202 + $0x9] sm:$0xff]
      %v252 = vld [vmem:[%s202 + $0x11] sm:$0xff]
      %v253 = vld [vmem:[%s202 + $0x19] sm:$0xff]
      %v254 = vld [vmem:[%s202 + $0x21] sm:$0xff]
      %v255 = vld [vmem:[%s202 + $0x29] sm:$0xff]
      %v256 = vld [vmem:[%s202 + $0x31] sm:$0xff]
      %v257 = vld [vmem:[%s202 + $0x39] sm:$0xff]
      %v258 = vld [vmem:[%s202 + $0x41] sm:$0xff]
      %v259 = vld [vmem:[%s202 + $0x49] sm:$0xff]
      %v260 = vpack.c.bf16 %v251, %v250
      %v261 = vpack.c.bf16 %v253, %v252
      %v262 = vpack.c.bf16 %v255, %v254
      %v263 = vpack.c.bf16 %v257, %v256
      %v264 = vpack.c.bf16 %v259, %v258
      %s265 = scalar_lea.vmem %s1, 64
      %v266 = vld [vmem:[%s265] sm:$0xf]
      %v267 = vld [vmem:[%s265 + $0x4] sm:$0xf]
      %v268 = vld [vmem:[%s265 + $0x8] sm:$0xf]
      %v269 = vld [vmem:[%s265 + $0xc] sm:$0xf]
      %v270 = vld [vmem:[%s265 + $0x10] sm:$0xf]
      %v271 = vld [vmem:[%s265 + $0x14] sm:$0xf]
      %v272 = vld [vmem:[%s265 + $0x18] sm:$0xf]
      %v273 = vld [vmem:[%s265 + $0x1c] sm:$0xf]
      %v274 = vld [vmem:[%s265 + $0x20] sm:$0xf]
      %v275 = vld [vmem:[%s265 + $0x24] sm:$0xf]
      %v276 = vld [vmem:[%s265 + $0x28] sm:$0xf]
      %v277 = vld [vmem:[%s265 + $0x2c] sm:$0xf]
      %v278 = vld [vmem:[%s265 + $0x30] sm:$0xf]
      %v279 = vld [vmem:[%s265 + $0x34] sm:$0xf]
      %v280 = vld [vmem:[%s265 + $0x38] sm:$0xf]
      %v281 = vld [vmem:[%s265 + $0x3c] sm:$0xf]
      %v298 = vunpack.c.l.b16 %v266
      %v299 = vunpack.c.l.b16 %v267
      %v300 = vunpack.c.l.b16 %v268
      %v301 = vunpack.c.l.b16 %v269
      %v302 = vunpack.c.l.b16 %v270
      %v303 = vunpack.c.l.b16 %v271
      %v304 = vunpack.c.l.b16 %v272
      %v305 = vunpack.c.l.b16 %v273
      %v306 = vunpack.c.l.b16 %v274
      %v307 = vunpack.c.l.b16 %v275
      %v308 = vunpack.c.l.b16 %v276
      %v309 = vunpack.c.l.b16 %v277
      %v310 = vunpack.c.l.b16 %v278
      %v311 = vunpack.c.l.b16 %v279
      %v312 = vunpack.c.l.b16 %v280
      %v313 = vunpack.c.l.b16 %v281
      %v314 = vpack.c.b16 %v299, %v298
      %v315 = vpack.c.b16 %v301, %v300
      %v316 = vpack.c.b16 %v303, %v302
      %v317 = vpack.c.b16 %v305, %v304
      %v318 = vpack.c.b16 %v307, %v306
      %v319 = vpack.c.b16 %v309, %v308
      %v320 = vpack.c.b16 %v311, %v310
      %v321 = vpack.c.b16 %v313, %v312
      %330 = vmatpush.bf16.msra.mxu0 %v321
      %331 = vmatpush.bf16.msra.mxu0 %v320
      %332 = vmatpush.bf16.msra.mxu0 %v319
      %333 = vmatpush.bf16.msra.mxu0 %v318
      %334 = vmatpush.bf16.msra.mxu0 %v317
      %335 = vmatpush.bf16.msra.mxu0 %v316
      %336 = vmatpush.bf16.msra.mxu0 %v315
      %337 = vmatpush.bf16.msra.mxu0 %v314
      %338 = vmatmul.bf16.gmra.mxu0 %v260
      %v339 = vpop.f32.mrf.mxu0
      %v340 = vadd.f32 0.0, %v339
      %v341 = vpop.f32.mrf.mxu0
      %v342 = vadd.f32 0.0, %v341
      %343 = vmatmul.bf16.gmra.mxu0 %v261
      %v344 = vpop.f32.mrf.mxu0
      %v345 = vadd.f32 0.0, %v344
      %v346 = vpop.f32.mrf.mxu0
      %v347 = vadd.f32 0.0, %v346
      %348 = vmatmul.bf16.gmra.mxu0 %v262
      %v349 = vpop.f32.mrf.mxu0
      %v350 = vadd.f32 0.0, %v349
      %v351 = vpop.f32.mrf.mxu0
      %v352 = vadd.f32 0.0, %v351
      %353 = vmatmul.bf16.gmra.mxu0 %v263
      %v354 = vpop.f32.mrf.mxu0
      %v355 = vadd.f32 0.0, %v354
      %v356 = vpop.f32.mrf.mxu0
      %v357 = vadd.f32 0.0, %v356
      %358 = vmatmul.bf16.gmra.mxu0 %v264
      %v359 = vpop.f32.mrf.mxu0
      %v360 = vadd.f32 0.0, %v359
      %v361 = vpop.f32.mrf.mxu0
      %v362 = vadd.f32 0.0, %v361
      %363 = vdwg.mxu0
      %v380 = vunpack.c.l.b16 %v234
      %v381 = vunpack.c.l.b16 %v235
      %v382 = vunpack.c.l.b16 %v236
      %v383 = vunpack.c.l.b16 %v237
      %v384 = vunpack.c.l.b16 %v238
      %v385 = vunpack.c.l.b16 %v239
      %v386 = vunpack.c.l.b16 %v240
      %v387 = vunpack.c.l.b16 %v241
      %v388 = vunpack.c.l.b16 %v242
      %v389 = vunpack.c.l.b16 %v243
      %v390 = vunpack.c.l.b16 %v244
      %v391 = vunpack.c.l.b16 %v245
      %v392 = vunpack.c.l.b16 %v246
      %v393 = vunpack.c.l.b16 %v247
      %v394 = vunpack.c.l.b16 %v248
      %v395 = vunpack.c.l.b16 %v249
      %v396 = vpack.c.b16 %v381, %v380
      %v397 = vpack.c.b16 %v383, %v382
      %v398 = vpack.c.b16 %v385, %v384
      %v399 = vpack.c.b16 %v387, %v386
      %v400 = vpack.c.b16 %v389, %v388
      %v401 = vpack.c.b16 %v391, %v390
      %v402 = vpack.c.b16 %v393, %v392
      %v403 = vpack.c.b16 %v395, %v394
      %412 = vmatpush.bf16.msra.mxu0 %v403
      %413 = vmatpush.bf16.msra.mxu0 %v402
      %414 = vmatpush.bf16.msra.mxu0 %v401
      %415 = vmatpush.bf16.msra.mxu0 %v400
      %416 = vmatpush.bf16.msra.mxu0 %v399
      %417 = vmatpush.bf16.msra.mxu0 %v398
      %418 = vmatpush.bf16.msra.mxu0 %v397
      %419 = vmatpush.bf16.msra.mxu0 %v396
      %420 = vmatmul.bf16.gmra.mxu0 %v229
      %v421 = vpop.f32.mrf.mxu0
      %v422 = vadd.f32 %v340, %v421
      %v423 = vpop.f32.mrf.mxu0
      %v424 = vadd.f32 %v342, %v423
      %425 = vmatmul.bf16.gmra.mxu0 %v230
      %v426 = vpop.f32.mrf.mxu0
      %v427 = vadd.f32 %v345, %v426
      %v428 = vpop.f32.mrf.mxu0
      %v429 = vadd.f32 %v347, %v428
      %430 = vmatmul.bf16.gmra.mxu0 %v231
      %v431 = vpop.f32.mrf.mxu0
      %v432 = vadd.f32 %v350, %v431
      %v433 = vpop.f32.mrf.mxu0
      %v434 = vadd.f32 %v352, %v433
      %435 = vmatmul.bf16.gmra.mxu0 %v232
      %v436 = vpop.f32.mrf.mxu0
      %v437 = vadd.f32 %v355, %v436
      %v438 = vpop.f32.mrf.mxu0
      %v439 = vadd.f32 %v357, %v438
      %440 = vmatmul.bf16.gmra.mxu0 %v233
      %v441 = vpop.f32.mrf.mxu0
      %v442 = vadd.f32 %v360, %v441
      %v443 = vpop.f32.mrf.mxu0
      %v444 = vadd.f32 %v362, %v443
      %445 = vdwg.mxu0
      %v446 = vld [vmem:[%s202 + $0x2] sm:$0xff]
      %v447 = vld [vmem:[%s202 + $0xa] sm:$0xff]
      %v448 = vld [vmem:[%s202 + $0x12] sm:$0xff]
      %v449 = vld [vmem:[%s202 + $0x1a] sm:$0xff]
      %v450 = vld [vmem:[%s202 + $0x22] sm:$0xff]
      %v451 = vld [vmem:[%s202 + $0x2a] sm:$0xff]
      %v452 = vld [vmem:[%s202 + $0x32] sm:$0xff]
      %v453 = vld [vmem:[%s202 + $0x3a] sm:$0xff]
      %v454 = vld [vmem:[%s202 + $0x42] sm:$0xff]
      %v455 = vld [vmem:[%s202 + $0x4a] sm:$0xff]
      %v456 = vpack.c.bf16 %v447, %v446
      %v457 = vpack.c.bf16 %v449, %v448
      %v458 = vpack.c.bf16 %v451, %v450
      %v459 = vpack.c.bf16 %v453, %v452
      %v460 = vpack.c.bf16 %v455, %v454
      %s461 = scalar_lea.vmem %s1, 128
      %v462 = vld [vmem:[%s461] sm:$0xf]
      %v463 = vld [vmem:[%s461 + $0x4] sm:$0xf]
      %v464 = vld [vmem:[%s461 + $0x8] sm:$0xf]
      %v465 = vld [vmem:[%s461 + $0xc] sm:$0xf]
      %v466 = vld [vmem:[%s461 + $0x10] sm:$0xf]
      %v467 = vld [vmem:[%s461 + $0x14] sm:$0xf]
      %v468 = vld [vmem:[%s461 + $0x18] sm:$0xf]
      %v469 = vld [vmem:[%s461 + $0x1c] sm:$0xf]
      %v470 = vld [vmem:[%s461 + $0x20] sm:$0xf]
      %v471 = vld [vmem:[%s461 + $0x24] sm:$0xf]
      %v472 = vld [vmem:[%s461 + $0x28] sm:$0xf]
      %v473 = vld [vmem:[%s461 + $0x2c] sm:$0xf]
      %v474 = vld [vmem:[%s461 + $0x30] sm:$0xf]
      %v475 = vld [vmem:[%s461 + $0x34] sm:$0xf]
      %v476 = vld [vmem:[%s461 + $0x38] sm:$0xf]
      %v477 = vld [vmem:[%s461 + $0x3c] sm:$0xf]
      %v494 = vunpack.c.l.b16 %v462
      %v495 = vunpack.c.l.b16 %v463
      %v496 = vunpack.c.l.b16 %v464
      %v497 = vunpack.c.l.b16 %v465
      %v498 = vunpack.c.l.b16 %v466
      %v499 = vunpack.c.l.b16 %v467
      %v500 = vunpack.c.l.b16 %v468
      %v501 = vunpack.c.l.b16 %v469
      %v502 = vunpack.c.l.b16 %v470
      %v503 = vunpack.c.l.b16 %v471
      %v504 = vunpack.c.l.b16 %v472
      %v505 = vunpack.c.l.b16 %v473
      %v506 = vunpack.c.l.b16 %v474
      %v507 = vunpack.c.l.b16 %v475
      %v508 = vunpack.c.l.b16 %v476
      %v509 = vunpack.c.l.b16 %v477
      %v510 = vpack.c.b16 %v495, %v494
      %v511 = vpack.c.b16 %v497, %v496
      %v512 = vpack.c.b16 %v499, %v498
      %v513 = vpack.c.b16 %v501, %v500
      %v514 = vpack.c.b16 %v503, %v502
      %v515 = vpack.c.b16 %v505, %v504
      %v516 = vpack.c.b16 %v507, %v506
      %v517 = vpack.c.b16 %v509, %v508
      %526 = vmatpush.bf16.msra.mxu0 %v517
      %527 = vmatpush.bf16.msra.mxu0 %v516
      %528 = vmatpush.bf16.msra.mxu0 %v515
      %529 = vmatpush.bf16.msra.mxu0 %v514
      %530 = vmatpush.bf16.msra.mxu0 %v513
      %531 = vmatpush.bf16.msra.mxu0 %v512
      %532 = vmatpush.bf16.msra.mxu0 %v511
      %533 = vmatpush.bf16.msra.mxu0 %v510
      %534 = vmatmul.bf16.gmra.mxu0 %v456
      %v535 = vpop.f32.mrf.mxu0
      %v536 = vadd.f32 0.0, %v535
      %v537 = vpop.f32.mrf.mxu0
      %v538 = vadd.f32 0.0, %v537
      %539 = vmatmul.bf16.gmra.mxu0 %v457
      %v540 = vpop.f32.mrf.mxu0
      %v541 = vadd.f32 0.0, %v540
      %v542 = vpop.f32.mrf.mxu0
      %v543 = vadd.f32 0.0, %v542
      %544 = vmatmul.bf16.gmra.mxu0 %v458
      %v545 = vpop.f32.mrf.mxu0
      %v546 = vadd.f32 0.0, %v545
      %v547 = vpop.f32.mrf.mxu0
      %v548 = vadd.f32 0.0, %v547
      %549 = vmatmul.bf16.gmra.mxu0 %v459
      %v550 = vpop.f32.mrf.mxu0
      %v551 = vadd.f32 0.0, %v550
      %v552 = vpop.f32.mrf.mxu0
      %v553 = vadd.f32 0.0, %v552
      %554 = vmatmul.bf16.gmra.mxu0 %v460
      %v555 = vpop.f32.mrf.mxu0
      %v556 = vadd.f32 0.0, %v555
      %v557 = vpop.f32.mrf.mxu0
      %v558 = vadd.f32 0.0, %v557
      %559 = vdwg.mxu0
      %v560 = vadd.f32 %v422, %v536
      %v561 = vadd.f32 %v424, %v538
      %v562 = vadd.f32 %v427, %v541
      %v563 = vadd.f32 %v429, %v543
      %v564 = vadd.f32 %v432, %v546
      %v565 = vadd.f32 %v434, %v548
      %v566 = vadd.f32 %v437, %v551
      %v567 = vadd.f32 %v439, %v553
      %v568 = vadd.f32 %v442, %v556
      %v569 = vadd.f32 %v444, %v558
      %v570 = vld [vmem:[%s202 + $0xa] sm:$0xff]
      %v571 = vld [vmem:[%s202 + $0x12] sm:$0xff]
      %v572 = vld [vmem:[%s202 + $0x1a] sm:$0xff]
      %v573 = vld [vmem:[%s202 + $0x22] sm:$0xff]
      %v574 = vld [vmem:[%s202 + $0x2a] sm:$0xff]
      %v575 = vld [vmem:[%s202 + $0x32] sm:$0xff]
      %v576 = vld [vmem:[%s202 + $0x3a] sm:$0xff]
      %v577 = vld [vmem:[%s202 + $0x42] sm:$0xff]
      %v578 = vld [vmem:[%s202 + $0x4a] sm:$0xff]
      %v579 = vld [vmem:[%s202 + $0x52] sm:$0xff]
      %v580 = vpack.c.bf16 %v571, %v570
      %v581 = vpack.c.bf16 %v573, %v572
      %v582 = vpack.c.bf16 %v575, %v574
      %v583 = vpack.c.bf16 %v577, %v576
      %v584 = vpack.c.bf16 %v579, %v578
      %s585 = scalar_lea.vmem %s1, 192
      %v586 = vld [vmem:[%s585] sm:$0xf]
      %v587 = vld [vmem:[%s585 + $0x4] sm:$0xf]
      %v588 = vld [vmem:[%s585 + $0x8] sm:$0xf]
      %v589 = vld [vmem:[%s585 + $0xc] sm:$0xf]
      %v590 = vld [vmem:[%s585 + $0x10] sm:$0xf]
      %v591 = vld [vmem:[%s585 + $0x14] sm:$0xf]
      %v592 = vld [vmem:[%s585 + $0x18] sm:$0xf]
      %v593 = vld [vmem:[%s585 + $0x1c] sm:$0xf]
      %v594 = vld [vmem:[%s585 + $0x20] sm:$0xf]
      %v595 = vld [vmem:[%s585 + $0x24] sm:$0xf]
      %v596 = vld [vmem:[%s585 + $0x28] sm:$0xf]
      %v597 = vld [vmem:[%s585 + $0x2c] sm:$0xf]
      %v598 = vld [vmem:[%s585 + $0x30] sm:$0xf]
      %v599 = vld [vmem:[%s585 + $0x34] sm:$0xf]
      %v600 = vld [vmem:[%s585 + $0x38] sm:$0xf]
      %v601 = vld [vmem:[%s585 + $0x3c] sm:$0xf]
      %v618 = vunpack.c.l.b16 %v586
      %v619 = vunpack.c.l.b16 %v587
      %v620 = vunpack.c.l.b16 %v588
      %v621 = vunpack.c.l.b16 %v589
      %v622 = vunpack.c.l.b16 %v590
      %v623 = vunpack.c.l.b16 %v591
      %v624 = vunpack.c.l.b16 %v592
      %v625 = vunpack.c.l.b16 %v593
      %v626 = vunpack.c.l.b16 %v594
      %v627 = vunpack.c.l.b16 %v595
      %v628 = vunpack.c.l.b16 %v596
      %v629 = vunpack.c.l.b16 %v597
      %v630 = vunpack.c.l.b16 %v598
      %v631 = vunpack.c.l.b16 %v599
      %v632 = vunpack.c.l.b16 %v600
      %v633 = vunpack.c.l.b16 %v601
      %v634 = vpack.c.b16 %v619, %v618
      %v635 = vpack.c.b16 %v621, %v620
      %v636 = vpack.c.b16 %v623, %v622
      %v637 = vpack.c.b16 %v625, %v624
      %v638 = vpack.c.b16 %v627, %v626
      %v639 = vpack.c.b16 %v629, %v628
      %v640 = vpack.c.b16 %v631, %v630
      %v641 = vpack.c.b16 %v633, %v632
      %650 = vmatpush.bf16.msra.mxu0 %v641
      %651 = vmatpush.bf16.msra.mxu0 %v640
      %652 = vmatpush.bf16.msra.mxu0 %v639
      %653 = vmatpush.bf16.msra.mxu0 %v638
      %654 = vmatpush.bf16.msra.mxu0 %v637
      %655 = vmatpush.bf16.msra.mxu0 %v636
      %656 = vmatpush.bf16.msra.mxu0 %v635
      %657 = vmatpush.bf16.msra.mxu0 %v634
      %658 = vmatmul.bf16.gmra.mxu0 %v580
      %v659 = vpop.f32.mrf.mxu0
      %v660 = vadd.f32 0.0, %v659
      %v661 = vpop.f32.mrf.mxu0
      %v662 = vadd.f32 0.0, %v661
      %663 = vmatmul.bf16.gmra.mxu0 %v581
      %v664 = vpop.f32.mrf.mxu0
      %v665 = vadd.f32 0.0, %v664
      %v666 = vpop.f32.mrf.mxu0
      %v667 = vadd.f32 0.0, %v666
      %668 = vmatmul.bf16.gmra.mxu0 %v582
      %v669 = vpop.f32.mrf.mxu0
      %v670 = vadd.f32 0.0, %v669
      %v671 = vpop.f32.mrf.mxu0
      %v672 = vadd.f32 0.0, %v671
      %673 = vmatmul.bf16.gmra.mxu0 %v583
      %v674 = vpop.f32.mrf.mxu0
      %v675 = vadd.f32 0.0, %v674
      %v676 = vpop.f32.mrf.mxu0
      %v677 = vadd.f32 0.0, %v676
      %678 = vmatmul.bf16.gmra.mxu0 %v584
      %v679 = vpop.f32.mrf.mxu0
      %v680 = vadd.f32 0.0, %v679
      %v681 = vpop.f32.mrf.mxu0
      %v682 = vadd.f32 0.0, %v681
      %683 = vdwg.mxu0
      %v684 = vadd.f32 %v560, %v660
      %v685 = vadd.f32 %v561, %v662
      %v686 = vadd.f32 %v562, %v665
      %v687 = vadd.f32 %v563, %v667
      %v688 = vadd.f32 %v564, %v670
      %v689 = vadd.f32 %v565, %v672
      %v690 = vadd.f32 %v566, %v675
      %v691 = vadd.f32 %v567, %v677
      %v692 = vadd.f32 %v568, %v680
      %v693 = vadd.f32 %v569, %v682
      %v694 = vld [vmem:[%s202 + $0xb] sm:$0xff]
      %v695 = vld [vmem:[%s202 + $0x13] sm:$0xff]
      %v696 = vld [vmem:[%s202 + $0x1b] sm:$0xff]
      %v697 = vld [vmem:[%s202 + $0x23] sm:$0xff]
      %v698 = vld [vmem:[%s202 + $0x2b] sm:$0xff]
      %v699 = vld [vmem:[%s202 + $0x33] sm:$0xff]
      %v700 = vld [vmem:[%s202 + $0x3b] sm:$0xff]
      %v701 = vld [vmem:[%s202 + $0x43] sm:$0xff]
      %v702 = vld [vmem:[%s202 + $0x4b] sm:$0xff]
      %v703 = vld [vmem:[%s202 + $0x53] sm:$0xff]
      %v704 = vpack.c.bf16 %v695, %v694
      %v705 = vpack.c.bf16 %v697, %v696
      %v706 = vpack.c.bf16 %v699, %v698
      %v707 = vpack.c.bf16 %v701, %v700
      %v708 = vpack.c.bf16 %v703, %v702
      %s709 = scalar_lea.vmem %s1, 256
      %v710 = vld [vmem:[%s709] sm:$0xf]
      %v711 = vld [vmem:[%s709 + $0x4] sm:$0xf]
      %v712 = vld [vmem:[%s709 + $0x8] sm:$0xf]
      %v713 = vld [vmem:[%s709 + $0xc] sm:$0xf]
      %v714 = vld [vmem:[%s709 + $0x10] sm:$0xf]
      %v715 = vld [vmem:[%s709 + $0x14] sm:$0xf]
      %v716 = vld [vmem:[%s709 + $0x18] sm:$0xf]
      %v717 = vld [vmem:[%s709 + $0x1c] sm:$0xf]
      %v718 = vld [vmem:[%s709 + $0x20] sm:$0xf]
      %v719 = vld [vmem:[%s709 + $0x24] sm:$0xf]
      %v720 = vld [vmem:[%s709 + $0x28] sm:$0xf]
      %v721 = vld [vmem:[%s709 + $0x2c] sm:$0xf]
      %v722 = vld [vmem:[%s709 + $0x30] sm:$0xf]
      %v723 = vld [vmem:[%s709 + $0x34] sm:$0xf]
      %v724 = vld [vmem:[%s709 + $0x38] sm:$0xf]
      %v725 = vld [vmem:[%s709 + $0x3c] sm:$0xf]
      %v742 = vunpack.c.l.b16 %v710
      %v743 = vunpack.c.l.b16 %v711
      %v744 = vunpack.c.l.b16 %v712
      %v745 = vunpack.c.l.b16 %v713
      %v746 = vunpack.c.l.b16 %v714
      %v747 = vunpack.c.l.b16 %v715
      %v748 = vunpack.c.l.b16 %v716
      %v749 = vunpack.c.l.b16 %v717
      %v750 = vunpack.c.l.b16 %v718
      %v751 = vunpack.c.l.b16 %v719
      %v752 = vunpack.c.l.b16 %v720
      %v753 = vunpack.c.l.b16 %v721
      %v754 = vunpack.c.l.b16 %v722
      %v755 = vunpack.c.l.b16 %v723
      %v756 = vunpack.c.l.b16 %v724
      %v757 = vunpack.c.l.b16 %v725
      %v758 = vpack.c.b16 %v743, %v742
      %v759 = vpack.c.b16 %v745, %v744
      %v760 = vpack.c.b16 %v747, %v746
      %v761 = vpack.c.b16 %v749, %v748
      %v762 = vpack.c.b16 %v751, %v750
      %v763 = vpack.c.b16 %v753, %v752
      %v764 = vpack.c.b16 %v755, %v754
      %v765 = vpack.c.b16 %v757, %v756
      %774 = vmatpush.bf16.msra.mxu0 %v765
      %775 = vmatpush.bf16.msra.mxu0 %v764
      %776 = vmatpush.bf16.msra.mxu0 %v763
      %777 = vmatpush.bf16.msra.mxu0 %v762
      %778 = vmatpush.bf16.msra.mxu0 %v761
      %779 = vmatpush.bf16.msra.mxu0 %v760
      %780 = vmatpush.bf16.msra.mxu0 %v759
      %781 = vmatpush.bf16.msra.mxu0 %v758
      %782 = vmatmul.bf16.gmra.mxu0 %v704
      %v783 = vpop.f32.mrf.mxu0
      %v784 = vadd.f32 0.0, %v783
      %v785 = vpop.f32.mrf.mxu0
      %v786 = vadd.f32 0.0, %v785
      %787 = vmatmul.bf16.gmra.mxu0 %v705
      %v788 = vpop.f32.mrf.mxu0
      %v789 = vadd.f32 0.0, %v788
      %v790 = vpop.f32.mrf.mxu0
      %v791 = vadd.f32 0.0, %v790
      %792 = vmatmul.bf16.gmra.mxu0 %v706
      %v793 = vpop.f32.mrf.mxu0
      %v794 = vadd.f32 0.0, %v793
      %v795 = vpop.f32.mrf.mxu0
      %v796 = vadd.f32 0.0, %v795
      %797 = vmatmul.bf16.gmra.mxu0 %v707
      %v798 = vpop.f32.mrf.mxu0
      %v799 = vadd.f32 0.0, %v798
      %v800 = vpop.f32.mrf.mxu0
      %v801 = vadd.f32 0.0, %v800
      %802 = vmatmul.bf16.gmra.mxu0 %v708
      %v803 = vpop.f32.mrf.mxu0
      %v804 = vadd.f32 0.0, %v803
      %v805 = vpop.f32.mrf.mxu0
      %v806 = vadd.f32 0.0, %v805
      %807 = vdwg.mxu0
      %v808 = vadd.f32 %v684, %v784
      %v809 = vadd.f32 %v685, %v786
      %v810 = vadd.f32 %v686, %v789
      %v811 = vadd.f32 %v687, %v791
      %v812 = vadd.f32 %v688, %v794
      %v813 = vadd.f32 %v689, %v796
      %v814 = vadd.f32 %v690, %v799
      %v815 = vadd.f32 %v691, %v801
      %v816 = vadd.f32 %v692, %v804
      %v817 = vadd.f32 %v693, %v806
      %v818 = vld [vmem:[%s202 + $0xc] sm:$0xff]
      %v819 = vld [vmem:[%s202 + $0x14] sm:$0xff]
      %v820 = vld [vmem:[%s202 + $0x1c] sm:$0xff]
      %v821 = vld [vmem:[%s202 + $0x24] sm:$0xff]
      %v822 = vld [vmem:[%s202 + $0x2c] sm:$0xff]
      %v823 = vld [vmem:[%s202 + $0x34] sm:$0xff]
      %v824 = vld [vmem:[%s202 + $0x3c] sm:$0xff]
      %v825 = vld [vmem:[%s202 + $0x44] sm:$0xff]
      %v826 = vld [vmem:[%s202 + $0x4c] sm:$0xff]
      %v827 = vld [vmem:[%s202 + $0x54] sm:$0xff]
      %v828 = vpack.c.bf16 %v819, %v818
      %v829 = vpack.c.bf16 %v821, %v820
      %v830 = vpack.c.bf16 %v823, %v822
      %v831 = vpack.c.bf16 %v825, %v824
      %v832 = vpack.c.bf16 %v827, %v826
      %s833 = scalar_lea.vmem %s1, 320
      %v834 = vld [vmem:[%s833] sm:$0xf]
      %v835 = vld [vmem:[%s833 + $0x4] sm:$0xf]
      %v836 = vld [vmem:[%s833 + $0x8] sm:$0xf]
      %v837 = vld [vmem:[%s833 + $0xc] sm:$0xf]
      %v838 = vld [vmem:[%s833 + $0x10] sm:$0xf]
      %v839 = vld [vmem:[%s833 + $0x14] sm:$0xf]
      %v840 = vld [vmem:[%s833 + $0x18] sm:$0xf]
      %v841 = vld [vmem:[%s833 + $0x1c] sm:$0xf]
      %v842 = vld [vmem:[%s833 + $0x20] sm:$0xf]
      %v843 = vld [vmem:[%s833 + $0x24] sm:$0xf]
      %v844 = vld [vmem:[%s833 + $0x28] sm:$0xf]
      %v845 = vld [vmem:[%s833 + $0x2c] sm:$0xf]
      %v846 = vld [vmem:[%s833 + $0x30] sm:$0xf]
      %v847 = vld [vmem:[%s833 + $0x34] sm:$0xf]
      %v848 = vld [vmem:[%s833 + $0x38] sm:$0xf]
      %v849 = vld [vmem:[%s833 + $0x3c] sm:$0xf]
      %v866 = vunpack.c.l.b16 %v834
      %v867 = vunpack.c.l.b16 %v835
      %v868 = vunpack.c.l.b16 %v836
      %v869 = vunpack.c.l.b16 %v837
      %v870 = vunpack.c.l.b16 %v838
      %v871 = vunpack.c.l.b16 %v839
      %v872 = vunpack.c.l.b16 %v840
      %v873 = vunpack.c.l.b16 %v841
      %v874 = vunpack.c.l.b16 %v842
      %v875 = vunpack.c.l.b16 %v843
      %v876 = vunpack.c.l.b16 %v844
      %v877 = vunpack.c.l.b16 %v845
      %v878 = vunpack.c.l.b16 %v846
      %v879 = vunpack.c.l.b16 %v847
      %v880 = vunpack.c.l.b16 %v848
      %v881 = vunpack.c.l.b16 %v849
      %v882 = vpack.c.b16 %v867, %v866
      %v883 = vpack.c.b16 %v869, %v868
      %v884 = vpack.c.b16 %v871, %v870
      %v885 = vpack.c.b16 %v873, %v872
      %v886 = vpack.c.b16 %v875, %v874
      %v887 = vpack.c.b16 %v877, %v876
      %v888 = vpack.c.b16 %v879, %v878
      %v889 = vpack.c.b16 %v881, %v880
      %898 = vmatpush.bf16.msra.mxu0 %v889
      %899 = vmatpush.bf16.msra.mxu0 %v888
      %900 = vmatpush.bf16.msra.mxu0 %v887
      %901 = vmatpush.bf16.msra.mxu0 %v886
      %902 = vmatpush.bf16.msra.mxu0 %v885
      %903 = vmatpush.bf16.msra.mxu0 %v884
      %904 = vmatpush.bf16.msra.mxu0 %v883
      %905 = vmatpush.bf16.msra.mxu0 %v882
      %906 = vmatmul.bf16.gmra.mxu0 %v828
      %v907 = vpop.f32.mrf.mxu0
      %v908 = vadd.f32 0.0, %v907
      %v909 = vpop.f32.mrf.mxu0
      %v910 = vadd.f32 0.0, %v909
      %911 = vmatmul.bf16.gmra.mxu0 %v829
      %v912 = vpop.f32.mrf.mxu0
      %v913 = vadd.f32 0.0, %v912
      %v914 = vpop.f32.mrf.mxu0
      %v915 = vadd.f32 0.0, %v914
      %916 = vmatmul.bf16.gmra.mxu0 %v830
      %v917 = vpop.f32.mrf.mxu0
      %v918 = vadd.f32 0.0, %v917
      %v919 = vpop.f32.mrf.mxu0
      %v920 = vadd.f32 0.0, %v919
      %921 = vmatmul.bf16.gmra.mxu0 %v831
      %v922 = vpop.f32.mrf.mxu0
      %v923 = vadd.f32 0.0, %v922
      %v924 = vpop.f32.mrf.mxu0
      %v925 = vadd.f32 0.0, %v924
      %926 = vmatmul.bf16.gmra.mxu0 %v832
      %v927 = vpop.f32.mrf.mxu0
      %v928 = vadd.f32 0.0, %v927
      %v929 = vpop.f32.mrf.mxu0
      %v930 = vadd.f32 0.0, %v929
      %931 = vdwg.mxu0
      %v932 = vadd.f32 %v808, %v908
      %v933 = vadd.f32 %v809, %v910
      %v934 = vadd.f32 %v810, %v913
      %v935 = vadd.f32 %v811, %v915
      %v936 = vadd.f32 %v812, %v918
      %v937 = vadd.f32 %v813, %v920
      %v938 = vadd.f32 %v814, %v923
      %v939 = vadd.f32 %v815, %v925
      %v940 = vadd.f32 %v816, %v928
      %v941 = vadd.f32 %v817, %v930
      %v942 = vld [vmem:[%s202 + $0x14] sm:$0xff]
      %v943 = vld [vmem:[%s202 + $0x1c] sm:$0xff]
      %v944 = vld [vmem:[%s202 + $0x24] sm:$0xff]
      %v945 = vld [vmem:[%s202 + $0x2c] sm:$0xff]
      %v946 = vld [vmem:[%s202 + $0x34] sm:$0xff]
      %v947 = vld [vmem:[%s202 + $0x3c] sm:$0xff]
      %v948 = vld [vmem:[%s202 + $0x44] sm:$0xff]
      %v949 = vld [vmem:[%s202 + $0x4c] sm:$0xff]
      %v950 = vld [vmem:[%s202 + $0x54] sm:$0xff]
      %v951 = vld [vmem:[%s202 + $0x5c] sm:$0xff]
      %v952 = vpack.c.bf16 %v943, %v942
      %v953 = vpack.c.bf16 %v945, %v944
      %v954 = vpack.c.bf16 %v947, %v946
      %v955 = vpack.c.bf16 %v949, %v948
      %v956 = vpack.c.bf16 %v951, %v950
      %s957 = scalar_lea.vmem %s1, 384
      %v958 = vld [vmem:[%s957] sm:$0xf]
      %v959 = vld [vmem:[%s957 + $0x4] sm:$0xf]
      %v960 = vld [vmem:[%s957 + $0x8] sm:$0xf]
      %v961 = vld [vmem:[%s957 + $0xc] sm:$0xf]
      %v962 = vld [vmem:[%s957 + $0x10] sm:$0xf]
      %v963 = vld [vmem:[%s957 + $0x14] sm:$0xf]
      %v964 = vld [vmem:[%s957 + $0x18] sm:$0xf]
      %v965 = vld [vmem:[%s957 + $0x1c] sm:$0xf]
      %v966 = vld [vmem:[%s957 + $0x20] sm:$0xf]
      %v967 = vld [vmem:[%s957 + $0x24] sm:$0xf]
      %v968 = vld [vmem:[%s957 + $0x28] sm:$0xf]
      %v969 = vld [vmem:[%s957 + $0x2c] sm:$0xf]
      %v970 = vld [vmem:[%s957 + $0x30] sm:$0xf]
      %v971 = vld [vmem:[%s957 + $0x34] sm:$0xf]
      %v972 = vld [vmem:[%s957 + $0x38] sm:$0xf]
      %v973 = vld [vmem:[%s957 + $0x3c] sm:$0xf]
      %v990 = vunpack.c.l.b16 %v958
      %v991 = vunpack.c.l.b16 %v959
      %v992 = vunpack.c.l.b16 %v960
      %v993 = vunpack.c.l.b16 %v961
      %v994 = vunpack.c.l.b16 %v962
      %v995 = vunpack.c.l.b16 %v963
      %v996 = vunpack.c.l.b16 %v964
      %v997 = vunpack.c.l.b16 %v965
      %v998 = vunpack.c.l.b16 %v966
      %v999 = vunpack.c.l.b16 %v967
      %v1000 = vunpack.c.l.b16 %v968
      %v1001 = vunpack.c.l.b16 %v969
      %v1002 = vunpack.c.l.b16 %v970
      %v1003 = vunpack.c.l.b16 %v971
      %v1004 = vunpack.c.l.b16 %v972
      %v1005 = vunpack.c.l.b16 %v973
      %v1006 = vpack.c.b16 %v991, %v990
      %v1007 = vpack.c.b16 %v993, %v992
      %v1008 = vpack.c.b16 %v995, %v994
      %v1009 = vpack.c.b16 %v997, %v996
      %v1010 = vpack.c.b16 %v999, %v998
      %v1011 = vpack.c.b16 %v1001, %v1000
      %v1012 = vpack.c.b16 %v1003, %v1002
      %v1013 = vpack.c.b16 %v1005, %v1004
      %1022 = vmatpush.bf16.msra.mxu0 %v1013
      %1023 = vmatpush.bf16.msra.mxu0 %v1012
      %1024 = vmatpush.bf16.msra.mxu0 %v1011
      %1025 = vmatpush.bf16.msra.mxu0 %v1010
      %1026 = vmatpush.bf16.msra.mxu0 %v1009
      %1027 = vmatpush.bf16.msra.mxu0 %v1008
      %1028 = vmatpush.bf16.msra.mxu0 %v1007
      %1029 = vmatpush.bf16.msra.mxu0 %v1006
      %1030 = vmatmul.bf16.gmra.mxu0 %v952
      %v1031 = vpop.f32.mrf.mxu0
      %v1032 = vadd.f32 0.0, %v1031
      %v1033 = vpop.f32.mrf.mxu0
      %v1034 = vadd.f32 0.0, %v1033
      %1035 = vmatmul.bf16.gmra.mxu0 %v953
      %v1036 = vpop.f32.mrf.mxu0
      %v1037 = vadd.f32 0.0, %v1036
      %v1038 = vpop.f32.mrf.mxu0
      %v1039 = vadd.f32 0.0, %v1038
      %1040 = vmatmul.bf16.gmra.mxu0 %v954
      %v1041 = vpop.f32.mrf.mxu0
      %v1042 = vadd.f32 0.0, %v1041
      %v1043 = vpop.f32.mrf.mxu0
      %v1044 = vadd.f32 0.0, %v1043
      %1045 = vmatmul.bf16.gmra.mxu0 %v955
      %v1046 = vpop.f32.mrf.mxu0
      %v1047 = vadd.f32 0.0, %v1046
      %v1048 = vpop.f32.mrf.mxu0
      %v1049 = vadd.f32 0.0, %v1048
      %1050 = vmatmul.bf16.gmra.mxu0 %v956
      %v1051 = vpop.f32.mrf.mxu0
      %v1052 = vadd.f32 0.0, %v1051
      %v1053 = vpop.f32.mrf.mxu0
      %v1054 = vadd.f32 0.0, %v1053
      %1055 = vdwg.mxu0
      %v1056 = vadd.f32 %v932, %v1032
      %v1057 = vadd.f32 %v933, %v1034
      %v1058 = vadd.f32 %v934, %v1037
      %v1059 = vadd.f32 %v935, %v1039
      %v1060 = vadd.f32 %v936, %v1042
      %v1061 = vadd.f32 %v937, %v1044
      %v1062 = vadd.f32 %v938, %v1047
      %v1063 = vadd.f32 %v939, %v1049
      %v1064 = vadd.f32 %v940, %v1052
      %v1065 = vadd.f32 %v941, %v1054
      %v1066 = vld [vmem:[%s202 + $0x15] sm:$0xff]
      %v1067 = vld [vmem:[%s202 + $0x1d] sm:$0xff]
      %v1068 = vld [vmem:[%s202 + $0x25] sm:$0xff]
      %v1069 = vld [vmem:[%s202 + $0x2d] sm:$0xff]
      %v1070 = vld [vmem:[%s202 + $0x35] sm:$0xff]
      %v1071 = vld [vmem:[%s202 + $0x3d] sm:$0xff]
      %v1072 = vld [vmem:[%s202 + $0x45] sm:$0xff]
      %v1073 = vld [vmem:[%s202 + $0x4d] sm:$0xff]
      %v1074 = vld [vmem:[%s202 + $0x55] sm:$0xff]
      %v1075 = vld [vmem:[%s202 + $0x5d] sm:$0xff]
      %v1076 = vpack.c.bf16 %v1067, %v1066
      %v1077 = vpack.c.bf16 %v1069, %v1068
      %v1078 = vpack.c.bf16 %v1071, %v1070
      %v1079 = vpack.c.bf16 %v1073, %v1072
      %v1080 = vpack.c.bf16 %v1075, %v1074
      %s1081 = scalar_lea.vmem %s1, 448
      %v1082 = vld [vmem:[%s1081] sm:$0xf]
      %v1083 = vld [vmem:[%s1081 + $0x4] sm:$0xf]
      %v1084 = vld [vmem:[%s1081 + $0x8] sm:$0xf]
      %v1085 = vld [vmem:[%s1081 + $0xc] sm:$0xf]
      %v1086 = vld [vmem:[%s1081 + $0x10] sm:$0xf]
      %v1087 = vld [vmem:[%s1081 + $0x14] sm:$0xf]
      %v1088 = vld [vmem:[%s1081 + $0x18] sm:$0xf]
      %v1089 = vld [vmem:[%s1081 + $0x1c] sm:$0xf]
      %v1090 = vld [vmem:[%s1081 + $0x20] sm:$0xf]
      %v1091 = vld [vmem:[%s1081 + $0x24] sm:$0xf]
      %v1092 = vld [vmem:[%s1081 + $0x28] sm:$0xf]
      %v1093 = vld [vmem:[%s1081 + $0x2c] sm:$0xf]
      %v1094 = vld [vmem:[%s1081 + $0x30] sm:$0xf]
      %v1095 = vld [vmem:[%s1081 + $0x34] sm:$0xf]
      %v1096 = vld [vmem:[%s1081 + $0x38] sm:$0xf]
      %v1097 = vld [vmem:[%s1081 + $0x3c] sm:$0xf]
      %v1114 = vunpack.c.l.b16 %v1082
      %v1115 = vunpack.c.l.b16 %v1083
      %v1116 = vunpack.c.l.b16 %v1084
      %v1117 = vunpack.c.l.b16 %v1085
      %v1118 = vunpack.c.l.b16 %v1086
      %v1119 = vunpack.c.l.b16 %v1087
      %v1120 = vunpack.c.l.b16 %v1088
      %v1121 = vunpack.c.l.b16 %v1089
      %v1122 = vunpack.c.l.b16 %v1090
      %v1123 = vunpack.c.l.b16 %v1091
      %v1124 = vunpack.c.l.b16 %v1092
      %v1125 = vunpack.c.l.b16 %v1093
      %v1126 = vunpack.c.l.b16 %v1094
      %v1127 = vunpack.c.l.b16 %v1095
      %v1128 = vunpack.c.l.b16 %v1096
      %v1129 = vunpack.c.l.b16 %v1097
      %v1130 = vpack.c.b16 %v1115, %v1114
      %v1131 = vpack.c.b16 %v1117, %v1116
      %v1132 = vpack.c.b16 %v1119, %v1118
      %v1133 = vpack.c.b16 %v1121, %v1120
      %v1134 = vpack.c.b16 %v1123, %v1122
      %v1135 = vpack.c.b16 %v1125, %v1124
      %v1136 = vpack.c.b16 %v1127, %v1126
      %v1137 = vpack.c.b16 %v1129, %v1128
      %1146 = vmatpush.bf16.msra.mxu0 %v1137
      %1147 = vmatpush.bf16.msra.mxu0 %v1136
      %1148 = vmatpush.bf16.msra.mxu0 %v1135
      %1149 = vmatpush.bf16.msra.mxu0 %v1134
      %1150 = vmatpush.bf16.msra.mxu0 %v1133
      %1151 = vmatpush.bf16.msra.mxu0 %v1132
      %1152 = vmatpush.bf16.msra.mxu0 %v1131
      %1153 = vmatpush.bf16.msra.mxu0 %v1130
      %1154 = vmatmul.bf16.gmra.mxu0 %v1076
      %v1155 = vpop.f32.mrf.mxu0
      %v1156 = vadd.f32 0.0, %v1155
      %v1157 = vpop.f32.mrf.mxu0
      %v1158 = vadd.f32 0.0, %v1157
      %1159 = vmatmul.bf16.gmra.mxu0 %v1077
      %v1160 = vpop.f32.mrf.mxu0
      %v1161 = vadd.f32 0.0, %v1160
      %v1162 = vpop.f32.mrf.mxu0
      %v1163 = vadd.f32 0.0, %v1162
      %1164 = vmatmul.bf16.gmra.mxu0 %v1078
      %v1165 = vpop.f32.mrf.mxu0
      %v1166 = vadd.f32 0.0, %v1165
      %v1167 = vpop.f32.mrf.mxu0
      %v1168 = vadd.f32 0.0, %v1167
      %1169 = vmatmul.bf16.gmra.mxu0 %v1079
      %v1170 = vpop.f32.mrf.mxu0
      %v1171 = vadd.f32 0.0, %v1170
      %v1172 = vpop.f32.mrf.mxu0
      %v1173 = vadd.f32 0.0, %v1172
      %1174 = vmatmul.bf16.gmra.mxu0 %v1080
      %v1175 = vpop.f32.mrf.mxu0
      %v1176 = vadd.f32 0.0, %v1175
      %v1177 = vpop.f32.mrf.mxu0
      %v1178 = vadd.f32 0.0, %v1177
      %1179 = vdwg.mxu0
      %v1180 = vadd.f32 %v1056, %v1156
      %v1181 = vadd.f32 %v1057, %v1158
      %v1182 = vadd.f32 %v1058, %v1161
      %v1183 = vadd.f32 %v1059, %v1163
      %v1184 = vadd.f32 %v1060, %v1166
      %v1185 = vadd.f32 %v1061, %v1168
      %v1186 = vadd.f32 %v1062, %v1171
      %v1187 = vadd.f32 %v1063, %v1173
      %v1188 = vadd.f32 %v1064, %v1176
      %v1189 = vadd.f32 %v1065, %v1178
      %v1190 = vld [vmem:[%s202 + $0x16] sm:$0xff]
      %v1191 = vld [vmem:[%s202 + $0x1e] sm:$0xff]
      %v1192 = vld [vmem:[%s202 + $0x26] sm:$0xff]
      %v1193 = vld [vmem:[%s202 + $0x2e] sm:$0xff]
      %v1194 = vld [vmem:[%s202 + $0x36] sm:$0xff]
      %v1195 = vld [vmem:[%s202 + $0x3e] sm:$0xff]
      %v1196 = vld [vmem:[%s202 + $0x46] sm:$0xff]
      %v1197 = vld [vmem:[%s202 + $0x4e] sm:$0xff]
      %v1198 = vld [vmem:[%s202 + $0x56] sm:$0xff]
      %v1199 = vld [vmem:[%s202 + $0x5e] sm:$0xff]
      %v1200 = vpack.c.bf16 %v1191, %v1190
      %v1201 = vpack.c.bf16 %v1193, %v1192
      %v1202 = vpack.c.bf16 %v1195, %v1194
      %v1203 = vpack.c.bf16 %v1197, %v1196
      %v1204 = vpack.c.bf16 %v1199, %v1198
      %s1205 = scalar_lea.vmem %s1, 512
      %v1206 = vld [vmem:[%s1205] sm:$0xf]
      %v1207 = vld [vmem:[%s1205 + $0x4] sm:$0xf]
      %v1208 = vld [vmem:[%s1205 + $0x8] sm:$0xf]
      %v1209 = vld [vmem:[%s1205 + $0xc] sm:$0xf]
      %v1210 = vld [vmem:[%s1205 + $0x10] sm:$0xf]
      %v1211 = vld [vmem:[%s1205 + $0x14] sm:$0xf]
      %v1212 = vld [vmem:[%s1205 + $0x18] sm:$0xf]
      %v1213 = vld [vmem:[%s1205 + $0x1c] sm:$0xf]
      %v1214 = vld [vmem:[%s1205 + $0x20] sm:$0xf]
      %v1215 = vld [vmem:[%s1205 + $0x24] sm:$0xf]
      %v1216 = vld [vmem:[%s1205 + $0x28] sm:$0xf]
      %v1217 = vld [vmem:[%s1205 + $0x2c] sm:$0xf]
      %v1218 = vld [vmem:[%s1205 + $0x30] sm:$0xf]
      %v1219 = vld [vmem:[%s1205 + $0x34] sm:$0xf]
      %v1220 = vld [vmem:[%s1205 + $0x38] sm:$0xf]
      %v1221 = vld [vmem:[%s1205 + $0x3c] sm:$0xf]
      %v1238 = vunpack.c.l.b16 %v1206
      %v1239 = vunpack.c.l.b16 %v1207
      %v1240 = vunpack.c.l.b16 %v1208
      %v1241 = vunpack.c.l.b16 %v1209
      %v1242 = vunpack.c.l.b16 %v1210
      %v1243 = vunpack.c.l.b16 %v1211
      %v1244 = vunpack.c.l.b16 %v1212
      %v1245 = vunpack.c.l.b16 %v1213
      %v1246 = vunpack.c.l.b16 %v1214
      %v1247 = vunpack.c.l.b16 %v1215
      %v1248 = vunpack.c.l.b16 %v1216
      %v1249 = vunpack.c.l.b16 %v1217
      %v1250 = vunpack.c.l.b16 %v1218
      %v1251 = vunpack.c.l.b16 %v1219
      %v1252 = vunpack.c.l.b16 %v1220
      %v1253 = vunpack.c.l.b16 %v1221
      %v1254 = vpack.c.b16 %v1239, %v1238
      %v1255 = vpack.c.b16 %v1241, %v1240
      %v1256 = vpack.c.b16 %v1243, %v1242
      %v1257 = vpack.c.b16 %v1245, %v1244
      %v1258 = vpack.c.b16 %v1247, %v1246
      %v1259 = vpack.c.b16 %v1249, %v1248
      %v1260 = vpack.c.b16 %v1251, %v1250
      %v1261 = vpack.c.b16 %v1253, %v1252
      %1270 = vmatpush.bf16.msra.mxu0 %v1261
      %1271 = vmatpush.bf16.msra.mxu0 %v1260
      %1272 = vmatpush.bf16.msra.mxu0 %v1259
      %1273 = vmatpush.bf16.msra.mxu0 %v1258
      %1274 = vmatpush.bf16.msra.mxu0 %v1257
      %1275 = vmatpush.bf16.msra.mxu0 %v1256
      %1276 = vmatpush.bf16.msra.mxu0 %v1255
      %1277 = vmatpush.bf16.msra.mxu0 %v1254
      %1278 = vmatmul.bf16.gmra.mxu0 %v1200
      %v1279 = vpop.f32.mrf.mxu0
      %v1280 = vadd.f32 0.0, %v1279
      %v1281 = vpop.f32.mrf.mxu0
      %v1282 = vadd.f32 0.0, %v1281
      %1283 = vmatmul.bf16.gmra.mxu0 %v1201
      %v1284 = vpop.f32.mrf.mxu0
      %v1285 = vadd.f32 0.0, %v1284
      %v1286 = vpop.f32.mrf.mxu0
      %v1287 = vadd.f32 0.0, %v1286
      %1288 = vmatmul.bf16.gmra.mxu0 %v1202
      %v1289 = vpop.f32.mrf.mxu0
      %v1290 = vadd.f32 0.0, %v1289
      %v1291 = vpop.f32.mrf.mxu0
      %v1292 = vadd.f32 0.0, %v1291
      %1293 = vmatmul.bf16.gmra.mxu0 %v1203
      %v1294 = vpop.f32.mrf.mxu0
      %v1295 = vadd.f32 0.0, %v1294
      %v1296 = vpop.f32.mrf.mxu0
      %v1297 = vadd.f32 0.0, %v1296
      %1298 = vmatmul.bf16.gmra.mxu0 %v1204
      %v1299 = vpop.f32.mrf.mxu0
      %v1300 = vadd.f32 0.0, %v1299
      %v1301 = vpop.f32.mrf.mxu0
      %v1302 = vadd.f32 0.0, %v1301
      %1303 = vdwg.mxu0
      %v1304 = vadd.f32 %v1180, %v1280
      %v1305 = vadd.f32 %v1181, %v1282
      %v1306 = vadd.f32 %v1182, %v1285
      %v1307 = vadd.f32 %v1183, %v1287
      %v1308 = vadd.f32 %v1184, %v1290
      %v1309 = vadd.f32 %v1185, %v1292
      %v1310 = vadd.f32 %v1186, %v1295
      %v1311 = vadd.f32 %v1187, %v1297
      %v1312 = vadd.f32 %v1188, %v1300
      %v1313 = vadd.f32 %v1189, %v1302
      %1314 = vst [vmem:[%s208] sm:$0xff] %v1304
      %1315 = vst [vmem:[%s208 + $0x8] sm:$0xff] %v1305
      %1316 = vst [vmem:[%s208 + $0x10] sm:$0xff] %v1306
      %1317 = vst [vmem:[%s208 + $0x18] sm:$0xff] %v1307
      %1318 = vst [vmem:[%s208 + $0x20] sm:$0xff] %v1308
      %1319 = vst [vmem:[%s208 + $0x28] sm:$0xff] %v1309
      %1320 = vst [vmem:[%s208 + $0x30] sm:$0xff] %v1310
      %1321 = vst [vmem:[%s208 + $0x38] sm:$0xff] %v1311
      %1322 = vst [vmem:[%s208 + $0x40] sm:$0xff] %v1312
      %1323 = vst [vmem:[%s208 + $0x48] sm:$0xff] %v1313
      %v1324 = vlaneseq
      %v1325 = vshrl.u32 %v1324, 7
      %v1326 = vadd.s32 %v1325, 8
      %v1327 = vadd.s32 %v1325, 16
      %v1328 = vadd.s32 %v1325, 24
      %v1329 = vadd.s32 %v1325, 32
      %v1330 = vadd.s32 %v1325, 40
      %v1331 = vadd.s32 %v1325, 48
      %v1332 = vadd.s32 %v1325, 56
      %v1333 = vadd.s32 %v1325, 64
      %v1334 = vadd.s32 %v1325, 72
      %vm1335 = vcmp.lt.s32.totalorder %v1325, 0
      %v1336 = vsub.s32 0, %v1325
      %v1337 = vsel %vm1335, %v1336, %v1325
      %v1338 = vand.u32 %v1337, 65535
      %v1339 = vshrl.u32 %v1337, 16
      %v1341 = vmul.u32 %v1338, 52429
      %v1342 = vmul.u32 %v1338, 52428
      %v1343 = vmul.u32 %v1339, 52429
      %v1344 = vmul.u32 %v1339, 52428
      %v1345 = vshll.u32 %v1342, 16
      %v1346 = vshrl.u32 %v1342, 16
      %v1347 = vshll.u32 %v1343, 16
      %v1348 = vshrl.u32 %v1343, 16
      %vm1349 = vc.u32 %v1341, %v1345
      %v1350 = vsel %vm1349, 1, 0
      %v1351 = vadd.s32 %v1341, %v1345
      %v1352 = vadd.s32 %v1344, %v1350
      %vm1353 = vc.u32 %v1351, %v1347
      %v1354 = vsel %vm1353, 1, 0
      %v1355 = vadd.s32 %v1351, %v1347
      %v1356 = vadd.s32 %v1352, %v1354
      %v1357 = vadd.s32 %v1356, %v1346
      %v1358 = vadd.s32 %v1357, %v1348
      %v1359 = vshrl.u32 %v1358, 3
      %v1360 = vmul.u32 %v1359, 10
      %v1361 = vsub.s32 %v1337, %v1360
      %v1362 = vsub.s32 0, %v1361
      %v1363 = vsel %vm1335, %v1362, %v1361
      %vm1364 = vcmp.lt.s32.totalorder %v1326, 0
      %v1365 = vsub.s32 0, %v1326
      %v1366 = vsel %vm1364, %v1365, %v1326
      %v1367 = vand.u32 %v1366, 65535
      %v1368 = vshrl.u32 %v1366, 16
      %v1370 = vmul.u32 %v1367, 52429
      %v1371 = vmul.u32 %v1367, 52428
      %v1372 = vmul.u32 %v1368, 52429
      %v1373 = vmul.u32 %v1368, 52428
      %v1374 = vshll.u32 %v1371, 16
      %v1375 = vshrl.u32 %v1371, 16
      %v1376 = vshll.u32 %v1372, 16
      %v1377 = vshrl.u32 %v1372, 16
      %vm1378 = vc.u32 %v1370, %v1374
      %v1379 = vsel %vm1378, 1, 0
      %v1380 = vadd.s32 %v1370, %v1374
      %v1381 = vadd.s32 %v1373, %v1379
      %vm1382 = vc.u32 %v1380, %v1376
      %v1383 = vsel %vm1382, 1, 0
      %v1384 = vadd.s32 %v1380, %v1376
      %v1385 = vadd.s32 %v1381, %v1383
      %v1386 = vadd.s32 %v1385, %v1375
      %v1387 = vadd.s32 %v1386, %v1377
      %v1388 = vshrl.u32 %v1387, 3
      %v1389 = vmul.u32 %v1388, 10
      %v1390 = vsub.s32 %v1366, %v1389
      %v1391 = vsub.s32 0, %v1390
      %v1392 = vsel %vm1364, %v1391, %v1390
      %vm1393 = vcmp.lt.s32.totalorder %v1327, 0
      %v1394 = vsub.s32 0, %v1327
      %v1395 = vsel %vm1393, %v1394, %v1327
      %v1396 = vand.u32 %v1395, 65535
      %v1397 = vshrl.u32 %v1395, 16
      %v1399 = vmul.u32 %v1396, 52429
      %v1400 = vmul.u32 %v1396, 52428
      %v1401 = vmul.u32 %v1397, 52429
      %v1402 = vmul.u32 %v1397, 52428
      %v1403 = vshll.u32 %v1400, 16
      %v1404 = vshrl.u32 %v1400, 16
      %v1405 = vshll.u32 %v1401, 16
      %v1406 = vshrl.u32 %v1401, 16
      %vm1407 = vc.u32 %v1399, %v1403
      %v1408 = vsel %vm1407, 1, 0
      %v1409 = vadd.s32 %v1399, %v1403
      %v1410 = vadd.s32 %v1402, %v1408
      %vm1411 = vc.u32 %v1409, %v1405
      %v1412 = vsel %vm1411, 1, 0
      %v1413 = vadd.s32 %v1409, %v1405
      %v1414 = vadd.s32 %v1410, %v1412
      %v1415 = vadd.s32 %v1414, %v1404
      %v1416 = vadd.s32 %v1415, %v1406
      %v1417 = vshrl.u32 %v1416, 3
      %v1418 = vmul.u32 %v1417, 10
      %v1419 = vsub.s32 %v1395, %v1418
      %v1420 = vsub.s32 0, %v1419
      %v1421 = vsel %vm1393, %v1420, %v1419
      %vm1422 = vcmp.lt.s32.totalorder %v1328, 0
      %v1423 = vsub.s32 0, %v1328
      %v1424 = vsel %vm1422, %v1423, %v1328
      %v1425 = vand.u32 %v1424, 65535
      %v1426 = vshrl.u32 %v1424, 16
      %v1428 = vmul.u32 %v1425, 52429
      %v1429 = vmul.u32 %v1425, 52428
      %v1430 = vmul.u32 %v1426, 52429
      %v1431 = vmul.u32 %v1426, 52428
      %v1432 = vshll.u32 %v1429, 16
      %v1433 = vshrl.u32 %v1429, 16
      %v1434 = vshll.u32 %v1430, 16
      %v1435 = vshrl.u32 %v1430, 16
      %vm1436 = vc.u32 %v1428, %v1432
      %v1437 = vsel %vm1436, 1, 0
      %v1438 = vadd.s32 %v1428, %v1432
      %v1439 = vadd.s32 %v1431, %v1437
      %vm1440 = vc.u32 %v1438, %v1434
      %v1441 = vsel %vm1440, 1, 0
      %v1442 = vadd.s32 %v1438, %v1434
      %v1443 = vadd.s32 %v1439, %v1441
      %v1444 = vadd.s32 %v1443, %v1433
      %v1445 = vadd.s32 %v1444, %v1435
      %v1446 = vshrl.u32 %v1445, 3
      %v1447 = vmul.u32 %v1446, 10
      %v1448 = vsub.s32 %v1424, %v1447
      %v1449 = vsub.s32 0, %v1448
      %v1450 = vsel %vm1422, %v1449, %v1448
      %vm1451 = vcmp.lt.s32.totalorder %v1329, 0
      %v1452 = vsub.s32 0, %v1329
      %v1453 = vsel %vm1451, %v1452, %v1329
      %v1454 = vand.u32 %v1453, 65535
      %v1455 = vshrl.u32 %v1453, 16
      %v1457 = vmul.u32 %v1454, 52429
      %v1458 = vmul.u32 %v1454, 52428
      %v1459 = vmul.u32 %v1455, 52429
      %v1460 = vmul.u32 %v1455, 52428
      %v1461 = vshll.u32 %v1458, 16
      %v1462 = vshrl.u32 %v1458, 16
      %v1463 = vshll.u32 %v1459, 16
      %v1464 = vshrl.u32 %v1459, 16
      %vm1465 = vc.u32 %v1457, %v1461
      %v1466 = vsel %vm1465, 1, 0
      %v1467 = vadd.s32 %v1457, %v1461
      %v1468 = vadd.s32 %v1460, %v1466
      %vm1469 = vc.u32 %v1467, %v1463
      %v1470 = vsel %vm1469, 1, 0
      %v1471 = vadd.s32 %v1467, %v1463
      %v1472 = vadd.s32 %v1468, %v1470
      %v1473 = vadd.s32 %v1472, %v1462
      %v1474 = vadd.s32 %v1473, %v1464
      %v1475 = vshrl.u32 %v1474, 3
      %v1476 = vmul.u32 %v1475, 10
      %v1477 = vsub.s32 %v1453, %v1476
      %v1478 = vsub.s32 0, %v1477
      %v1479 = vsel %vm1451, %v1478, %v1477
      %vm1480 = vcmp.lt.s32.totalorder %v1330, 0
      %v1481 = vsub.s32 0, %v1330
      %v1482 = vsel %vm1480, %v1481, %v1330
      %v1483 = vand.u32 %v1482, 65535
      %v1484 = vshrl.u32 %v1482, 16
      %v1486 = vmul.u32 %v1483, 52429
      %v1487 = vmul.u32 %v1483, 52428
      %v1488 = vmul.u32 %v1484, 52429
      %v1489 = vmul.u32 %v1484, 52428
      %v1490 = vshll.u32 %v1487, 16
      %v1491 = vshrl.u32 %v1487, 16
      %v1492 = vshll.u32 %v1488, 16
      %v1493 = vshrl.u32 %v1488, 16
      %vm1494 = vc.u32 %v1486, %v1490
      %v1495 = vsel %vm1494, 1, 0
      %v1496 = vadd.s32 %v1486, %v1490
      %v1497 = vadd.s32 %v1489, %v1495
      %vm1498 = vc.u32 %v1496, %v1492
      %v1499 = vsel %vm1498, 1, 0
      %v1500 = vadd.s32 %v1496, %v1492
      %v1501 = vadd.s32 %v1497, %v1499
      %v1502 = vadd.s32 %v1501, %v1491
      %v1503 = vadd.s32 %v1502, %v1493
      %v1504 = vshrl.u32 %v1503, 3
      %v1505 = vmul.u32 %v1504, 10
      %v1506 = vsub.s32 %v1482, %v1505
      %v1507 = vsub.s32 0, %v1506
      %v1508 = vsel %vm1480, %v1507, %v1506
      %vm1509 = vcmp.lt.s32.totalorder %v1331, 0
      %v1510 = vsub.s32 0, %v1331
      %v1511 = vsel %vm1509, %v1510, %v1331
      %v1512 = vand.u32 %v1511, 65535
      %v1513 = vshrl.u32 %v1511, 16
      %v1515 = vmul.u32 %v1512, 52429
      %v1516 = vmul.u32 %v1512, 52428
      %v1517 = vmul.u32 %v1513, 52429
      %v1518 = vmul.u32 %v1513, 52428
      %v1519 = vshll.u32 %v1516, 16
      %v1520 = vshrl.u32 %v1516, 16
      %v1521 = vshll.u32 %v1517, 16
      %v1522 = vshrl.u32 %v1517, 16
      %vm1523 = vc.u32 %v1515, %v1519
      %v1524 = vsel %vm1523, 1, 0
      %v1525 = vadd.s32 %v1515, %v1519
      %v1526 = vadd.s32 %v1518, %v1524
      %vm1527 = vc.u32 %v1525, %v1521
      %v1528 = vsel %vm1527, 1, 0
      %v1529 = vadd.s32 %v1525, %v1521
      %v1530 = vadd.s32 %v1526, %v1528
      %v1531 = vadd.s32 %v1530, %v1520
      %v1532 = vadd.s32 %v1531, %v1522
      %v1533 = vshrl.u32 %v1532, 3
      %v1534 = vmul.u32 %v1533, 10
      %v1535 = vsub.s32 %v1511, %v1534
      %v1536 = vsub.s32 0, %v1535
      %v1537 = vsel %vm1509, %v1536, %v1535
      %vm1538 = vcmp.lt.s32.totalorder %v1332, 0
      %v1539 = vsub.s32 0, %v1332
      %v1540 = vsel %vm1538, %v1539, %v1332
      %v1541 = vand.u32 %v1540, 65535
      %v1542 = vshrl.u32 %v1540, 16
      %v1544 = vmul.u32 %v1541, 52429
      %v1545 = vmul.u32 %v1541, 52428
      %v1546 = vmul.u32 %v1542, 52429
      %v1547 = vmul.u32 %v1542, 52428
      %v1548 = vshll.u32 %v1545, 16
      %v1549 = vshrl.u32 %v1545, 16
      %v1550 = vshll.u32 %v1546, 16
      %v1551 = vshrl.u32 %v1546, 16
      %vm1552 = vc.u32 %v1544, %v1548
      %v1553 = vsel %vm1552, 1, 0
      %v1554 = vadd.s32 %v1544, %v1548
      %v1555 = vadd.s32 %v1547, %v1553
      %vm1556 = vc.u32 %v1554, %v1550
      %v1557 = vsel %vm1556, 1, 0
      %v1558 = vadd.s32 %v1554, %v1550
      %v1559 = vadd.s32 %v1555, %v1557
      %v1560 = vadd.s32 %v1559, %v1549
      %v1561 = vadd.s32 %v1560, %v1551
      %v1562 = vshrl.u32 %v1561, 3
      %v1563 = vmul.u32 %v1562, 10
      %v1564 = vsub.s32 %v1540, %v1563
      %v1565 = vsub.s32 0, %v1564
      %v1566 = vsel %vm1538, %v1565, %v1564
      %vm1567 = vcmp.lt.s32.totalorder %v1333, 0
      %v1568 = vsub.s32 0, %v1333
      %v1569 = vsel %vm1567, %v1568, %v1333
      %v1570 = vand.u32 %v1569, 65535
      %v1571 = vshrl.u32 %v1569, 16
      %v1573 = vmul.u32 %v1570, 52429
      %v1574 = vmul.u32 %v1570, 52428
      %v1575 = vmul.u32 %v1571, 52429
      %v1576 = vmul.u32 %v1571, 52428
      %v1577 = vshll.u32 %v1574, 16
      %v1578 = vshrl.u32 %v1574, 16
      %v1579 = vshll.u32 %v1575, 16
      %v1580 = vshrl.u32 %v1575, 16
      %vm1581 = vc.u32 %v1573, %v1577
      %v1582 = vsel %vm1581, 1, 0
      %v1583 = vadd.s32 %v1573, %v1577
      %v1584 = vadd.s32 %v1576, %v1582
      %vm1585 = vc.u32 %v1583, %v1579
      %v1586 = vsel %vm1585, 1, 0
      %v1587 = vadd.s32 %v1583, %v1579
      %v1588 = vadd.s32 %v1584, %v1586
      %v1589 = vadd.s32 %v1588, %v1578
      %v1590 = vadd.s32 %v1589, %v1580
      %v1591 = vshrl.u32 %v1590, 3
      %v1592 = vmul.u32 %v1591, 10
      %v1593 = vsub.s32 %v1569, %v1592
      %v1594 = vsub.s32 0, %v1593
      %v1595 = vsel %vm1567, %v1594, %v1593
      %vm1596 = vcmp.lt.s32.totalorder %v1334, 0
      %v1597 = vsub.s32 0, %v1334
      %v1598 = vsel %vm1596, %v1597, %v1334
      %v1599 = vand.u32 %v1598, 65535
      %v1600 = vshrl.u32 %v1598, 16
      %v1602 = vmul.u32 %v1599, 52429
      %v1603 = vmul.u32 %v1599, 52428
      %v1604 = vmul.u32 %v1600, 52429
      %v1605 = vmul.u32 %v1600, 52428
      %v1606 = vshll.u32 %v1603, 16
      %v1607 = vshrl.u32 %v1603, 16
      %v1608 = vshll.u32 %v1604, 16
      %v1609 = vshrl.u32 %v1604, 16
      %vm1610 = vc.u32 %v1602, %v1606
      %v1611 = vsel %vm1610, 1, 0
      %v1612 = vadd.s32 %v1602, %v1606
      %v1613 = vadd.s32 %v1605, %v1611
      %vm1614 = vc.u32 %v1612, %v1608
      %v1615 = vsel %vm1614, 1, 0
      %v1616 = vadd.s32 %v1612, %v1608
      %v1617 = vadd.s32 %v1613, %v1615
      %v1618 = vadd.s32 %v1617, %v1607
      %v1619 = vadd.s32 %v1618, %v1609
      %v1620 = vshrl.u32 %v1619, 3
      %v1621 = vmul.u32 %v1620, 10
      %v1622 = vsub.s32 %v1598, %v1621
      %v1623 = vsub.s32 0, %v1622
      %v1624 = vsel %vm1596, %v1623, %v1622
      %vm1625 = vcmp.ne.s32.totalorder %v1363, 0
      %vm1626 = vcmp.ne.s32.totalorder %v1392, 0
      %vm1627 = vcmp.ne.s32.totalorder %v1421, 0
      %vm1628 = vcmp.ne.s32.totalorder %v1450, 0
      %vm1629 = vcmp.ne.s32.totalorder %v1479, 0
      %vm1630 = vcmp.ne.s32.totalorder %v1508, 0
      %vm1631 = vcmp.ne.s32.totalorder %v1537, 0
      %vm1632 = vcmp.ne.s32.totalorder %v1566, 0
      %vm1633 = vcmp.ne.s32.totalorder %v1595, 0
      %vm1634 = vcmp.ne.s32.totalorder %v1624, 0
      %vm1635 = vcmp.lt.s32.totalorder %v1363, 0
      %vm1636 = vcmp.lt.s32.totalorder %v1392, 0
      %vm1637 = vcmp.lt.s32.totalorder %v1421, 0
      %vm1638 = vcmp.lt.s32.totalorder %v1450, 0
      %vm1639 = vcmp.lt.s32.totalorder %v1479, 0
      %vm1640 = vcmp.lt.s32.totalorder %v1508, 0
      %vm1641 = vcmp.lt.s32.totalorder %v1537, 0
      %vm1642 = vcmp.lt.s32.totalorder %v1566, 0
      %vm1643 = vcmp.lt.s32.totalorder %v1595, 0
      %vm1644 = vcmp.lt.s32.totalorder %v1624, 0
      %vm1645 = vmand %vm1635, %vm1625
      %vm1646 = vmand %vm1636, %vm1626
      %vm1647 = vmand %vm1637, %vm1627
      %vm1648 = vmand %vm1638, %vm1628
      %vm1649 = vmand %vm1639, %vm1629
      %vm1650 = vmand %vm1640, %vm1630
      %vm1651 = vmand %vm1641, %vm1631
      %vm1652 = vmand %vm1642, %vm1632
      %vm1653 = vmand %vm1643, %vm1633
      %vm1654 = vmand %vm1644, %vm1634
      %v1655 = vadd.s32 %v1363, 10
      %v1656 = vadd.s32 %v1392, 10
      %v1657 = vadd.s32 %v1421, 10
      %v1658 = vadd.s32 %v1450, 10
      %v1659 = vadd.s32 %v1479, 10
      %v1660 = vadd.s32 %v1508, 10
      %v1661 = vadd.s32 %v1537, 10
      %v1662 = vadd.s32 %v1566, 10
      %v1663 = vadd.s32 %v1595, 10
      %v1664 = vadd.s32 %v1624, 10
      %v1665 = vsel %vm1645, %v1655, %v1363
      %v1666 = vsel %vm1646, %v1656, %v1392
      %v1667 = vsel %vm1647, %v1657, %v1421
      %v1668 = vsel %vm1648, %v1658, %v1450
      %v1669 = vsel %vm1649, %v1659, %v1479
      %v1670 = vsel %vm1650, %v1660, %v1508
      %v1671 = vsel %vm1651, %v1661, %v1537
      %v1672 = vsel %vm1652, %v1662, %v1566
      %v1673 = vsel %vm1653, %v1663, %v1595
      %v1674 = vsel %vm1654, %v1664, %v1624
      %vm1675 = vcmp.lt.s32.totalorder %v1665, 8
      %vm1676 = vcmp.lt.s32.totalorder %v1666, 8
      %vm1677 = vcmp.lt.s32.totalorder %v1667, 8
      %vm1678 = vcmp.lt.s32.totalorder %v1668, 8
      %vm1679 = vcmp.lt.s32.totalorder %v1669, 8
      %vm1680 = vcmp.lt.s32.totalorder %v1670, 8
      %vm1681 = vcmp.lt.s32.totalorder %v1671, 8
      %vm1682 = vcmp.lt.s32.totalorder %v1672, 8
      %vm1683 = vcmp.lt.s32.totalorder %v1673, 8
      %vm1684 = vcmp.lt.s32.totalorder %v1674, 8
      %v1685 = vsel %vm1675, %v1304, 0.0
      %v1686 = vsel %vm1676, %v1305, 0.0
      %v1687 = vsel %vm1677, %v1306, 0.0
      %v1688 = vsel %vm1678, %v1307, 0.0
      %v1689 = vsel %vm1679, %v1308, 0.0
      %v1690 = vsel %vm1680, %v1309, 0.0
      %v1691 = vsel %vm1681, %v1310, 0.0
      %v1692 = vsel %vm1682, %v1311, 0.0
      %v1693 = vsel %vm1683, %v1312, 0.0
      %v1694 = vsel %vm1684, %v1313, 0.0
      %v1695 = vld [vmem:[%s3] sm:$0x1]
      %v1696 = vadd.f32 %v1685, %v1686
      %v1697 = vadd.f32 %v1696, %v1687
      %v1698 = vadd.f32 %v1697, %v1688
      %v1699 = vadd.f32 %v1698, %v1689
      %v1700 = vadd.f32 %v1699, %v1690
      %v1701 = vadd.f32 %v1700, %v1691
      %v1702 = vadd.f32 %v1701, %v1692
      %v1703 = vadd.f32 %v1702, %v1693
      %v1704 = vadd.f32 %v1703, %v1694
      %v1705 = vrot.slane %v1704, 4
      %v1706 = vadd.f32 %v1704, %v1705
      %v1707 = vrot.slane %v1706, 2
      %v1708 = vadd.f32 %v1706, %v1707
      %v1709 = vrot.slane %v1708, 1
      %v1710 = vadd.f32 %v1708, %v1709
      %v1711 = vadd.f32 %v1695, %v1710
      %1712 = vst [vmem:[%s3] sm:$0x1] %v1711
      %v1713 = vld [vmem:[%s4] sm:$0x1]
      %v1714 = vmul.f32 %v1685, %v1685
      %v1715 = vmul.f32 %v1686, %v1686
      %v1716 = vmul.f32 %v1687, %v1687
      %v1717 = vmul.f32 %v1688, %v1688
      %v1718 = vmul.f32 %v1689, %v1689
      %v1719 = vmul.f32 %v1690, %v1690
      %v1720 = vmul.f32 %v1691, %v1691
      %v1721 = vmul.f32 %v1692, %v1692
      %v1722 = vmul.f32 %v1693, %v1693
      %v1723 = vmul.f32 %v1694, %v1694
      %v1724 = vadd.f32 %v1714, %v1715
      %v1725 = vadd.f32 %v1724, %v1716
      %v1726 = vadd.f32 %v1725, %v1717
      %v1727 = vadd.f32 %v1726, %v1718
      %v1728 = vadd.f32 %v1727, %v1719
      %v1729 = vadd.f32 %v1728, %v1720
      %v1730 = vadd.f32 %v1729, %v1721
      %v1731 = vadd.f32 %v1730, %v1722
      %v1732 = vadd.f32 %v1731, %v1723
      %v1733 = vrot.slane %v1732, 4
      %v1734 = vadd.f32 %v1732, %v1733
      %v1735 = vrot.slane %v1734, 2
      %v1736 = vadd.f32 %v1734, %v1735
      %v1737 = vrot.slane %v1736, 1
      %v1738 = vadd.f32 %v1736, %v1737
      %v1739 = vadd.f32 %v1713, %v1738
      %1740 = vst [vmem:[%s4] sm:$0x1] %v1739
      %s1741 = sadd.s32 %s20, %s21
      %s1742 = smul.u32 10, %s1741
      %p1743 = scmp.lt.s32.totalorder %s1742, 19
      %s1744 = scalar_select %p1743, %s1742, 19
      %s1745 = smul.addr %s1744, 8
      %s1746 = scalar_lea.vmem %s2, %s1745
      // Predicated region
      $region33: #{basic_block_forward.6} parent=27 // pred_check
        %p1747 = pneg %p95
      $region34: #{basic_block_forward.6} parent=27 // pred_check_branch
        %1749 = sbr.rel (%p1747) target = $region36
      $region35: #{basic_block_forward.6} parent=27 // pred_region
        %s1750 = sadd.s32 %s20, %s21
        %s1751 = smul.u32 10, %s1750
      $region36: #{basic_block_forward.6} parent=27 // pred_fallthru
        _
      // Predicated region
      $region37: #{basic_block_forward.6} parent=27 // pred_check
        %p1752 = pneg %p116
      $region38: #{basic_block_forward.6} parent=27 // pred_check_branch
        %1754 = sbr.rel (%p1752) target = $region40
      $region39: #{basic_block_forward.6} parent=27 // pred_region
        _
      $region40: #{basic_block_forward.6} parent=27 // pred_fallthru
        _
      // Predicated region
      $region41: #{basic_block_forward.6} parent=27 // pred_check
        %p1755 = pneg %p137
      $region42: #{basic_block_forward.6} parent=27 // pred_check_branch
        %1757 = sbr.rel (%p1755) target = $region44
      $region43: #{basic_block_forward.6} parent=27 // pred_region
        _
      $region44: #{basic_block_forward.6} parent=27 // pred_fallthru
        _
      // Predicated region
      $region45: #{basic_block_forward.6} parent=27 // pred_check
        %p1758 = pneg %p116
      $region46: #{basic_block_forward.6} parent=27 // pred_check_branch
        %1760 = sbr.rel (%p1758) target = $region48
      $region47: #{basic_block_forward.6} parent=27 // pred_region
        _
      $region48: #{basic_block_forward.6} parent=27 // pred_fallthru
        _
      // Predicated region
      $region49: #{basic_block_forward.6} parent=27 // pred_check
        %p1761 = pneg %p137
      $region50: #{basic_block_forward.6} parent=27 // pred_check_branch
        %1763 = sbr.rel (%p1761) target = $region52
      $region51: #{basic_block_forward.6} parent=27 // pred_region
        _
      $region52: #{basic_block_forward.6} parent=27 // pred_fallthru
        _
    $region28: #{basic_block_forward.6} parent=5 // pred_fallthru
      _
    %p1764 = scmp.le.s32.totalorder 2, %s11
    // Predicated region
    $region53: #{basic_block_forward.6} parent=5 // pred_check
      %p1765 = pneg %p1764
    $region54: #{basic_block_forward.6} parent=5 // pred_check_branch
      %1767 = sbr.rel (%p1765) target = $region56
    $region55: #{basic_block_forward.6} parent=5 // pred_region
      %s1768 = ssub.s32 %s11, 2
      // Predicated region
      $region57: #{basic_block_forward.6} parent=55 // pred_check
        %p1769 = pneg %p101
      $region58: #{basic_block_forward.6} parent=55 // pred_check_branch
        %1771 = sbr.rel (%p1769) target = $region60
      $region59: #{basic_block_forward.6} parent=55 // pred_region
        %s1772 = sadd.s32 %s22, %s23
        %s1773 = smul.u32 10, %s1772
        %p1774 = scmp.lt.s32.totalorder %s1773, 19
        %s1775 = scalar_select %p1774, %s1773, 19
        %s1776 = smul.addr %s1775, 8
        %s1777 = scalar_lea.vmem %s2, %s1776
      $region60: #{basic_block_forward.6} parent=55 // pred_fallthru
        _
    $region56: #{basic_block_forward.6} parent=5 // pred_fallthru
      _
  $region6: #{basic_block_forward.6} parent=0 // loop_footer
    %s15 = sadd.s32 1, %s11
  $region7: #{basic_block_forward.6} parent=0 // loop_footer_branch
    %10 = sbr.rel target = $region3
  $region8: #{basic_block_forward.6} parent=0 // loop_exit
    _

</llo_original>
